<compile_context>
chip_gen: v7x
topology: tpu7x:2x2x1
jax: 0.10.0
libtpu: 0.0.40
codegen_flags: <defaults>
</compile_context>

<pallas_src>
import functools

import jax
import jax.numpy as jnp
from jax.experimental import pallas as pl
from jax.experimental.pallas import tpu as pltpu

# Small BERT-ish config
HIDDEN = 32
NUM_HEADS = 4
HEAD_DIM = HIDDEN // NUM_HEADS
INTERMEDIATE = 64
NUM_LAYERS = 2
LN_EPS = 1e-12

assert NUM_HEADS * HEAD_DIM == HIDDEN

# Row indices of the per-layer [NUM_VECS, HIDDEN] vector bundle.
VEC_BO, VEC_LN1_G, VEC_LN1_B, VEC_BO2, VEC_LN2_G, VEC_LN2_B = range(6)
NUM_VECS = 6


def _layer_norm(x, gamma, beta):
    mu = jnp.mean(x, axis=-1, keepdims=True)
    var = jnp.mean((x - mu) ** 2, axis=-1, keepdims=True)
    return (x - mu) * jax.lax.rsqrt(var + LN_EPS) * gamma + beta


def _gelu(x):
    # exact (erf) GELU, matching HF BERT default
    return 0.5 * x * (1.0 + jax.lax.erf(x * (1.0 / jnp.sqrt(2.0).astype(x.dtype))))


def fused_bert_kernel(mask_ref, x_ref, wqkv_ref, bqkv_ref, wo_ref,
                      wi_ref, bi_ref, wo2_ref, vecs_ref, wp_ref, bp_ref,
                      out_ref):
    """Full transformer_block forward for ONE example (grid axis = batch).

    mask_ref: [1, 1, S]     raw attention_mask row (1 = keep, 0 = pad)
    x_ref:    [1, S, H]     activations of this example
    wqkv_ref: [L, H, 3H]    fused Q|K|V weights, [in, out]; 1/sqrt(D) folded into Q
    bqkv_ref: [L, 1, 3H]
    wo_ref:   [L, H, H]     attention output projection, [in(=N*D), out]
    wi_ref:   [L, H, I]     bi_ref: [L, 1, I]
    wo2_ref:  [L, I, H]
    vecs_ref: [L, NUM_VECS, H]  rows: bo, ln1_g, ln1_b, bo2, ln2_g, ln2_b
    wp_ref:   [H, H]        bp_ref: [1, H]   (pooler)
    out_ref:  [1, 1, H]     pooled output for this example
    """
    x = x_ref[0]                                       # [S, H]
    S, H = x.shape

    # Additive padding mask, built in-kernel (BERT semantics: (1-m) * -10000).
    add_row = (1.0 - mask_ref[0]) * jnp.float32(-10000.0)   # [1, S]

    for l in range(NUM_LAYERS):                        # static unroll (2 layers)
        vecs = vecs_ref[l]                             # [NUM_VECS, H]

        # --- fused QKV projection: one lane-dense 2-D MXU matmul ---
        qkv = jnp.dot(x, wqkv_ref[l],
                      preferred_element_type=jnp.float32) + bqkv_ref[l]   # [S, 3H]

        # head-major [N, S, D] views (scale already folded into the Q weights)
        def head_major(off):
            return jnp.stack(
                [qkv[:, off + n * HEAD_DIM: off + (n + 1) * HEAD_DIM]
                 for n in range(NUM_HEADS)], axis=0)
        q = head_major(0)                              # [N, S, D]
        k = head_major(HIDDEN)                         # [N, S, D]
        v = head_major(2 * HIDDEN)                     # [N, S, D]

        # --- scaled dot-product attention, all heads batched ---
        s = jnp.einsum('nqd,nkd->nqk', q, k,
                       preferred_element_type=jnp.float32)                # [N, S, S]
        s = s + add_row[None, :, :]                    # padded keys -> -10000
        s = s - jnp.max(s, axis=-1, keepdims=True)
        p = jnp.exp(s)
        # exact reciprocal (approx=True would break tight parity checks)
        p = p * pl.reciprocal(jnp.sum(p, axis=-1, keepdims=True), approx=False)
        ctx = jnp.einsum('nqk,nkd->nqd', p, v,
                         preferred_element_type=jnp.float32)              # [N, S, D]

        # --- attention output projection: single matmul over 32 lanes ---
        ctx2d = jnp.concatenate([ctx[n] for n in range(NUM_HEADS)], axis=-1)  # [S, H]
        attn = jnp.dot(ctx2d, wo_ref[l],
                       preferred_element_type=jnp.float32) + vecs[VEC_BO:VEC_BO + 1, :]
        h1 = _layer_norm(attn + x,
                         vecs[VEC_LN1_G:VEC_LN1_G + 1, :],
                         vecs[VEC_LN1_B:VEC_LN1_B + 1, :])

        # --- feed-forward: intermediate (GELU) + output dense + add&norm ---
        inter = jnp.dot(h1, wi_ref[l],
                        preferred_element_type=jnp.float32) + bi_ref[l]
        inter = _gelu(inter)
        ffn = jnp.dot(inter, wo2_ref[l],
                      preferred_element_type=jnp.float32) + vecs[VEC_BO2:VEC_BO2 + 1, :]
        x = _layer_norm(ffn + h1,
                        vecs[VEC_LN2_G:VEC_LN2_G + 1, :],
                        vecs[VEC_LN2_B:VEC_LN2_B + 1, :])

    # --- pooler: first token (row 0), dense + tanh.  No reshape needed. ---
    first = x[0:1, :]                                                      # [1, H]
    pooled = jnp.dot(first, wp_ref[...],
                     preferred_element_type=jnp.float32) + bp_ref[...]
    out_ref[0] = jnp.tanh(pooled)


def make_params(key):
    """Deterministic synthetic parameters (BERT-style normal(0, 0.02) init)."""
    std = 0.02
    layers = []
    for _ in range(NUM_LAYERS):
        keys = jax.random.split(key, 8)
        key = keys[-1]
        wq = jax.random.normal(keys[0], (HIDDEN, HIDDEN), jnp.float32) * std
        wk = jax.random.normal(keys[1], (HIDDEN, HIDDEN), jnp.float32) * std
        wv = jax.random.normal(keys[2], (HIDDEN, HIDDEN), jnp.float32) * std
        wo = jax.random.normal(keys[3], (HIDDEN, HIDDEN), jnp.float32) * std
        wi = jax.random.normal(keys[4], (HIDDEN, INTERMEDIATE), jnp.float32) * std
        wo2 = jax.random.normal(keys[5], (INTERMEDIATE, HIDDEN), jnp.float32) * std
        bq = jnp.zeros((HIDDEN,), jnp.float32)
        bk = jnp.zeros((HIDDEN,), jnp.float32)
        bv = jnp.zeros((HIDDEN,), jnp.float32)
        bo = jnp.zeros((HIDDEN,), jnp.float32)
        bi = jnp.zeros((INTERMEDIATE,), jnp.float32)
        bo2 = jnp.zeros((HIDDEN,), jnp.float32)
        ln1_g = jnp.ones((HIDDEN,), jnp.float32)
        ln1_b = jnp.zeros((HIDDEN,), jnp.float32)
        ln2_g = jnp.ones((HIDDEN,), jnp.float32)
        ln2_b = jnp.zeros((HIDDEN,), jnp.float32)
        layers.append((wq, bq, wk, bk, wv, bv, wo, bo, ln1_g, ln1_b,
                       wi, bi, wo2, bo2, ln2_g, ln2_b))
    kp, _ = jax.random.split(key)
    pooler_w = jax.random.normal(kp, (HIDDEN, HIDDEN), jnp.float32) * std
    pooler_b = jnp.zeros((HIDDEN,), jnp.float32)
    return {'layers': layers, 'pooler_w': pooler_w, 'pooler_b': pooler_b}


def pack_params(params):
    """Stack per-layer weights on a leading layer axis.

    Q|K|V weights are fused into one [H, 3H] matrix (lane-dense matmul in-kernel)
    and the attention softmax scale 1/sqrt(HEAD_DIM) is folded into the Q weights
    and bias here (free at pack time, numerically equivalent).
    Weights are [in, out] so the kernel computes y = x @ W + b.
    """
    scale = 1.0 / (HEAD_DIM ** 0.5)
    wqkv, bqkv, wo_s, wi_s, bi_s, wo2_s, vecs = [], [], [], [], [], [], []
    for (wq, bq, wk, bk, wv, bv, wo, bo, ln1_g, ln1_b,
         wi, bi, wo2, bo2, ln2_g, ln2_b) in params['layers']:
        wqkv.append(jnp.concatenate([wq * scale, wk, wv], axis=1))          # [H, 3H]
        bqkv.append(jnp.concatenate([bq * scale, bk, bv],
                                    axis=0).reshape(1, 3 * HIDDEN))         # [1, 3H]
        wo_s.append(wo)                                                     # [H, H]
        wi_s.append(wi)
        bi_s.append(bi.reshape(1, INTERMEDIATE))
        wo2_s.append(wo2)
        vecs.append(jnp.stack([bo, ln1_g, ln1_b, bo2, ln2_g, ln2_b], axis=0))  # [6, H]
    # TODO(synk): for real BERT sizes store these in bf16 and stream per layer
    # (Buffered(2)) instead of keeping all layers resident in VMEM.
    return {
        'wqkv': jnp.stack(wqkv), 'bqkv': jnp.stack(bqkv), 'wo': jnp.stack(wo_s),
        'wi': jnp.stack(wi_s), 'bi': jnp.stack(bi_s), 'wo2': jnp.stack(wo2_s),
        'vecs': jnp.stack(vecs),
        'wp': params['pooler_w'], 'bp': params['pooler_b'].reshape(1, HIDDEN),
    }


def transformer_block_forward(x, attention_mask, packed):
    """x: [B, S, H] float32, attention_mask: [B, S] float -> pooled [B, H]."""
    B, S, H = x.shape
    mask3 = attention_mask.astype(jnp.float32).reshape(B, 1, S)

    def full_spec(arr):
        nd = arr.ndim
        return pl.BlockSpec(arr.shape, lambda b, _nd=nd: (0,) * _nd)

    operands = (mask3, x, packed['wqkv'], packed['bqkv'], packed['wo'],
                packed['wi'], packed['bi'], packed['wo2'], packed['vecs'],
                packed['wp'], packed['bp'])

    in_specs = [
        pl.BlockSpec((1, 1, S), lambda b: (b, 0, 0)),        # attention_mask row
        pl.BlockSpec((1, S, H), lambda b: (b, 0, 0)),        # activations
        full_spec(packed['wqkv']),
        full_spec(packed['bqkv']),
        full_spec(packed['wo']),
        full_spec(packed['wi']),
        full_spec(packed['bi']),
        full_spec(packed['wo2']),
        full_spec(packed['vecs']),
        full_spec(packed['wp']),
        full_spec(packed['bp']),
    ]
    out_specs = pl.BlockSpec((1, 1, H), lambda b: (b, 0, 0))

    pooled = pl.pallas_call(
        fused_bert_kernel,
        grid=(B,),                                            # parallel over examples
        out_shape=jax.ShapeDtypeStruct((B, 1, H), jnp.float32),
        in_specs=in_specs,
        out_specs=out_specs,
        compiler_params=pltpu.CompilerParams(
            dimension_semantics=("parallel",),                # v7x: shard over 2 TCs
            vmem_limit_bytes=16 * 1024 * 1024,                # ample for these buffers
        ),
    )(*operands)
    return pooled.reshape(B, H)


if __name__ == "__main__":
    key = jax.random.PRNGKey(0)
    k_x, k_p = jax.random.split(key)

    B, S = 2, 8
    x = jax.random.normal(k_x, (B, S, HIDDEN), jnp.float32)
    # mask out the last two positions of the second example
    attention_mask = jnp.ones((B, S), jnp.float32)
    attention_mask = attention_mask.at[1, -2:].set(0.0)

    params = make_params(k_p)
    packed = pack_params(params)

    fwd = jax.jit(lambda x, m: transformer_block_forward(x, m, packed))
    out = fwd(x, attention_mask)
    jax.block_until_ready(out)

    assert out.shape == (B, HIDDEN)
    assert bool(jnp.all(jnp.isfinite(out)))
    print("KERNEL_OK")
</pallas_src>

<mosaic_0001>
module attributes {stable_mosaic.version = 11 : i64} {
  func.func @fused_bert_kernel(%arg0: i32, %arg1: memref<1x1x8xf32, #tpu.memory_space<vmem>>, %arg2: memref<1x8x32xf32, #tpu.memory_space<vmem>>, %arg3: memref<2x32x96xf32, #tpu.memory_space<vmem>>, %arg4: memref<2x1x96xf32, #tpu.memory_space<vmem>>, %arg5: memref<2x32x32xf32, #tpu.memory_space<vmem>>, %arg6: memref<2x32x64xf32, #tpu.memory_space<vmem>>, %arg7: memref<2x1x64xf32, #tpu.memory_space<vmem>>, %arg8: memref<2x64x32xf32, #tpu.memory_space<vmem>>, %arg9: memref<2x6x32xf32, #tpu.memory_space<vmem>>, %arg10: memref<32x32xf32, #tpu.memory_space<vmem>>, %arg11: memref<1x32xf32, #tpu.memory_space<vmem>>, %arg12: memref<1x1x32xf32, #tpu.memory_space<vmem>>) attributes {dimension_semantics = [#tpu.dimension_semantics<parallel>], iteration_bounds = array<i64: 2>, scalar_prefetch = 0 : i64, scratch_operands = 0 : i64, tpu.core_type = #tpu.core_type<tc>, window_params = [{transform_indices = @transform_0, window_bounds = array<i64: 1, 1, 8>}, {transform_indices = @transform_1, window_bounds = array<i64: 1, 8, 32>}, {pipeline_mode = #tpu.pipeline_mode<synchronous>, transform_indices = @transform_2, window_bounds = array<i64: 2, 32, 96>}, {pipeline_mode = #tpu.pipeline_mode<synchronous>, transform_indices = @transform_3, window_bounds = array<i64: 2, 1, 96>}, {pipeline_mode = #tpu.pipeline_mode<synchronous>, transform_indices = @transform_4, window_bounds = array<i64: 2, 32, 32>}, {pipeline_mode = #tpu.pipeline_mode<synchronous>, transform_indices = @transform_5, window_bounds = array<i64: 2, 32, 64>}, {pipeline_mode = #tpu.pipeline_mode<synchronous>, transform_indices = @transform_6, window_bounds = array<i64: 2, 1, 64>}, {pipeline_mode = #tpu.pipeline_mode<synchronous>, transform_indices = @transform_7, window_bounds = array<i64: 2, 64, 32>}, {pipeline_mode = #tpu.pipeline_mode<synchronous>, transform_indices = @transform_8, window_bounds = array<i64: 2, 6, 32>}, {pipeline_mode = #tpu.pipeline_mode<synchronous>, transform_indices = @transform_9, window_bounds = array<i64: 32, 32>}, {pipeline_mode = #tpu.pipeline_mode<synchronous>, transform_indices = @transform_10, window_bounds = array<i64: 1, 32>}, {transform_indices = @transform_11, window_bounds = array<i64: 1, 1, 32>}]} {
    %c0 = arith.constant 0 : index
    %c0_0 = arith.constant 0 : index
    %c0_1 = arith.constant 0 : index
    %0 = vector.load %arg2[%c0, %c0_0, %c0_1] : memref<1x8x32xf32, #tpu.memory_space<vmem>>, vector<1x8x32xf32>
    %1 = vector.shape_cast %0 : vector<1x8x32xf32> to vector<8x32xf32>
    %c0_2 = arith.constant 0 : index
    %c0_3 = arith.constant 0 : index
    %c0_4 = arith.constant 0 : index
    %2 = vector.load %arg1[%c0_2, %c0_3, %c0_4] : memref<1x1x8xf32, #tpu.memory_space<vmem>>, vector<1x1x8xf32>
    %3 = vector.shape_cast %2 : vector<1x1x8xf32> to vector<1x8xf32>
    %cst = arith.constant 1.000000e+00 : f32
    %4 = vector.broadcast %cst : f32 to vector<1x8xf32>
    %5 = arith.subf %4, %3 : vector<1x8xf32>
    %cst_5 = arith.constant -1.000000e+04 : f32
    %6 = vector.broadcast %cst_5 : f32 to vector<1x8xf32>
    %7 = arith.mulf %5, %6 : vector<1x8xf32>
    %c0_6 = arith.constant 0 : index
    %c0_7 = arith.constant 0 : index
    %c0_8 = arith.constant 0 : index
    %8 = vector.load %arg9[%c0_6, %c0_7, %c0_8] : memref<2x6x32xf32, #tpu.memory_space<vmem>>, vector<1x6x32xf32>
    %9 = vector.shape_cast %8 : vector<1x6x32xf32> to vector<6x32xf32>
    %c0_9 = arith.constant 0 : index
    %c0_10 = arith.constant 0 : index
    %c0_11 = arith.constant 0 : index
    %10 = vector.load %arg3[%c0_9, %c0_10, %c0_11] : memref<2x32x96xf32, #tpu.memory_space<vmem>>, vector<1x32x96xf32>
    %11 = vector.shape_cast %10 : vector<1x32x96xf32> to vector<32x96xf32>
    %cst_12 = arith.constant dense<0.000000e+00> : vector<8x96xf32>
    %12 = tpu.matmul %1, %11, %cst_12 {dimension_numbers = #tpu.dot_dimension_numbers<[1], [0], [0], [1], [0, 0, 1, 1], [], []>} : vector<8x32xf32>, vector<32x96xf32>, vector<8x96xf32> -> vector<8x96xf32>
    %c0_13 = arith.constant 0 : index
    %c0_14 = arith.constant 0 : index
    %c0_15 = arith.constant 0 : index
    %13 = vector.load %arg4[%c0_13, %c0_14, %c0_15] : memref<2x1x96xf32, #tpu.memory_space<vmem>>, vector<1x1x96xf32>
    %14 = vector.shape_cast %13 : vector<1x1x96xf32> to vector<1x96xf32>
    %15 = vector.broadcast %14 : vector<1x96xf32> to vector<8x96xf32>
    %16 = arith.addf %12, %15 : vector<8x96xf32>
    %17 = vector.extract_strided_slice %16 {offsets = [0, 0], sizes = [8, 8], strides = [1, 1]} : vector<8x96xf32> to vector<8x8xf32>
    %18 = vector.extract_strided_slice %16 {offsets = [0, 8], sizes = [8, 8], strides = [1, 1]} : vector<8x96xf32> to vector<8x8xf32>
    %19 = vector.extract_strided_slice %16 {offsets = [0, 16], sizes = [8, 8], strides = [1, 1]} : vector<8x96xf32> to vector<8x8xf32>
    %20 = vector.extract_strided_slice %16 {offsets = [0, 24], sizes = [8, 8], strides = [1, 1]} : vector<8x96xf32> to vector<8x8xf32>
    %21 = vector.shape_cast %17 : vector<8x8xf32> to vector<1x8x8xf32>
    %22 = vector.shape_cast %18 : vector<8x8xf32> to vector<1x8x8xf32>
    %23 = vector.shape_cast %19 : vector<8x8xf32> to vector<1x8x8xf32>
    %24 = vector.shape_cast %20 : vector<8x8xf32> to vector<1x8x8xf32>
    %25 = tpu.concatenate %21, %22, %23, %24 in 0 : vector<1x8x8xf32>, vector<1x8x8xf32>, vector<1x8x8xf32>, vector<1x8x8xf32> -> vector<4x8x8xf32>
    %26 = vector.extract_strided_slice %16 {offsets = [0, 32], sizes = [8, 8], strides = [1, 1]} : vector<8x96xf32> to vector<8x8xf32>
    %27 = vector.extract_strided_slice %16 {offsets = [0, 40], sizes = [8, 8], strides = [1, 1]} : vector<8x96xf32> to vector<8x8xf32>
    %28 = vector.extract_strided_slice %16 {offsets = [0, 48], sizes = [8, 8], strides = [1, 1]} : vector<8x96xf32> to vector<8x8xf32>
    %29 = vector.extract_strided_slice %16 {offsets = [0, 56], sizes = [8, 8], strides = [1, 1]} : vector<8x96xf32> to vector<8x8xf32>
    %30 = vector.shape_cast %26 : vector<8x8xf32> to vector<1x8x8xf32>
    %31 = vector.shape_cast %27 : vector<8x8xf32> to vector<1x8x8xf32>
    %32 = vector.shape_cast %28 : vector<8x8xf32> to vector<1x8x8xf32>
    %33 = vector.shape_cast %29 : vector<8x8xf32> to vector<1x8x8xf32>
    %34 = tpu.concatenate %30, %31, %32, %33 in 0 : vector<1x8x8xf32>, vector<1x8x8xf32>, vector<1x8x8xf32>, vector<1x8x8xf32> -> vector<4x8x8xf32>
    %35 = vector.extract_strided_slice %16 {offsets = [0, 64], sizes = [8, 8], strides = [1, 1]} : vector<8x96xf32> to vector<8x8xf32>
    %36 = vector.extract_strided_slice %16 {offsets = [0, 72], sizes = [8, 8], strides = [1, 1]} : vector<8x96xf32> to vector<8x8xf32>
    %37 = vector.extract_strided_slice %16 {offsets = [0, 80], sizes = [8, 8], strides = [1, 1]} : vector<8x96xf32> to vector<8x8xf32>
    %38 = vector.extract_strided_slice %16 {offsets = [0, 88], sizes = [8, 8], strides = [1, 1]} : vector<8x96xf32> to vector<8x8xf32>
    %39 = vector.shape_cast %35 : vector<8x8xf32> to vector<1x8x8xf32>
    %40 = vector.shape_cast %36 : vector<8x8xf32> to vector<1x8x8xf32>
    %41 = vector.shape_cast %37 : vector<8x8xf32> to vector<1x8x8xf32>
    %42 = vector.shape_cast %38 : vector<8x8xf32> to vector<1x8x8xf32>
    %43 = tpu.concatenate %39, %40, %41, %42 in 0 : vector<1x8x8xf32>, vector<1x8x8xf32>, vector<1x8x8xf32>, vector<1x8x8xf32> -> vector<4x8x8xf32>
    "tpu.trace_start"() <{level = 10 : i32, message = "nqd,nkd->nqk"}> : () -> ()
    %cst_16 = arith.constant dense<0.000000e+00> : vector<4x8x8xf32>
    %44 = tpu.matmul %25, %34, %cst_16 {dimension_numbers = #tpu.dot_dimension_numbers<[2], [2], [1], [1], [0, 0, 0, 1, 1, 1], [0], [0]>} : vector<4x8x8xf32>, vector<4x8x8xf32>, vector<4x8x8xf32> -> vector<4x8x8xf32>
    "tpu.trace_stop"() : () -> ()
    %45 = vector.shape_cast %7 : vector<1x8xf32> to vector<1x1x8xf32>
    %46 = vector.broadcast %45 : vector<1x1x8xf32> to vector<4x8x8xf32>
    %47 = arith.addf %44, %46 : vector<4x8x8xf32>
    %cst_17 = arith.constant dense<0xFF800000> : vector<4x8xf32>
    %48 = vector.multi_reduction <maximumf>, %47, %cst_17 [2] : vector<4x8x8xf32> to vector<4x8xf32>
    %49 = vector.shape_cast %48 : vector<4x8xf32> to vector<4x8x1xf32>
    %50 = vector.broadcast %49 : vector<4x8x1xf32> to vector<4x8x8xf32>
    %51 = arith.subf %47, %50 : vector<4x8x8xf32>
    %52 = math.exp %51 : vector<4x8x8xf32>
    %cst_18 = arith.constant dense<0.000000e+00> : vector<4x8xf32>
    %53 = vector.multi_reduction <add>, %52, %cst_18 [2] : vector<4x8x8xf32> to vector<4x8xf32>
    %54 = vector.shape_cast %53 : vector<4x8xf32> to vector<4x8x1xf32>
    %55 = tpu.reciprocal %54 : vector<4x8x1xf32> -> vector<4x8x1xf32>
    %56 = vector.broadcast %55 : vector<4x8x1xf32> to vector<4x8x8xf32>
    %57 = arith.mulf %52, %56 : vector<4x8x8xf32>
    "tpu.trace_start"() <{level = 10 : i32, message = "nqk,nkd->nqd"}> : () -> ()
    %cst_19 = arith.constant dense<0.000000e+00> : vector<4x8x8xf32>
    %58 = tpu.matmul %57, %43, %cst_19 {dimension_numbers = #tpu.dot_dimension_numbers<[2], [1], [1], [2], [0, 0, 0, 1, 1, 2], [0], [0]>} : vector<4x8x8xf32>, vector<4x8x8xf32>, vector<4x8x8xf32> -> vector<4x8x8xf32>
    "tpu.trace_stop"() : () -> ()
    %59 = vector.extract_strided_slice %58 {offsets = [0, 0, 0], sizes = [1, 8, 8], strides = [1, 1, 1]} : vector<4x8x8xf32> to vector<1x8x8xf32>
    %60 = vector.shape_cast %59 : vector<1x8x8xf32> to vector<8x8xf32>
    %61 = vector.extract_strided_slice %58 {offsets = [1, 0, 0], sizes = [1, 8, 8], strides = [1, 1, 1]} : vector<4x8x8xf32> to vector<1x8x8xf32>
    %62 = vector.shape_cast %61 : vector<1x8x8xf32> to vector<8x8xf32>
    %63 = vector.extract_strided_slice %58 {offsets = [2, 0, 0], sizes = [1, 8, 8], strides = [1, 1, 1]} : vector<4x8x8xf32> to vector<1x8x8xf32>
    %64 = vector.shape_cast %63 : vector<1x8x8xf32> to vector<8x8xf32>
    %65 = vector.extract_strided_slice %58 {offsets = [3, 0, 0], sizes = [1, 8, 8], strides = [1, 1, 1]} : vector<4x8x8xf32> to vector<1x8x8xf32>
    %66 = vector.shape_cast %65 : vector<1x8x8xf32> to vector<8x8xf32>
    %67 = tpu.concatenate %60, %62, %64, %66 in 1 : vector<8x8xf32>, vector<8x8xf32>, vector<8x8xf32>, vector<8x8xf32> -> vector<8x32xf32>
    %c0_20 = arith.constant 0 : index
    %c0_21 = arith.constant 0 : index
    %c0_22 = arith.constant 0 : index
    %68 = vector.load %arg5[%c0_20, %c0_21, %c0_22] : memref<2x32x32xf32, #tpu.memory_space<vmem>>, vector<1x32x32xf32>
    %69 = vector.shape_cast %68 : vector<1x32x32xf32> to vector<32x32xf32>
    %cst_23 = arith.constant dense<0.000000e+00> : vector<8x32xf32>
    %70 = tpu.matmul %67, %69, %cst_23 {dimension_numbers = #tpu.dot_dimension_numbers<[1], [0], [0], [1], [0, 0, 1, 1], [], []>} : vector<8x32xf32>, vector<32x32xf32>, vector<8x32xf32> -> vector<8x32xf32>
    %71 = vector.extract_strided_slice %9 {offsets = [0, 0], sizes = [1, 32], strides = [1, 1]} : vector<6x32xf32> to vector<1x32xf32>
    %72 = vector.broadcast %71 : vector<1x32xf32> to vector<8x32xf32>
    %73 = arith.addf %70, %72 : vector<8x32xf32>
    %74 = arith.addf %73, %1 : vector<8x32xf32>
    %75 = vector.extract_strided_slice %9 {offsets = [1, 0], sizes = [1, 32], strides = [1, 1]} : vector<6x32xf32> to vector<1x32xf32>
    %76 = vector.extract_strided_slice %9 {offsets = [2, 0], sizes = [1, 32], strides = [1, 1]} : vector<6x32xf32> to vector<1x32xf32>
    %cst_24 = arith.constant dense<0.000000e+00> : vector<8xf32>
    %77 = vector.multi_reduction <add>, %74, %cst_24 [1] : vector<8x32xf32> to vector<8xf32>
    %78 = vector.shape_cast %77 : vector<8xf32> to vector<8x1xf32>
    %cst_25 = arith.constant 3.200000e+01 : f32
    %79 = vector.broadcast %cst_25 : f32 to vector<8x1xf32>
    %80 = arith.divf %78, %79 : vector<8x1xf32>
    %81 = vector.broadcast %80 : vector<8x1xf32> to vector<8x32xf32>
    %82 = arith.subf %74, %81 : vector<8x32xf32>
    %83 = arith.mulf %82, %82 : vector<8x32xf32>
    %cst_26 = arith.constant dense<0.000000e+00> : vector<8xf32>
    %84 = vector.multi_reduction <add>, %83, %cst_26 [1] : vector<8x32xf32> to vector<8xf32>
    %85 = vector.shape_cast %84 : vector<8xf32> to vector<8x1xf32>
    %cst_27 = arith.constant 3.200000e+01 : f32
    %86 = vector.broadcast %cst_27 : f32 to vector<8x1xf32>
    %87 = arith.divf %85, %86 : vector<8x1xf32>
    %88 = vector.broadcast %80 : vector<8x1xf32> to vector<8x32xf32>
    %89 = arith.subf %74, %88 : vector<8x32xf32>
    %cst_28 = arith.constant 9.99999996E-13 : f32
    %90 = vector.broadcast %cst_28 : f32 to vector<8x1xf32>
    %91 = arith.addf %87, %90 : vector<8x1xf32>
    %92 = math.rsqrt %91 : vector<8x1xf32>
    %93 = vector.broadcast %92 : vector<8x1xf32> to vector<8x32xf32>
    %94 = arith.mulf %89, %93 : vector<8x32xf32>
    %95 = vector.broadcast %75 : vector<1x32xf32> to vector<8x32xf32>
    %96 = arith.mulf %94, %95 : vector<8x32xf32>
    %97 = vector.broadcast %76 : vector<1x32xf32> to vector<8x32xf32>
    %98 = arith.addf %96, %97 : vector<8x32xf32>
    %c0_29 = arith.constant 0 : index
    %c0_30 = arith.constant 0 : index
    %c0_31 = arith.constant 0 : index
    %99 = vector.load %arg6[%c0_29, %c0_30, %c0_31] : memref<2x32x64xf32, #tpu.memory_space<vmem>>, vector<1x32x64xf32>
    %100 = vector.shape_cast %99 : vector<1x32x64xf32> to vector<32x64xf32>
    %cst_32 = arith.constant dense<0.000000e+00> : vector<8x64xf32>
    %101 = tpu.matmul %98, %100, %cst_32 {dimension_numbers = #tpu.dot_dimension_numbers<[1], [0], [0], [1], [0, 0, 1, 1], [], []>} : vector<8x32xf32>, vector<32x64xf32>, vector<8x64xf32> -> vector<8x64xf32>
    %c0_33 = arith.constant 0 : index
    %c0_34 = arith.constant 0 : index
    %c0_35 = arith.constant 0 : index
    %102 = vector.load %arg7[%c0_33, %c0_34, %c0_35] : memref<2x1x64xf32, #tpu.memory_space<vmem>>, vector<1x1x64xf32>
    %103 = vector.shape_cast %102 : vector<1x1x64xf32> to vector<1x64xf32>
    %104 = vector.broadcast %103 : vector<1x64xf32> to vector<8x64xf32>
    %105 = arith.addf %101, %104 : vector<8x64xf32>
    %cst_36 = arith.constant 5.000000e-01 : f32
    %106 = vector.broadcast %cst_36 : f32 to vector<8x64xf32>
    %107 = arith.mulf %106, %105 : vector<8x64xf32>
    %cst_37 = arith.constant 2.000000e+00 : f32
    %108 = math.sqrt %cst_37 : f32
    %cst_38 = arith.constant 1.000000e+00 : f32
    %109 = arith.divf %cst_38, %108 : f32
    %110 = vector.broadcast %109 : f32 to vector<8x64xf32>
    %111 = arith.mulf %105, %110 : vector<8x64xf32>
    %112 = math.erf %111 : vector<8x64xf32>
    %cst_39 = arith.constant 1.000000e+00 : f32
    %113 = vector.broadcast %cst_39 : f32 to vector<8x64xf32>
    %114 = arith.addf %113, %112 : vector<8x64xf32>
    %115 = arith.mulf %107, %114 : vector<8x64xf32>
    %c0_40 = arith.constant 0 : index
    %c0_41 = arith.constant 0 : index
    %c0_42 = arith.constant 0 : index
    %116 = vector.load %arg8[%c0_40, %c0_41, %c0_42] : memref<2x64x32xf32, #tpu.memory_space<vmem>>, vector<1x64x32xf32>
    %117 = vector.shape_cast %116 : vector<1x64x32xf32> to vector<64x32xf32>
    %cst_43 = arith.constant dense<0.000000e+00> : vector<8x32xf32>
    %118 = tpu.matmul %115, %117, %cst_43 {dimension_numbers = #tpu.dot_dimension_numbers<[1], [0], [0], [1], [0, 0, 1, 1], [], []>} : vector<8x64xf32>, vector<64x32xf32>, vector<8x32xf32> -> vector<8x32xf32>
    %119 = vector.extract_strided_slice %9 {offsets = [3, 0], sizes = [1, 32], strides = [1, 1]} : vector<6x32xf32> to vector<1x32xf32>
    %120 = vector.broadcast %119 : vector<1x32xf32> to vector<8x32xf32>
    %121 = arith.addf %118, %120 : vector<8x32xf32>
    %122 = arith.addf %121, %98 : vector<8x32xf32>
    %123 = vector.extract_strided_slice %9 {offsets = [4, 0], sizes = [1, 32], strides = [1, 1]} : vector<6x32xf32> to vector<1x32xf32>
    %124 = vector.extract_strided_slice %9 {offsets = [5, 0], sizes = [1, 32], strides = [1, 1]} : vector<6x32xf32> to vector<1x32xf32>
    %cst_44 = arith.constant dense<0.000000e+00> : vector<8xf32>
    %125 = vector.multi_reduction <add>, %122, %cst_44 [1] : vector<8x32xf32> to vector<8xf32>
    %126 = vector.shape_cast %125 : vector<8xf32> to vector<8x1xf32>
    %cst_45 = arith.constant 3.200000e+01 : f32
    %127 = vector.broadcast %cst_45 : f32 to vector<8x1xf32>
    %128 = arith.divf %126, %127 : vector<8x1xf32>
    %129 = vector.broadcast %128 : vector<8x1xf32> to vector<8x32xf32>
    %130 = arith.subf %122, %129 : vector<8x32xf32>
    %131 = arith.mulf %130, %130 : vector<8x32xf32>
    %cst_46 = arith.constant dense<0.000000e+00> : vector<8xf32>
    %132 = vector.multi_reduction <add>, %131, %cst_46 [1] : vector<8x32xf32> to vector<8xf32>
    %133 = vector.shape_cast %132 : vector<8xf32> to vector<8x1xf32>
    %cst_47 = arith.constant 3.200000e+01 : f32
    %134 = vector.broadcast %cst_47 : f32 to vector<8x1xf32>
    %135 = arith.divf %133, %134 : vector<8x1xf32>
    %136 = vector.broadcast %128 : vector<8x1xf32> to vector<8x32xf32>
    %137 = arith.subf %122, %136 : vector<8x32xf32>
    %cst_48 = arith.constant 9.99999996E-13 : f32
    %138 = vector.broadcast %cst_48 : f32 to vector<8x1xf32>
    %139 = arith.addf %135, %138 : vector<8x1xf32>
    %140 = math.rsqrt %139 : vector<8x1xf32>
    %141 = vector.broadcast %140 : vector<8x1xf32> to vector<8x32xf32>
    %142 = arith.mulf %137, %141 : vector<8x32xf32>
    %143 = vector.broadcast %123 : vector<1x32xf32> to vector<8x32xf32>
    %144 = arith.mulf %142, %143 : vector<8x32xf32>
    %145 = vector.broadcast %124 : vector<1x32xf32> to vector<8x32xf32>
    %146 = arith.addf %144, %145 : vector<8x32xf32>
    %c1 = arith.constant 1 : index
    %c0_49 = arith.constant 0 : index
    %c0_50 = arith.constant 0 : index
    %147 = vector.load %arg9[%c1, %c0_49, %c0_50] : memref<2x6x32xf32, #tpu.memory_space<vmem>>, vector<1x6x32xf32>
    %148 = vector.shape_cast %147 : vector<1x6x32xf32> to vector<6x32xf32>
    %c1_51 = arith.constant 1 : index
    %c0_52 = arith.constant 0 : index
    %c0_53 = arith.constant 0 : index
    %149 = vector.load %arg3[%c1_51, %c0_52, %c0_53] : memref<2x32x96xf32, #tpu.memory_space<vmem>>, vector<1x32x96xf32>
    %150 = vector.shape_cast %149 : vector<1x32x96xf32> to vector<32x96xf32>
    %cst_54 = arith.constant dense<0.000000e+00> : vector<8x96xf32>
    %151 = tpu.matmul %146, %150, %cst_54 {dimension_numbers = #tpu.dot_dimension_numbers<[1], [0], [0], [1], [0, 0, 1, 1], [], []>} : vector<8x32xf32>, vector<32x96xf32>, vector<8x96xf32> -> vector<8x96xf32>
    %c1_55 = arith.constant 1 : index
    %c0_56 = arith.constant 0 : index
    %c0_57 = arith.constant 0 : index
    %152 = vector.load %arg4[%c1_55, %c0_56, %c0_57] : memref<2x1x96xf32, #tpu.memory_space<vmem>>, vector<1x1x96xf32>
    %153 = vector.shape_cast %152 : vector<1x1x96xf32> to vector<1x96xf32>
    %154 = vector.broadcast %153 : vector<1x96xf32> to vector<8x96xf32>
    %155 = arith.addf %151, %154 : vector<8x96xf32>
    %156 = vector.extract_strided_slice %155 {offsets = [0, 0], sizes = [8, 8], strides = [1, 1]} : vector<8x96xf32> to vector<8x8xf32>
    %157 = vector.extract_strided_slice %155 {offsets = [0, 8], sizes = [8, 8], strides = [1, 1]} : vector<8x96xf32> to vector<8x8xf32>
    %158 = vector.extract_strided_slice %155 {offsets = [0, 16], sizes = [8, 8], strides = [1, 1]} : vector<8x96xf32> to vector<8x8xf32>
    %159 = vector.extract_strided_slice %155 {offsets = [0, 24], sizes = [8, 8], strides = [1, 1]} : vector<8x96xf32> to vector<8x8xf32>
    %160 = vector.shape_cast %156 : vector<8x8xf32> to vector<1x8x8xf32>
    %161 = vector.shape_cast %157 : vector<8x8xf32> to vector<1x8x8xf32>
    %162 = vector.shape_cast %158 : vector<8x8xf32> to vector<1x8x8xf32>
    %163 = vector.shape_cast %159 : vector<8x8xf32> to vector<1x8x8xf32>
    %164 = tpu.concatenate %160, %161, %162, %163 in 0 : vector<1x8x8xf32>, vector<1x8x8xf32>, vector<1x8x8xf32>, vector<1x8x8xf32> -> vector<4x8x8xf32>
    %165 = vector.extract_strided_slice %155 {offsets = [0, 32], sizes = [8, 8], strides = [1, 1]} : vector<8x96xf32> to vector<8x8xf32>
    %166 = vector.extract_strided_slice %155 {offsets = [0, 40], sizes = [8, 8], strides = [1, 1]} : vector<8x96xf32> to vector<8x8xf32>
    %167 = vector.extract_strided_slice %155 {offsets = [0, 48], sizes = [8, 8], strides = [1, 1]} : vector<8x96xf32> to vector<8x8xf32>
    %168 = vector.extract_strided_slice %155 {offsets = [0, 56], sizes = [8, 8], strides = [1, 1]} : vector<8x96xf32> to vector<8x8xf32>
    %169 = vector.shape_cast %165 : vector<8x8xf32> to vector<1x8x8xf32>
    %170 = vector.shape_cast %166 : vector<8x8xf32> to vector<1x8x8xf32>
    %171 = vector.shape_cast %167 : vector<8x8xf32> to vector<1x8x8xf32>
    %172 = vector.shape_cast %168 : vector<8x8xf32> to vector<1x8x8xf32>
    %173 = tpu.concatenate %169, %170, %171, %172 in 0 : vector<1x8x8xf32>, vector<1x8x8xf32>, vector<1x8x8xf32>, vector<1x8x8xf32> -> vector<4x8x8xf32>
    %174 = vector.extract_strided_slice %155 {offsets = [0, 64], sizes = [8, 8], strides = [1, 1]} : vector<8x96xf32> to vector<8x8xf32>
    %175 = vector.extract_strided_slice %155 {offsets = [0, 72], sizes = [8, 8], strides = [1, 1]} : vector<8x96xf32> to vector<8x8xf32>
    %176 = vector.extract_strided_slice %155 {offsets = [0, 80], sizes = [8, 8], strides = [1, 1]} : vector<8x96xf32> to vector<8x8xf32>
    %177 = vector.extract_strided_slice %155 {offsets = [0, 88], sizes = [8, 8], strides = [1, 1]} : vector<8x96xf32> to vector<8x8xf32>
    %178 = vector.shape_cast %174 : vector<8x8xf32> to vector<1x8x8xf32>
    %179 = vector.shape_cast %175 : vector<8x8xf32> to vector<1x8x8xf32>
    %180 = vector.shape_cast %176 : vector<8x8xf32> to vector<1x8x8xf32>
    %181 = vector.shape_cast %177 : vector<8x8xf32> to vector<1x8x8xf32>
    %182 = tpu.concatenate %178, %179, %180, %181 in 0 : vector<1x8x8xf32>, vector<1x8x8xf32>, vector<1x8x8xf32>, vector<1x8x8xf32> -> vector<4x8x8xf32>
    "tpu.trace_start"() <{level = 10 : i32, message = "nqd,nkd->nqk"}> : () -> ()
    %cst_58 = arith.constant dense<0.000000e+00> : vector<4x8x8xf32>
    %183 = tpu.matmul %164, %173, %cst_58 {dimension_numbers = #tpu.dot_dimension_numbers<[2], [2], [1], [1], [0, 0, 0, 1, 1, 1], [0], [0]>} : vector<4x8x8xf32>, vector<4x8x8xf32>, vector<4x8x8xf32> -> vector<4x8x8xf32>
    "tpu.trace_stop"() : () -> ()
    %184 = vector.shape_cast %7 : vector<1x8xf32> to vector<1x1x8xf32>
    %185 = vector.broadcast %184 : vector<1x1x8xf32> to vector<4x8x8xf32>
    %186 = arith.addf %183, %185 : vector<4x8x8xf32>
    %cst_59 = arith.constant dense<0xFF800000> : vector<4x8xf32>
    %187 = vector.multi_reduction <maximumf>, %186, %cst_59 [2] : vector<4x8x8xf32> to vector<4x8xf32>
    %188 = vector.shape_cast %187 : vector<4x8xf32> to vector<4x8x1xf32>
    %189 = vector.broadcast %188 : vector<4x8x1xf32> to vector<4x8x8xf32>
    %190 = arith.subf %186, %189 : vector<4x8x8xf32>
    %191 = math.exp %190 : vector<4x8x8xf32>
    %cst_60 = arith.constant dense<0.000000e+00> : vector<4x8xf32>
    %192 = vector.multi_reduction <add>, %191, %cst_60 [2] : vector<4x8x8xf32> to vector<4x8xf32>
    %193 = vector.shape_cast %192 : vector<4x8xf32> to vector<4x8x1xf32>
    %194 = tpu.reciprocal %193 : vector<4x8x1xf32> -> vector<4x8x1xf32>
    %195 = vector.broadcast %194 : vector<4x8x1xf32> to vector<4x8x8xf32>
    %196 = arith.mulf %191, %195 : vector<4x8x8xf32>
    "tpu.trace_start"() <{level = 10 : i32, message = "nqk,nkd->nqd"}> : () -> ()
    %cst_61 = arith.constant dense<0.000000e+00> : vector<4x8x8xf32>
    %197 = tpu.matmul %196, %182, %cst_61 {dimension_numbers = #tpu.dot_dimension_numbers<[2], [1], [1], [2], [0, 0, 0, 1, 1, 2], [0], [0]>} : vector<4x8x8xf32>, vector<4x8x8xf32>, vector<4x8x8xf32> -> vector<4x8x8xf32>
    "tpu.trace_stop"() : () -> ()
    %198 = vector.extract_strided_slice %197 {offsets = [0, 0, 0], sizes = [1, 8, 8], strides = [1, 1, 1]} : vector<4x8x8xf32> to vector<1x8x8xf32>
    %199 = vector.shape_cast %198 : vector<1x8x8xf32> to vector<8x8xf32>
    %200 = vector.extract_strided_slice %197 {offsets = [1, 0, 0], sizes = [1, 8, 8], strides = [1, 1, 1]} : vector<4x8x8xf32> to vector<1x8x8xf32>
    %201 = vector.shape_cast %200 : vector<1x8x8xf32> to vector<8x8xf32>
    %202 = vector.extract_strided_slice %197 {offsets = [2, 0, 0], sizes = [1, 8, 8], strides = [1, 1, 1]} : vector<4x8x8xf32> to vector<1x8x8xf32>
    %203 = vector.shape_cast %202 : vector<1x8x8xf32> to vector<8x8xf32>
    %204 = vector.extract_strided_slice %197 {offsets = [3, 0, 0], sizes = [1, 8, 8], strides = [1, 1, 1]} : vector<4x8x8xf32> to vector<1x8x8xf32>
    %205 = vector.shape_cast %204 : vector<1x8x8xf32> to vector<8x8xf32>
    %206 = tpu.concatenate %199, %201, %203, %205 in 1 : vector<8x8xf32>, vector<8x8xf32>, vector<8x8xf32>, vector<8x8xf32> -> vector<8x32xf32>
    %c1_62 = arith.constant 1 : index
    %c0_63 = arith.constant 0 : index
    %c0_64 = arith.constant 0 : index
    %207 = vector.load %arg5[%c1_62, %c0_63, %c0_64] : memref<2x32x32xf32, #tpu.memory_space<vmem>>, vector<1x32x32xf32>
    %208 = vector.shape_cast %207 : vector<1x32x32xf32> to vector<32x32xf32>
    %cst_65 = arith.constant dense<0.000000e+00> : vector<8x32xf32>
    %209 = tpu.matmul %206, %208, %cst_65 {dimension_numbers = #tpu.dot_dimension_numbers<[1], [0], [0], [1], [0, 0, 1, 1], [], []>} : vector<8x32xf32>, vector<32x32xf32>, vector<8x32xf32> -> vector<8x32xf32>
    %210 = vector.extract_strided_slice %148 {offsets = [0, 0], sizes = [1, 32], strides = [1, 1]} : vector<6x32xf32> to vector<1x32xf32>
    %211 = vector.broadcast %210 : vector<1x32xf32> to vector<8x32xf32>
    %212 = arith.addf %209, %211 : vector<8x32xf32>
    %213 = arith.addf %212, %146 : vector<8x32xf32>
    %214 = vector.extract_strided_slice %148 {offsets = [1, 0], sizes = [1, 32], strides = [1, 1]} : vector<6x32xf32> to vector<1x32xf32>
    %215 = vector.extract_strided_slice %148 {offsets = [2, 0], sizes = [1, 32], strides = [1, 1]} : vector<6x32xf32> to vector<1x32xf32>
    %cst_66 = arith.constant dense<0.000000e+00> : vector<8xf32>
    %216 = vector.multi_reduction <add>, %213, %cst_66 [1] : vector<8x32xf32> to vector<8xf32>
    %217 = vector.shape_cast %216 : vector<8xf32> to vector<8x1xf32>
    %cst_67 = arith.constant 3.200000e+01 : f32
    %218 = vector.broadcast %cst_67 : f32 to vector<8x1xf32>
    %219 = arith.divf %217, %218 : vector<8x1xf32>
    %220 = vector.broadcast %219 : vector<8x1xf32> to vector<8x32xf32>
    %221 = arith.subf %213, %220 : vector<8x32xf32>
    %222 = arith.mulf %221, %221 : vector<8x32xf32>
    %cst_68 = arith.constant dense<0.000000e+00> : vector<8xf32>
    %223 = vector.multi_reduction <add>, %222, %cst_68 [1] : vector<8x32xf32> to vector<8xf32>
    %224 = vector.shape_cast %223 : vector<8xf32> to vector<8x1xf32>
    %cst_69 = arith.constant 3.200000e+01 : f32
    %225 = vector.broadcast %cst_69 : f32 to vector<8x1xf32>
    %226 = arith.divf %224, %225 : vector<8x1xf32>
    %227 = vector.broadcast %219 : vector<8x1xf32> to vector<8x32xf32>
    %228 = arith.subf %213, %227 : vector<8x32xf32>
    %cst_70 = arith.constant 9.99999996E-13 : f32
    %229 = vector.broadcast %cst_70 : f32 to vector<8x1xf32>
    %230 = arith.addf %226, %229 : vector<8x1xf32>
    %231 = math.rsqrt %230 : vector<8x1xf32>
    %232 = vector.broadcast %231 : vector<8x1xf32> to vector<8x32xf32>
    %233 = arith.mulf %228, %232 : vector<8x32xf32>
    %234 = vector.broadcast %214 : vector<1x32xf32> to vector<8x32xf32>
    %235 = arith.mulf %233, %234 : vector<8x32xf32>
    %236 = vector.broadcast %215 : vector<1x32xf32> to vector<8x32xf32>
    %237 = arith.addf %235, %236 : vector<8x32xf32>
    %c1_71 = arith.constant 1 : index
    %c0_72 = arith.constant 0 : index
    %c0_73 = arith.constant 0 : index
    %238 = vector.load %arg6[%c1_71, %c0_72, %c0_73] : memref<2x32x64xf32, #tpu.memory_space<vmem>>, vector<1x32x64xf32>
    %239 = vector.shape_cast %238 : vector<1x32x64xf32> to vector<32x64xf32>
    %cst_74 = arith.constant dense<0.000000e+00> : vector<8x64xf32>
    %240 = tpu.matmul %237, %239, %cst_74 {dimension_numbers = #tpu.dot_dimension_numbers<[1], [0], [0], [1], [0, 0, 1, 1], [], []>} : vector<8x32xf32>, vector<32x64xf32>, vector<8x64xf32> -> vector<8x64xf32>
    %c1_75 = arith.constant 1 : index
    %c0_76 = arith.constant 0 : index
    %c0_77 = arith.constant 0 : index
    %241 = vector.load %arg7[%c1_75, %c0_76, %c0_77] : memref<2x1x64xf32, #tpu.memory_space<vmem>>, vector<1x1x64xf32>
    %242 = vector.shape_cast %241 : vector<1x1x64xf32> to vector<1x64xf32>
    %243 = vector.broadcast %242 : vector<1x64xf32> to vector<8x64xf32>
    %244 = arith.addf %240, %243 : vector<8x64xf32>
    %cst_78 = arith.constant 5.000000e-01 : f32
    %245 = vector.broadcast %cst_78 : f32 to vector<8x64xf32>
    %246 = arith.mulf %245, %244 : vector<8x64xf32>
    %cst_79 = arith.constant 2.000000e+00 : f32
    %247 = math.sqrt %cst_79 : f32
    %cst_80 = arith.constant 1.000000e+00 : f32
    %248 = arith.divf %cst_80, %247 : f32
    %249 = vector.broadcast %248 : f32 to vector<8x64xf32>
    %250 = arith.mulf %244, %249 : vector<8x64xf32>
    %251 = math.erf %250 : vector<8x64xf32>
    %cst_81 = arith.constant 1.000000e+00 : f32
    %252 = vector.broadcast %cst_81 : f32 to vector<8x64xf32>
    %253 = arith.addf %252, %251 : vector<8x64xf32>
    %254 = arith.mulf %246, %253 : vector<8x64xf32>
    %c1_82 = arith.constant 1 : index
    %c0_83 = arith.constant 0 : index
    %c0_84 = arith.constant 0 : index
    %255 = vector.load %arg8[%c1_82, %c0_83, %c0_84] : memref<2x64x32xf32, #tpu.memory_space<vmem>>, vector<1x64x32xf32>
    %256 = vector.shape_cast %255 : vector<1x64x32xf32> to vector<64x32xf32>
    %cst_85 = arith.constant dense<0.000000e+00> : vector<8x32xf32>
    %257 = tpu.matmul %254, %256, %cst_85 {dimension_numbers = #tpu.dot_dimension_numbers<[1], [0], [0], [1], [0, 0, 1, 1], [], []>} : vector<8x64xf32>, vector<64x32xf32>, vector<8x32xf32> -> vector<8x32xf32>
    %258 = vector.extract_strided_slice %148 {offsets = [3, 0], sizes = [1, 32], strides = [1, 1]} : vector<6x32xf32> to vector<1x32xf32>
    %259 = vector.broadcast %258 : vector<1x32xf32> to vector<8x32xf32>
    %260 = arith.addf %257, %259 : vector<8x32xf32>
    %261 = arith.addf %260, %237 : vector<8x32xf32>
    %262 = vector.extract_strided_slice %148 {offsets = [4, 0], sizes = [1, 32], strides = [1, 1]} : vector<6x32xf32> to vector<1x32xf32>
    %263 = vector.extract_strided_slice %148 {offsets = [5, 0], sizes = [1, 32], strides = [1, 1]} : vector<6x32xf32> to vector<1x32xf32>
    %cst_86 = arith.constant dense<0.000000e+00> : vector<8xf32>
    %264 = vector.multi_reduction <add>, %261, %cst_86 [1] : vector<8x32xf32> to vector<8xf32>
    %265 = vector.shape_cast %264 : vector<8xf32> to vector<8x1xf32>
    %cst_87 = arith.constant 3.200000e+01 : f32
    %266 = vector.broadcast %cst_87 : f32 to vector<8x1xf32>
    %267 = arith.divf %265, %266 : vector<8x1xf32>
    %268 = vector.broadcast %267 : vector<8x1xf32> to vector<8x32xf32>
    %269 = arith.subf %261, %268 : vector<8x32xf32>
    %270 = arith.mulf %269, %269 : vector<8x32xf32>
    %cst_88 = arith.constant dense<0.000000e+00> : vector<8xf32>
    %271 = vector.multi_reduction <add>, %270, %cst_88 [1] : vector<8x32xf32> to vector<8xf32>
    %272 = vector.shape_cast %271 : vector<8xf32> to vector<8x1xf32>
    %cst_89 = arith.constant 3.200000e+01 : f32
    %273 = vector.broadcast %cst_89 : f32 to vector<8x1xf32>
    %274 = arith.divf %272, %273 : vector<8x1xf32>
    %275 = vector.broadcast %267 : vector<8x1xf32> to vector<8x32xf32>
    %276 = arith.subf %261, %275 : vector<8x32xf32>
    %cst_90 = arith.constant 9.99999996E-13 : f32
    %277 = vector.broadcast %cst_90 : f32 to vector<8x1xf32>
    %278 = arith.addf %274, %277 : vector<8x1xf32>
    %279 = math.rsqrt %278 : vector<8x1xf32>
    %280 = vector.broadcast %279 : vector<8x1xf32> to vector<8x32xf32>
    %281 = arith.mulf %276, %280 : vector<8x32xf32>
    %282 = vector.broadcast %262 : vector<1x32xf32> to vector<8x32xf32>
    %283 = arith.mulf %281, %282 : vector<8x32xf32>
    %284 = vector.broadcast %263 : vector<1x32xf32> to vector<8x32xf32>
    %285 = arith.addf %283, %284 : vector<8x32xf32>
    %286 = vector.extract_strided_slice %285 {offsets = [0, 0], sizes = [1, 32], strides = [1, 1]} : vector<8x32xf32> to vector<1x32xf32>
    %c0_91 = arith.constant 0 : index
    %c0_92 = arith.constant 0 : index
    %287 = vector.load %arg10[%c0_91, %c0_92] : memref<32x32xf32, #tpu.memory_space<vmem>>, vector<32x32xf32>
    %cst_93 = arith.constant dense<0.000000e+00> : vector<1x32xf32>
    %288 = tpu.matmul %286, %287, %cst_93 {dimension_numbers = #tpu.dot_dimension_numbers<[1], [0], [0], [1], [0, 0, 1, 1], [], []>} : vector<1x32xf32>, vector<32x32xf32>, vector<1x32xf32> -> vector<1x32xf32>
    %c0_94 = arith.constant 0 : index
    %c0_95 = arith.constant 0 : index
    %289 = vector.load %arg11[%c0_94, %c0_95] : memref<1x32xf32, #tpu.memory_space<vmem>>, vector<1x32xf32>
    %290 = arith.addf %288, %289 : vector<1x32xf32>
    %291 = math.tanh %290 : vector<1x32xf32>
    %c0_96 = arith.constant 0 : index
    %c0_97 = arith.constant 0 : index
    %c0_98 = arith.constant 0 : index
    %292 = vector.load %arg12[%c0_96, %c0_97, %c0_98] : memref<1x1x32xf32, #tpu.memory_space<vmem>>, vector<1x1x32xf32>
    %293 = vector.shape_cast %292 : vector<1x1x32xf32> to vector<1x32xf32>
    %294 = vector.shape_cast %291 : vector<1x32xf32> to vector<1x1x32xf32>
    tpu.vector_store %arg12[%c0_96, %c0_97, %c0_98], %294 {strides = array<i32>} : memref<1x1x32xf32, #tpu.memory_space<vmem>>, vector<1x1x32xf32>,
    return
  }
  func.func @transform_0(%arg0: i32) -> (i32, i32, i32) {
    %c0_i32 = arith.constant 0 : i32
    %c0_i32_0 = arith.constant 0 : i32
    %c0_i32_1 = arith.constant 0 : i32
    return %arg0, %c0_i32, %c0_i32_0 : i32, i32, i32
  }
  func.func @transform_1(%arg0: i32) -> (i32, i32, i32) {
    %c0_i32 = arith.constant 0 : i32
    %c0_i32_0 = arith.constant 0 : i32
    %c0_i32_1 = arith.constant 0 : i32
    return %arg0, %c0_i32, %c0_i32_0 : i32, i32, i32
  }
  func.func @transform_2(%arg0: i32) -> (i32, i32, i32) {
    %c0_i32 = arith.constant 0 : i32
    %c0_i32_0 = arith.constant 0 : i32
    %c0_i32_1 = arith.constant 0 : i32
    %c0_i32_2 = arith.constant 0 : i32
    return %c0_i32, %c0_i32_0, %c0_i32_1 : i32, i32, i32
  }
  func.func @transform_3(%arg0: i32) -> (i32, i32, i32) {
    %c0_i32 = arith.constant 0 : i32
    %c0_i32_0 = arith.constant 0 : i32
    %c0_i32_1 = arith.constant 0 : i32
    %c0_i32_2 = arith.constant 0 : i32
    return %c0_i32, %c0_i32_0, %c0_i32_1 : i32, i32, i32
  }
  func.func @transform_4(%arg0: i32) -> (i32, i32, i32) {
    %c0_i32 = arith.constant 0 : i32
    %c0_i32_0 = arith.constant 0 : i32
    %c0_i32_1 = arith.constant 0 : i32
    %c0_i32_2 = arith.constant 0 : i32
    return %c0_i32, %c0_i32_0, %c0_i32_1 : i32, i32, i32
  }
  func.func @transform_5(%arg0: i32) -> (i32, i32, i32) {
    %c0_i32 = arith.constant 0 : i32
    %c0_i32_0 = arith.constant 0 : i32
    %c0_i32_1 = arith.constant 0 : i32
    %c0_i32_2 = arith.constant 0 : i32
    return %c0_i32, %c0_i32_0, %c0_i32_1 : i32, i32, i32
  }
  func.func @transform_6(%arg0: i32) -> (i32, i32, i32) {
    %c0_i32 = arith.constant 0 : i32
    %c0_i32_0 = arith.constant 0 : i32
    %c0_i32_1 = arith.constant 0 : i32
    %c0_i32_2 = arith.constant 0 : i32
    return %c0_i32, %c0_i32_0, %c0_i32_1 : i32, i32, i32
  }
  func.func @transform_7(%arg0: i32) -> (i32, i32, i32) {
    %c0_i32 = arith.constant 0 : i32
    %c0_i32_0 = arith.constant 0 : i32
    %c0_i32_1 = arith.constant 0 : i32
    %c0_i32_2 = arith.constant 0 : i32
    return %c0_i32, %c0_i32_0, %c0_i32_1 : i32, i32, i32
  }
  func.func @transform_8(%arg0: i32) -> (i32, i32, i32) {
    %c0_i32 = arith.constant 0 : i32
    %c0_i32_0 = arith.constant 0 : i32
    %c0_i32_1 = arith.constant 0 : i32
    %c0_i32_2 = arith.constant 0 : i32
    return %c0_i32, %c0_i32_0, %c0_i32_1 : i32, i32, i32
  }
  func.func @transform_9(%arg0: i32) -> (i32, i32) {
    %c0_i32 = arith.constant 0 : i32
    %c0_i32_0 = arith.constant 0 : i32
    %c0_i32_1 = arith.constant 0 : i32
    return %c0_i32, %c0_i32_0 : i32, i32
  }
  func.func @transform_10(%arg0: i32) -> (i32, i32) {
    %c0_i32 = arith.constant 0 : i32
    %c0_i32_0 = arith.constant 0 : i32
    %c0_i32_1 = arith.constant 0 : i32
    return %c0_i32, %c0_i32_0 : i32, i32
  }
  func.func @transform_11(%arg0: i32) -> (i32, i32, i32) {
    %c0_i32 = arith.constant 0 : i32
    %c0_i32_0 = arith.constant 0 : i32
    %c0_i32_1 = arith.constant 0 : i32
    return %arg0, %c0_i32, %c0_i32_0 : i32, i32, i32
  }
}

</mosaic_0001>

<llo_original>
// kernel: _lambda_.1
$region0: #{_lambda_.1}
  #allocation0 [shape = 'u32[]', space=smem, size = 0x4, offset = 0x4, fixed_abs, tag = 'smem constant byte address 0x4 - core index']
  #allocation1 [shape = 'u32[144,128]{1,0:T(1,128)}', space=vmem, size = 0x12000, scoped, tag = 'internal scratch']
  %s0 = inlined_call_operand.vmem [shape: f32[2,1,8], index: 0, kind: input, shape index: {}]
  %s1 = inlined_call_operand.hbm [shape: f32[2,8,32], index: 1, kind: input, shape index: {}]
  %s2 = inlined_call_operand.hbm [shape: f32[2,32,96], index: 2, kind: input, shape index: {}]
  %s3 = inlined_call_operand.vmem [shape: f32[2,1,96], index: 3, kind: input, shape index: {}]
  %s4 = inlined_call_operand.hbm [shape: f32[2,32,32], index: 4, kind: input, shape index: {}]
  %s5 = inlined_call_operand.hbm [shape: f32[2,32,64], index: 5, kind: input, shape index: {}]
  %s6 = inlined_call_operand.vmem [shape: f32[2,1,64], index: 6, kind: input, shape index: {}]
  %s7 = inlined_call_operand.hbm [shape: f32[2,64,32], index: 7, kind: input, shape index: {}]
  %s8 = inlined_call_operand.hbm [shape: f32[2,6,32], index: 8, kind: input, shape index: {}]
  %s9 = inlined_call_operand.vmem [shape: f32[32,32], index: 9, kind: input, shape index: {}]
  %s10 = inlined_call_operand.vmem [shape: f32[1,32], index: 10, kind: input, shape index: {}]
  %s11 = inlined_call_operand.hbm [shape: f32[2,1,32], index: 11, kind: output, shape index: {}]
  %s12 = sld [smem:[#allocation0]]
  $region101: #{_lambda_.1} parent=0
    _
  %s14 = ssub.s32 1, %s12
  %s15 = scalar_select 0, %s14, %s12
  $region1: #{_lambda_.1} parent=0
    #allocation2 [shape = 'u8[8192]{0}', space=vmem, size = 0x2000, scoped, tag = 'input window, operand 1']
    #allocation3 [shape = 's32[2]{0}', space=sflag, size = 0x8, scoped, tag = 'scoped memory for _lambda_.1']
    #allocation4 [shape = 's32[2]{0}', space=sflag, size = 0x8, scoped, tag = 'scoped memory for _lambda_.1']
    #allocation5 [shape = 'u8[32768]{0}', space=vmem, size = 0x8000, scoped, tag = 'input window, operand 2, single buffered']
    #allocation6 [shape = 's32[1]{0}', space=sflag, size = 0x4, scoped, tag = 'scoped memory for _lambda_.1']
    #allocation7 [shape = 'u8[32768]{0}', space=vmem, size = 0x8000, scoped, tag = 'input window, operand 4, single buffered']
    #allocation8 [shape = 'u8[32768]{0}', space=vmem, size = 0x8000, scoped, tag = 'input window, operand 5, single buffered']
    #allocation9 [shape = 's32[1]{0}', space=sflag, size = 0x4, scoped, tag = 'scoped memory for _lambda_.1']
    #allocation10 [shape = 'u8[65536]{0}', space=vmem, size = 0x10000, scoped, tag = 'input window, operand 7, single buffered']
    #allocation11 [shape = 'u8[8192]{0}', space=vmem, size = 0x2000, scoped, tag = 'input window, operand 8, single buffered']
    #allocation12 [shape = 's32[1]{0}', space=sflag, size = 0x4, scoped, tag = 'scoped memory for _lambda_.1']
    #allocation13 [shape = 'u8[1024]{0}', space=vmem, size = 0x400, scoped, tag = 'output window, operand 0']
    %16 = vsyncpa [#allocation3], 0
    %s17 = scalar_lea.sflag [#allocation3], 1
    %18 = vsyncpa %s17, 0
    %19 = vsyncpa [#allocation6], 0
    %20 = vsyncpa [#allocation9], 0
    %21 = vsyncpa [#allocation12], 0
    %22 = vsyncpa [#allocation4], 0
    %s23 = scalar_lea.sflag [#allocation4], 1
    %24 = vsyncpa %s23, 0
    loop: start=0, step=1, limit=4
    $region2: #{_lambda_.1} parent=1 // loop_pre_header
      _
    $region3: #{_lambda_.1} parent=1 // loop_header
      %s26 = sphi 0, %s30
      %p27 = scmp.ge.s32.totalorder %s26, 4
      %s36 = sphi 0, %s38
      %s39 = sphi 0, %s36
      %s40 = sphi 0, %s39
      %s56 = sphi 0, %s40
      %s62 = sphi 0, %s64
      %s65 = sphi 0, %s62
      %s66 = sphi 0, %s65
      %s82 = sphi 0, %s66
      %s86 = sphi 0, %s86
      %s88 = sphi 0, %s86
      %s89 = sphi 0, %s88
      %s103 = sphi 0, %s89
      %s107 = sphi 0, %s107
      %s109 = sphi 0, %s107
      %s110 = sphi 0, %s109
      %s124 = sphi 0, %s110
      %s128 = sphi 0, %s128
      %s130 = sphi 0, %s128
      %s131 = sphi 0, %s130
      %s145 = sphi 0, %s131
      %s149 = sphi 0, %s149
      %s151 = sphi 0, %s149
      %s152 = sphi 0, %s151
      %s166 = sphi 0, %s152
      %s170 = sphi 0, %s170
      %s172 = sphi 0, %s170
      %s173 = sphi 0, %s172
      %s187 = sphi 0, %s173
      %s191 = sphi 0, %s191
      %s193 = sphi 0, %s191
      %s194 = sphi 0, %s193
      %s208 = sphi 0, %s194
      %s212 = sphi 0, %s212
      %s214 = sphi 0, %s212
      %s215 = sphi 0, %s214
      %s229 = sphi 0, %s215
      %s233 = sphi 0, %s233
      %s235 = sphi 0, %s233
      %s236 = sphi 0, %s235
      %s250 = sphi 0, %s236
      %s254 = sphi 0, %s254
      %s256 = sphi 0, %s254
      %s257 = sphi 0, %s256
      %s271 = sphi 0, %s257
      %s277 = sphi 0, %s279
      %s280 = sphi 0, %s277
      %s281 = sphi 0, %s280
      %s297 = sphi 0, %s281
    $region4: #{_lambda_.1} parent=1 // loop_header_branch
      %29 = sbr.rel (%p27) target = $region8
    $region5: #{_lambda_.1} parent=1 // loop_body
      %s31 = ssub.s32 %s26, 1
      %s32 = ssub.s32 %s26, 2
      %s33 = sadd.s32 %s26, 1
      %s34 = ssub.s32 %s26, %s33
      %p35 = scmp.eq.s32.totalorder %s34, 0
      %s37 = sadd.s32 %s36, 1
      %s38 = scalar_select %p35, %s36, %s37
      %p41 = pneg %p35
      %p42 = scmp.eq.s32.totalorder %s26, 1
      %p43 = por %p41, %p42
      %p44 = scmp.ne.s32.totalorder %s36, %s39
      %p45 = scmp.eq.s32.totalorder %s26, 0
      %p46 = por %p44, %p45
      %p47 = scmp.ne.s32.totalorder %s36, %s39
      %p48 = scmp.eq.s32.totalorder %s31, 1
      %p49 = por %p47, %p48
      %p50 = scmp.ne.s32.totalorder %s39, %s40
      %p51 = scmp.eq.s32.totalorder %s31, 0
      %p52 = por %p50, %p51
      %p53 = scmp.ne.s32.totalorder %s39, %s40
      %p54 = scmp.eq.s32.totalorder %s32, 1
      %p55 = por %p53, %p54
      %p57 = scmp.ne.s32.totalorder %s40, %s56
      %p58 = scmp.eq.s32.totalorder %s32, 0
      %p59 = por %p57, %p58
      %s60 = ssub.s32 %s26, %s33
      %p61 = scmp.eq.s32.totalorder %s60, 0
      %s63 = sadd.s32 %s62, 1
      %s64 = scalar_select %p61, %s62, %s63
      %p67 = pneg %p61
      %p68 = scmp.eq.s32.totalorder %s26, 1
      %p69 = por %p67, %p68
      %p70 = scmp.ne.s32.totalorder %s62, %s65
      %p71 = scmp.eq.s32.totalorder %s26, 0
      %p72 = por %p70, %p71
      %p73 = scmp.ne.s32.totalorder %s62, %s65
      %p74 = scmp.eq.s32.totalorder %s31, 1
      %p75 = por %p73, %p74
      %p76 = scmp.ne.s32.totalorder %s65, %s66
      %p77 = scmp.eq.s32.totalorder %s31, 0
      %p78 = por %p76, %p77
      %p79 = scmp.ne.s32.totalorder %s65, %s66
      %p80 = scmp.eq.s32.totalorder %s32, 1
      %p81 = por %p79, %p80
      %p83 = scmp.ne.s32.totalorder %s66, %s82
      %p84 = scmp.eq.s32.totalorder %s32, 0
      %p85 = por %p83, %p84
      %s87 = sadd.s32 %s86, 1
      %p90 = scmp.eq.s32.totalorder %s26, 1
      %p91 = scmp.ne.s32.totalorder %s86, %s88
      %p92 = scmp.eq.s32.totalorder %s26, 0
      %p93 = por %p91, %p92
      %p94 = scmp.ne.s32.totalorder %s86, %s88
      %p95 = scmp.eq.s32.totalorder %s31, 1
      %p96 = por %p94, %p95
      %p97 = scmp.ne.s32.totalorder %s88, %s89
      %p98 = scmp.eq.s32.totalorder %s31, 0
      %p99 = por %p97, %p98
      %p100 = scmp.ne.s32.totalorder %s88, %s89
      %p101 = scmp.eq.s32.totalorder %s32, 1
      %p102 = por %p100, %p101
      %p104 = scmp.ne.s32.totalorder %s89, %s103
      %p105 = scmp.eq.s32.totalorder %s32, 0
      %p106 = por %p104, %p105
      %s108 = sadd.s32 %s107, 1
      %p111 = scmp.eq.s32.totalorder %s26, 1
      %p112 = scmp.ne.s32.totalorder %s107, %s109
      %p113 = scmp.eq.s32.totalorder %s26, 0
      %p114 = por %p112, %p113
      %p115 = scmp.ne.s32.totalorder %s107, %s109
      %p116 = scmp.eq.s32.totalorder %s31, 1
      %p117 = por %p115, %p116
      %p118 = scmp.ne.s32.totalorder %s109, %s110
      %p119 = scmp.eq.s32.totalorder %s31, 0
      %p120 = por %p118, %p119
      %p121 = scmp.ne.s32.totalorder %s109, %s110
      %p122 = scmp.eq.s32.totalorder %s32, 1
      %p123 = por %p121, %p122
      %p125 = scmp.ne.s32.totalorder %s110, %s124
      %p126 = scmp.eq.s32.totalorder %s32, 0
      %p127 = por %p125, %p126
      %s129 = sadd.s32 %s128, 1
      %p132 = scmp.eq.s32.totalorder %s26, 1
      %p133 = scmp.ne.s32.totalorder %s128, %s130
      %p134 = scmp.eq.s32.totalorder %s26, 0
      %p135 = por %p133, %p134
      %p136 = scmp.ne.s32.totalorder %s128, %s130
      %p137 = scmp.eq.s32.totalorder %s31, 1
      %p138 = por %p136, %p137
      %p139 = scmp.ne.s32.totalorder %s130, %s131
      %p140 = scmp.eq.s32.totalorder %s31, 0
      %p141 = por %p139, %p140
      %p142 = scmp.ne.s32.totalorder %s130, %s131
      %p143 = scmp.eq.s32.totalorder %s32, 1
      %p144 = por %p142, %p143
      %p146 = scmp.ne.s32.totalorder %s131, %s145
      %p147 = scmp.eq.s32.totalorder %s32, 0
      %p148 = por %p146, %p147
      %s150 = sadd.s32 %s149, 1
      %p153 = scmp.eq.s32.totalorder %s26, 1
      %p154 = scmp.ne.s32.totalorder %s149, %s151
      %p155 = scmp.eq.s32.totalorder %s26, 0
      %p156 = por %p154, %p155
      %p157 = scmp.ne.s32.totalorder %s149, %s151
      %p158 = scmp.eq.s32.totalorder %s31, 1
      %p159 = por %p157, %p158
      %p160 = scmp.ne.s32.totalorder %s151, %s152
      %p161 = scmp.eq.s32.totalorder %s31, 0
      %p162 = por %p160, %p161
      %p163 = scmp.ne.s32.totalorder %s151, %s152
      %p164 = scmp.eq.s32.totalorder %s32, 1
      %p165 = por %p163, %p164
      %p167 = scmp.ne.s32.totalorder %s152, %s166
      %p168 = scmp.eq.s32.totalorder %s32, 0
      %p169 = por %p167, %p168
      %s171 = sadd.s32 %s170, 1
      %p174 = scmp.eq.s32.totalorder %s26, 1
      %p175 = scmp.ne.s32.totalorder %s170, %s172
      %p176 = scmp.eq.s32.totalorder %s26, 0
      %p177 = por %p175, %p176
      %p178 = scmp.ne.s32.totalorder %s170, %s172
      %p179 = scmp.eq.s32.totalorder %s31, 1
      %p180 = por %p178, %p179
      %p181 = scmp.ne.s32.totalorder %s172, %s173
      %p182 = scmp.eq.s32.totalorder %s31, 0
      %p183 = por %p181, %p182
      %p184 = scmp.ne.s32.totalorder %s172, %s173
      %p185 = scmp.eq.s32.totalorder %s32, 1
      %p186 = por %p184, %p185
      %p188 = scmp.ne.s32.totalorder %s173, %s187
      %p189 = scmp.eq.s32.totalorder %s32, 0
      %p190 = por %p188, %p189
      %s192 = sadd.s32 %s191, 1
      %p195 = scmp.eq.s32.totalorder %s26, 1
      %p196 = scmp.ne.s32.totalorder %s191, %s193
      %p197 = scmp.eq.s32.totalorder %s26, 0
      %p198 = por %p196, %p197
      %p199 = scmp.ne.s32.totalorder %s191, %s193
      %p200 = scmp.eq.s32.totalorder %s31, 1
      %p201 = por %p199, %p200
      %p202 = scmp.ne.s32.totalorder %s193, %s194
      %p203 = scmp.eq.s32.totalorder %s31, 0
      %p204 = por %p202, %p203
      %p205 = scmp.ne.s32.totalorder %s193, %s194
      %p206 = scmp.eq.s32.totalorder %s32, 1
      %p207 = por %p205, %p206
      %p209 = scmp.ne.s32.totalorder %s194, %s208
      %p210 = scmp.eq.s32.totalorder %s32, 0
      %p211 = por %p209, %p210
      %s213 = sadd.s32 %s212, 1
      %p216 = scmp.eq.s32.totalorder %s26, 1
      %p217 = scmp.ne.s32.totalorder %s212, %s214
      %p218 = scmp.eq.s32.totalorder %s26, 0
      %p219 = por %p217, %p218
      %p220 = scmp.ne.s32.totalorder %s212, %s214
      %p221 = scmp.eq.s32.totalorder %s31, 1
      %p222 = por %p220, %p221
      %p223 = scmp.ne.s32.totalorder %s214, %s215
      %p224 = scmp.eq.s32.totalorder %s31, 0
      %p225 = por %p223, %p224
      %p226 = scmp.ne.s32.totalorder %s214, %s215
      %p227 = scmp.eq.s32.totalorder %s32, 1
      %p228 = por %p226, %p227
      %p230 = scmp.ne.s32.totalorder %s215, %s229
      %p231 = scmp.eq.s32.totalorder %s32, 0
      %p232 = por %p230, %p231
      %s234 = sadd.s32 %s233, 1
      %p237 = scmp.eq.s32.totalorder %s26, 1
      %p238 = scmp.ne.s32.totalorder %s233, %s235
      %p239 = scmp.eq.s32.totalorder %s26, 0
      %p240 = por %p238, %p239
      %p241 = scmp.ne.s32.totalorder %s233, %s235
      %p242 = scmp.eq.s32.totalorder %s31, 1
      %p243 = por %p241, %p242
      %p244 = scmp.ne.s32.totalorder %s235, %s236
      %p245 = scmp.eq.s32.totalorder %s31, 0
      %p246 = por %p244, %p245
      %p247 = scmp.ne.s32.totalorder %s235, %s236
      %p248 = scmp.eq.s32.totalorder %s32, 1
      %p249 = por %p247, %p248
      %p251 = scmp.ne.s32.totalorder %s236, %s250
      %p252 = scmp.eq.s32.totalorder %s32, 0
      %p253 = por %p251, %p252
      %s255 = sadd.s32 %s254, 1
      %p258 = scmp.eq.s32.totalorder %s26, 1
      %p259 = scmp.ne.s32.totalorder %s254, %s256
      %p260 = scmp.eq.s32.totalorder %s26, 0
      %p261 = por %p259, %p260
      %p262 = scmp.ne.s32.totalorder %s254, %s256
      %p263 = scmp.eq.s32.totalorder %s31, 1
      %p264 = por %p262, %p263
      %p265 = scmp.ne.s32.totalorder %s256, %s257
      %p266 = scmp.eq.s32.totalorder %s31, 0
      %p267 = por %p265, %p266
      %p268 = scmp.ne.s32.totalorder %s256, %s257
      %p269 = scmp.eq.s32.totalorder %s32, 1
      %p270 = por %p268, %p269
      %p272 = scmp.ne.s32.totalorder %s257, %s271
      %p273 = scmp.eq.s32.totalorder %s32, 0
      %p274 = por %p272, %p273
      %s275 = ssub.s32 %s26, %s33
      %p276 = scmp.eq.s32.totalorder %s275, 0
      %s278 = sadd.s32 %s277, 1
      %s279 = scalar_select %p276, %s277, %s278
      %p282 = pneg %p276
      %p283 = scmp.eq.s32.totalorder %s26, 1
      %p284 = por %p282, %p283
      %p285 = scmp.ne.s32.totalorder %s277, %s280
      %p286 = scmp.eq.s32.totalorder %s26, 0
      %p287 = por %p285, %p286
      %p288 = scmp.ne.s32.totalorder %s277, %s280
      %p289 = scmp.eq.s32.totalorder %s31, 1
      %p290 = por %p288, %p289
      %p291 = scmp.ne.s32.totalorder %s280, %s281
      %p292 = scmp.eq.s32.totalorder %s31, 0
      %p293 = por %p291, %p292
      %p294 = scmp.ne.s32.totalorder %s280, %s281
      %p295 = scmp.eq.s32.totalorder %s32, 1
      %p296 = por %p294, %p295
      %p298 = scmp.ne.s32.totalorder %s281, %s297
      %p299 = scmp.eq.s32.totalorder %s32, 0
      %p300 = por %p298, %p299
      %p301 = scmp.le.s32.totalorder 1, %s26
      %p302 = scmp.lt.s32.totalorder %s26, 3
      %p303 = pnand %p301, %p302
      %p304 = pneg %p303
      // Predicated region
      $region9: #{_lambda_.1} parent=5 // pred_check
        _
      $region10: #{_lambda_.1} parent=5 // pred_check_branch
        %306 = sbr.rel (%p303) target = $region12
      $region11: #{_lambda_.1} parent=5 // pred_region
        %s307 = ssub.s32 %s26, 1
        // Predicated region
        $region13: #{_lambda_.1} parent=11 // pred_check
          %p308 = pneg %p99
        $region14: #{_lambda_.1} parent=11 // pred_check_branch
          %310 = sbr.rel (%p308) target = $region16
        $region15: #{_lambda_.1} parent=11 // pred_region
          %s312 = ssub.s32 1024, 1024
          %313 = vsyncadd [#allocation6], %s312
          %s314 = sshll.u32 [#allocation5], 4
          %s315 = int_to_ptr.vmem [resolvable:$true] %s314
          %320 = dma.hbm_to_vmem [thread:$0]  %s2, 1024, %s315, [#allocation6], 128, 128, 8
        $region16: #{_lambda_.1} parent=11 // pred_fallthru
          _
        // Predicated region
        $region17: #{_lambda_.1} parent=11 // pred_check
          %p321 = pneg %p120
        $region18: #{_lambda_.1} parent=11 // pred_check_branch
          %323 = sbr.rel (%p321) target = $region20
        $region19: #{_lambda_.1} parent=11 // pred_region
          _
        $region20: #{_lambda_.1} parent=11 // pred_fallthru
          _
        // Predicated region
        $region21: #{_lambda_.1} parent=11 // pred_check
          %p324 = pneg %p141
        $region22: #{_lambda_.1} parent=11 // pred_check_branch
          %326 = sbr.rel (%p324) target = $region24
        $region23: #{_lambda_.1} parent=11 // pred_region
          %s328 = ssub.s32 1024, 1024
          %329 = vsyncadd [#allocation6], %s328
          %s330 = sshll.u32 [#allocation7], 4
          %s331 = int_to_ptr.vmem [resolvable:$true] %s330
          %336 = dma.hbm_to_vmem [thread:$0]  %s4, 1024, %s331, [#allocation6], 128, 128, 8
        $region24: #{_lambda_.1} parent=11 // pred_fallthru
          _
        // Predicated region
        $region25: #{_lambda_.1} parent=11 // pred_check
          %p337 = pneg %p162
        $region26: #{_lambda_.1} parent=11 // pred_check_branch
          %339 = sbr.rel (%p337) target = $region28
        $region27: #{_lambda_.1} parent=11 // pred_region
          %s341 = ssub.s32 1024, 1024
          %342 = vsyncadd [#allocation9], %s341
          %s343 = sshll.u32 [#allocation8], 4
          %s344 = int_to_ptr.vmem [resolvable:$true] %s343
          %349 = dma.hbm_to_vmem [thread:$0]  %s5, 1024, %s344, [#allocation9], 128, 128, 8
        $region28: #{_lambda_.1} parent=11 // pred_fallthru
          _
        // Predicated region
        $region29: #{_lambda_.1} parent=11 // pred_check
          %p350 = pneg %p183
        $region30: #{_lambda_.1} parent=11 // pred_check_branch
          %352 = sbr.rel (%p350) target = $region32
        $region31: #{_lambda_.1} parent=11 // pred_region
          _
        $region32: #{_lambda_.1} parent=11 // pred_fallthru
          _
        // Predicated region
        $region33: #{_lambda_.1} parent=11 // pred_check
          %p353 = pneg %p204
        $region34: #{_lambda_.1} parent=11 // pred_check_branch
          %355 = sbr.rel (%p353) target = $region36
        $region35: #{_lambda_.1} parent=11 // pred_region
          %s357 = ssub.s32 2048, 2048
          %358 = vsyncadd [#allocation9], %s357
          %s359 = sshll.u32 [#allocation10], 4
          %s360 = int_to_ptr.vmem [resolvable:$true] %s359
          %365 = dma.hbm_to_vmem [thread:$0]  %s7, 2048, %s360, [#allocation9], 128, 128, 8
        $region36: #{_lambda_.1} parent=11 // pred_fallthru
          _
        // Predicated region
        $region37: #{_lambda_.1} parent=11 // pred_check
          %p366 = pneg %p225
        $region38: #{_lambda_.1} parent=11 // pred_check_branch
          %368 = sbr.rel (%p366) target = $region40
        $region39: #{_lambda_.1} parent=11 // pred_region
          %s370 = ssub.s32 256, 256
          %371 = vsyncadd [#allocation12], %s370
          %s372 = sshll.u32 [#allocation11], 4
          %s373 = int_to_ptr.vmem [resolvable:$true] %s372
          %378 = dma.hbm_to_vmem [thread:$0]  %s8, 256, %s373, [#allocation12], 128, 128, 8
        $region40: #{_lambda_.1} parent=11 // pred_fallthru
          _
        // Predicated region
        $region41: #{_lambda_.1} parent=11 // pred_check
          %p379 = pneg %p246
        $region42: #{_lambda_.1} parent=11 // pred_check_branch
          %381 = sbr.rel (%p379) target = $region44
        $region43: #{_lambda_.1} parent=11 // pred_region
          _
        $region44: #{_lambda_.1} parent=11 // pred_fallthru
          _
        // Predicated region
        $region45: #{_lambda_.1} parent=11 // pred_check
          %p382 = pneg %p267
        $region46: #{_lambda_.1} parent=11 // pred_check_branch
          %384 = sbr.rel (%p382) target = $region48
        $region47: #{_lambda_.1} parent=11 // pred_region
          _
        $region48: #{_lambda_.1} parent=11 // pred_fallthru
          _
      $region12: #{_lambda_.1} parent=5 // pred_fallthru
        _
      %p385 = scmp.lt.s32.totalorder %s26, 2
      // Predicated region
      $region49: #{_lambda_.1} parent=5 // pred_check
        %p386 = pneg %p385
      $region50: #{_lambda_.1} parent=5 // pred_check_branch
        %388 = sbr.rel (%p386) target = $region52
      $region51: #{_lambda_.1} parent=5 // pred_region
        // Predicated region
        $region53: #{_lambda_.1} parent=51 // pred_check
          %p389 = pneg %p46
        $region54: #{_lambda_.1} parent=51 // pred_check_branch
          %391 = sbr.rel (%p389) target = $region56
        $region55: #{_lambda_.1} parent=51 // pred_region
          %p392 = scmp.lt.s32.totalorder %s26, 1
          %s393 = scalar_select %p392, %s26, 1
          %s394 = scalar_lea.vmem %s0, %s393
        $region56: #{_lambda_.1} parent=51 // pred_fallthru
          _
        // Predicated region
        $region57: #{_lambda_.1} parent=51 // pred_check
          %p395 = pneg %p72
        $region58: #{_lambda_.1} parent=51 // pred_check_branch
          %397 = sbr.rel (%p395) target = $region60
        $region59: #{_lambda_.1} parent=51 // pred_region
          %s398 = sand.u32 %s62, 1
          %s399 = scalar_lea.sflag [#allocation3], %s398
          %s400 = sand.u32 %s62, 1
          %s401 = smul.addr %s400, 8
          %s402 = scalar_lea.vmem [#allocation2], %s401
          %s404 = ssub.s32 128, 128
          %405 = vsyncadd %s399, %s404
          %s406 = smul.addr %s26, 128
          %s407 = scalar_lea.hbm %s1, %s406
          %s409 = sshll.u32 %s402, 4
          %s410 = int_to_ptr.vmem [resolvable:$true] %s409
          %412 = dma.hbm_to_vmem [thread:$0]  %s407, 128, %s410, %s399
        $region60: #{_lambda_.1} parent=51 // pred_fallthru
          _
      $region52: #{_lambda_.1} parent=5 // pred_fallthru
        _
      %p413 = scmp.le.s32.totalorder 1, %s26
      %p414 = scmp.lt.s32.totalorder %s26, 3
      %p415 = pnand %p413, %p414
      %p416 = pneg %p415
      // Predicated region
      $region61: #{_lambda_.1} parent=5 // pred_check
        _
      $region62: #{_lambda_.1} parent=5 // pred_check_branch
        %418 = sbr.rel (%p415) target = $region64
      $region63: #{_lambda_.1} parent=5 // pred_region
        %s419 = ssub.s32 %s26, 1
        %s420 = sand.u32 %s65, 1
        %s421 = scalar_lea.sflag [#allocation3], %s420
        %s422 = sand.u32 %s65, 1
        %s423 = smul.addr %s422, 8
        %s424 = scalar_lea.vmem [#allocation2], %s423
        // Predicated region
        $region65: #{_lambda_.1} parent=63 // pred_check
          %p425 = pneg %p78
        $region66: #{_lambda_.1} parent=63 // pred_check_branch
          %427 = sbr.rel (%p425) target = $region68
        $region67: #{_lambda_.1} parent=63 // pred_region
          %428 = dma.done %s421, 128
        $region68: #{_lambda_.1} parent=63 // pred_fallthru
          _
        // Predicated region
        $region69: #{_lambda_.1} parent=63 // pred_check
          %p429 = pneg %p99
        $region70: #{_lambda_.1} parent=63 // pred_check_branch
          %431 = sbr.rel (%p429) target = $region72
        $region71: #{_lambda_.1} parent=63 // pred_region
          %432 = dma.done [#allocation6], 1024
        $region72: #{_lambda_.1} parent=63 // pred_fallthru
          _
        // Predicated region
        $region73: #{_lambda_.1} parent=63 // pred_check
          %p433 = pneg %p141
        $region74: #{_lambda_.1} parent=63 // pred_check_branch
          %435 = sbr.rel (%p433) target = $region76
        $region75: #{_lambda_.1} parent=63 // pred_region
          %436 = dma.done [#allocation6], 1024
        $region76: #{_lambda_.1} parent=63 // pred_fallthru
          _
        // Predicated region
        $region77: #{_lambda_.1} parent=63 // pred_check
          %p437 = pneg %p162
        $region78: #{_lambda_.1} parent=63 // pred_check_branch
          %439 = sbr.rel (%p437) target = $region80
        $region79: #{_lambda_.1} parent=63 // pred_region
          %440 = dma.done [#allocation9], 1024
        $region80: #{_lambda_.1} parent=63 // pred_fallthru
          _
        // Predicated region
        $region81: #{_lambda_.1} parent=63 // pred_check
          %p441 = pneg %p204
        $region82: #{_lambda_.1} parent=63 // pred_check_branch
          %443 = sbr.rel (%p441) target = $region84
        $region83: #{_lambda_.1} parent=63 // pred_region
          %444 = dma.done [#allocation9], 2048
        $region84: #{_lambda_.1} parent=63 // pred_fallthru
          _
        // Predicated region
        $region85: #{_lambda_.1} parent=63 // pred_check
          %p445 = pneg %p225
        $region86: #{_lambda_.1} parent=63 // pred_check_branch
          %447 = sbr.rel (%p445) target = $region88
        $region87: #{_lambda_.1} parent=63 // pred_region
          %448 = dma.done [#allocation12], 256
        $region88: #{_lambda_.1} parent=63 // pred_fallthru
          _
        %p449 = scmp.lt.s32.totalorder %s31, 1
        %s450 = scalar_select %p449, %s31, 1
        %s451 = scalar_lea.vmem %s0, %s450
        %p452 = pneg %p52
        %p453 = pneg %p49
        %s454 = sand.u32 %s65, 1
        %s455 = scalar_lea.sflag [#allocation3], %s454
        %s456 = sand.u32 %s65, 1
        %s457 = smul.addr %s456, 8
        %s458 = scalar_lea.vmem [#allocation2], %s457
        %p459 = pneg %p78
        %p460 = pneg %p75
        %p461 = pneg %p99
        %p462 = pneg %p96
        %p463 = pneg %p120
        %p464 = pneg %p117
        %p465 = pneg %p141
        %p466 = pneg %p138
        %p467 = pneg %p162
        %p468 = pneg %p159
        %p469 = pneg %p183
        %p470 = pneg %p180
        %p471 = pneg %p204
        %p472 = pneg %p201
        %p473 = pneg %p225
        %p474 = pneg %p222
        %p475 = pneg %p246
        %p476 = pneg %p243
        %p477 = pneg %p267
        %p478 = pneg %p264
        %p479 = pneg %p293
        %p480 = pneg %p290
        %s481 = sand.u32 %s280, 1
        %s482 = scalar_lea.sflag [#allocation4], %s481
        %s483 = sand.u32 %s280, 1
        %s484 = scalar_lea.vmem [#allocation13], %s483
        %p485 = scmp.lt.s32.totalorder %s31, 1
        %s486 = scalar_select %p485, %s31, 1
        %s487 = scalar_lea.vmem %s0, %s486
        %v488 = vld [vmem:[%s424] sm:$0xff]
        %v489 = vld [vmem:[%s487] sm:$0x1]
        %v490 = vsub.f32 1.0, %v489
        %v491 = vmul.f32 %v490, -10000.0
        %v492 = vld [vmem:[#allocation11] sm:$0x3f]
        %v493 = vld [vmem:[#allocation5] sm:$0xff]
        %v494 = vld [vmem:[#allocation5 + $0x8] sm:$0xff]
        %v495 = vld [vmem:[#allocation5 + $0x10] sm:$0xff]
        %v496 = vld [vmem:[#allocation5 + $0x18] sm:$0xff]
        %v497 = vld [vmem:[%s3] sm:$0x1]
        %v499 = vlaneseq
        %v500 = vshrl.u32 %v499, 7
        %v501 = vsub.s32 0, %v500
        %v502 = vrot.slane %v497, %v501
        %vm504 = vcmask 261120
        %v506 = vsel %vm504, %v488, 0
        %508 = vmatprep.subr.mxu0 0.0
        %509 = vmatpush1.msra.mxu0 %v493
        %510 = vmatprep.subr.mxu0 0.0
        %511 = vmatpush1.msra.mxu0 %v494
        %512 = vmatprep.subr.mxu0 0.0
        %513 = vmatpush1.msra.mxu0 %v495
        %514 = vmatprep.subr.mxu0 0.0
        %515 = vmatpush1.msra.mxu0 %v496
        %516 = vmatprep.subr.mxu0 0.0
        %517 = vmatpush1.msra.mxu0 0.0
        %518 = vmatprep.subr.mxu0 0.0
        %519 = vmatpush1.msra.mxu0 0.0
        %520 = vmatprep.subr.mxu0 0.0
        %521 = vmatpush1.msra.mxu0 0.0
        %522 = vmatprep.subr.mxu0 0.0
        %523 = vmatpush1.msra.mxu0 0.0
        %524 = vmatprep.subr.mxu0 0.0
        %525 = vmatpush1.msra.mxu0 0.0
        %526 = vmatprep.subr.mxu0 0.0
        %527 = vmatpush1.msra.mxu0 0.0
        %528 = vmatprep.subr.mxu0 0.0
        %529 = vmatpush1.msra.mxu0 0.0
        %530 = vmatprep.subr.mxu0 0.0
        %531 = vmatpush1.msra.mxu0 0.0
        %532 = vmatprep.subr.mxu0 0.0
        %533 = vmatpush1.msra.mxu0 0.0
        %534 = vmatprep.subr.mxu0 0.0
        %535 = vmatpush1.msra.mxu0 0.0
        %536 = vmatprep.subr.mxu0 0.0
        %537 = vmatpush1.msra.mxu0 0.0
        %538 = vmatprep.subr.mxu0 0.0
        %539 = vmatpush1.msra.mxu0 0.0
        %540 = vmatprep.subr.mxu0 0.0
        %541 = vmatpush1.msra.mxu0 0.0
        %542 = vmatprep.subr.mxu0 0.0
        %543 = vmatpush1.msra.mxu0 0.0
        %544 = vmatprep.subr.mxu0 0.0
        %545 = vmatpush1.msra.mxu0 0.0
        %546 = vmatprep.subr.mxu0 0.0
        %547 = vmatpush1.msra.mxu0 0.0
        %548 = vmatprep.subr.mxu0 0.0
        %549 = vmatpush1.msra.mxu0 0.0
        %550 = vmatprep.subr.mxu0 0.0
        %551 = vmatpush1.msra.mxu0 0.0
        %552 = vmatprep.subr.mxu0 0.0
        %553 = vmatpush1.msra.mxu0 0.0
        %554 = vmatprep.subr.mxu0 0.0
        %555 = vmatpush1.msra.mxu0 0.0
        %556 = vmatprep.subr.mxu0 0.0
        %557 = vmatpush1.msra.mxu0 0.0
        %558 = vmatprep.subr.mxu0 0.0
        %559 = vmatpush1.msra.mxu0 0.0
        %560 = vmatprep.subr.mxu0 0.0
        %561 = vmatpush1.msra.mxu0 0.0
        %562 = vmatprep.subr.mxu0 0.0
        %563 = vmatpush1.msra.mxu0 0.0
        %564 = vmatprep.subr.mxu0 0.0
        %565 = vmatpush1.msra.mxu0 0.0
        %566 = vmatprep.subr.mxu0 0.0
        %567 = vmatpush1.msra.mxu0 0.0
        %568 = vmatprep.subr.mxu0 0.0
        %569 = vmatpush1.msra.mxu0 0.0
        %570 = vmatprep.subr.mxu0 0.0
        %571 = vmatpush1.msra.mxu0 0.0
        %572 = vmatprep.mubr.f32.mxu0 0.0
        %573 = vmatmul.mubr.f32.gmra.mrb[0].mxu0 %v506
        %v574 = vpop.f32.mrb[0].mxu0
        %v575 = vadd.f32 %v502, %v574
        %v576 = vpop.f32.mrb[0].mxu0
        %577 = vdwg.mxu0
        %579 = vrot.lane.b32.xlu0 %v575, 120
        %v580 = vpop.permute.xlu0 %579
        %581 = vrot.lane.b32.xlu0 %v575, 112
        %v582 = vpop.permute.xlu0 %581
        %583 = vrot.lane.b32.xlu0 %v575, 104
        %v584 = vpop.permute.xlu0 %583
        %v586 = vlaneseq
        %v587 = vshrl.u32 %v586, 7
        %v588 = vsub.s32 0, %v587
        %v589 = vrot.slane %v491, %v588
        %591 = vrot.lane.b32.xlu0 %v575, 96
        %v592 = vpop.permute.xlu0 %591
        %vm593 = vcmask 64512
        %v594 = vsel %vm593, %v575, 0
        %v596 = vsel %vm593, %v592, 0
        %598 = vmatprep.subr.mxu0 0.0
        %599 = vmatpush1.xpose.msra.mxu0 %v596
        %600 = vmatprep.subr.mxu0 0.0
        %601 = vmatpush1.xpose.msra.mxu0 0.0
        %602 = vmatprep.subr.mxu0 0.0
        %603 = vmatpush1.xpose.msra.mxu0 0.0
        %604 = vmatprep.subr.mxu0 0.0
        %605 = vmatpush1.xpose.msra.mxu0 0.0
        %606 = vmatprep.subr.mxu0 0.0
        %607 = vmatpush1.xpose.msra.mxu0 0.0
        %608 = vmatprep.subr.mxu0 0.0
        %609 = vmatpush1.xpose.msra.mxu0 0.0
        %610 = vmatprep.subr.mxu0 0.0
        %611 = vmatpush1.xpose.msra.mxu0 0.0
        %612 = vmatprep.subr.mxu0 0.0
        %613 = vmatpush1.xpose.msra.mxu0 0.0
        %614 = vmatprep.subr.mxu0 0.0
        %615 = vmatpush1.xpose.msra.mxu0 0.0
        %616 = vmatprep.subr.mxu0 0.0
        %617 = vmatpush1.xpose.msra.mxu0 0.0
        %618 = vmatprep.subr.mxu0 0.0
        %619 = vmatpush1.xpose.msra.mxu0 0.0
        %620 = vmatprep.subr.mxu0 0.0
        %621 = vmatpush1.xpose.msra.mxu0 0.0
        %622 = vmatprep.subr.mxu0 0.0
        %623 = vmatpush1.xpose.msra.mxu0 0.0
        %624 = vmatprep.subr.mxu0 0.0
        %625 = vmatpush1.xpose.msra.mxu0 0.0
        %626 = vmatprep.subr.mxu0 0.0
        %627 = vmatpush1.xpose.msra.mxu0 0.0
        %628 = vmatprep.subr.mxu0 0.0
        %629 = vmatpush1.xpose.msra.mxu0 0.0
        %630 = vmatprep.subr.mxu0 0.0
        %631 = vmatpush1.xpose.msra.mxu0 0.0
        %632 = vmatprep.subr.mxu0 0.0
        %633 = vmatpush1.xpose.msra.mxu0 0.0
        %634 = vmatprep.subr.mxu0 0.0
        %635 = vmatpush1.xpose.msra.mxu0 0.0
        %636 = vmatprep.subr.mxu0 0.0
        %637 = vmatpush1.xpose.msra.mxu0 0.0
        %638 = vmatprep.subr.mxu0 0.0
        %639 = vmatpush1.xpose.msra.mxu0 0.0
        %640 = vmatprep.subr.mxu0 0.0
        %641 = vmatpush1.xpose.msra.mxu0 0.0
        %642 = vmatprep.subr.mxu0 0.0
        %643 = vmatpush1.xpose.msra.mxu0 0.0
        %644 = vmatprep.subr.mxu0 0.0
        %645 = vmatpush1.xpose.msra.mxu0 0.0
        %646 = vmatprep.subr.mxu0 0.0
        %647 = vmatpush1.xpose.msra.mxu0 0.0
        %648 = vmatprep.subr.mxu0 0.0
        %649 = vmatpush1.xpose.msra.mxu0 0.0
        %650 = vmatprep.subr.mxu0 0.0
        %651 = vmatpush1.xpose.msra.mxu0 0.0
        %652 = vmatprep.subr.mxu0 0.0
        %653 = vmatpush1.xpose.msra.mxu0 0.0
        %654 = vmatprep.subr.mxu0 0.0
        %655 = vmatpush1.xpose.msra.mxu0 0.0
        %656 = vmatprep.subr.mxu0 0.0
        %657 = vmatpush1.xpose.msra.mxu0 0.0
        %658 = vmatprep.subr.mxu0 0.0
        %659 = vmatpush1.xpose.msra.mxu0 0.0
        %660 = vmatprep.subr.mxu0 0.0
        %661 = vmatpush1.xpose.msra.mxu0 0.0
        %662 = vmatprep.mubr.f32.mxu0 0.0
        %663 = vmatmul.mubr.f32.gmra.mrb[0].mxu0 %v594
        %v664 = vpop.f32.mrb[0].mxu0
        %v665 = vadd.f32 %v589, %v664
        %v666 = vpop.f32.mrb[0].mxu0
        %667 = vdwg.mxu0
        %668 = vrot.lane.b32.xlu0 %v580, 96
        %v669 = vpop.permute.xlu0 %668
        %v670 = vsel %vm593, %v580, 0
        %v672 = vsel %vm593, %v669, 0
        %674 = vmatprep.subr.mxu0 0.0
        %675 = vmatpush1.xpose.msra.mxu0 %v672
        %676 = vmatprep.subr.mxu0 0.0
        %677 = vmatpush1.xpose.msra.mxu0 0.0
        %678 = vmatprep.subr.mxu0 0.0
        %679 = vmatpush1.xpose.msra.mxu0 0.0
        %680 = vmatprep.subr.mxu0 0.0
        %681 = vmatpush1.xpose.msra.mxu0 0.0
        %682 = vmatprep.subr.mxu0 0.0
        %683 = vmatpush1.xpose.msra.mxu0 0.0
        %684 = vmatprep.subr.mxu0 0.0
        %685 = vmatpush1.xpose.msra.mxu0 0.0
        %686 = vmatprep.subr.mxu0 0.0
        %687 = vmatpush1.xpose.msra.mxu0 0.0
        %688 = vmatprep.subr.mxu0 0.0
        %689 = vmatpush1.xpose.msra.mxu0 0.0
        %690 = vmatprep.subr.mxu0 0.0
        %691 = vmatpush1.xpose.msra.mxu0 0.0
        %692 = vmatprep.subr.mxu0 0.0
        %693 = vmatpush1.xpose.msra.mxu0 0.0
        %694 = vmatprep.subr.mxu0 0.0
        %695 = vmatpush1.xpose.msra.mxu0 0.0
        %696 = vmatprep.subr.mxu0 0.0
        %697 = vmatpush1.xpose.msra.mxu0 0.0
        %698 = vmatprep.subr.mxu0 0.0
        %699 = vmatpush1.xpose.msra.mxu0 0.0
        %700 = vmatprep.subr.mxu0 0.0
        %701 = vmatpush1.xpose.msra.mxu0 0.0
        %702 = vmatprep.subr.mxu0 0.0
        %703 = vmatpush1.xpose.msra.mxu0 0.0
        %704 = vmatprep.subr.mxu0 0.0
        %705 = vmatpush1.xpose.msra.mxu0 0.0
        %706 = vmatprep.subr.mxu0 0.0
        %707 = vmatpush1.xpose.msra.mxu0 0.0
        %708 = vmatprep.subr.mxu0 0.0
        %709 = vmatpush1.xpose.msra.mxu0 0.0
        %710 = vmatprep.subr.mxu0 0.0
        %711 = vmatpush1.xpose.msra.mxu0 0.0
        %712 = vmatprep.subr.mxu0 0.0
        %713 = vmatpush1.xpose.msra.mxu0 0.0
        %714 = vmatprep.subr.mxu0 0.0
        %715 = vmatpush1.xpose.msra.mxu0 0.0
        %716 = vmatprep.subr.mxu0 0.0
        %717 = vmatpush1.xpose.msra.mxu0 0.0
        %718 = vmatprep.subr.mxu0 0.0
        %719 = vmatpush1.xpose.msra.mxu0 0.0
        %720 = vmatprep.subr.mxu0 0.0
        %721 = vmatpush1.xpose.msra.mxu0 0.0
        %722 = vmatprep.subr.mxu0 0.0
        %723 = vmatpush1.xpose.msra.mxu0 0.0
        %724 = vmatprep.subr.mxu0 0.0
        %725 = vmatpush1.xpose.msra.mxu0 0.0
        %726 = vmatprep.subr.mxu0 0.0
        %727 = vmatpush1.xpose.msra.mxu0 0.0
        %728 = vmatprep.subr.mxu0 0.0
        %729 = vmatpush1.xpose.msra.mxu0 0.0
        %730 = vmatprep.subr.mxu0 0.0
        %731 = vmatpush1.xpose.msra.mxu0 0.0
        %732 = vmatprep.subr.mxu0 0.0
        %733 = vmatpush1.xpose.msra.mxu0 0.0
        %734 = vmatprep.subr.mxu0 0.0
        %735 = vmatpush1.xpose.msra.mxu0 0.0
        %736 = vmatprep.subr.mxu0 0.0
        %737 = vmatpush1.xpose.msra.mxu0 0.0
        %738 = vmatprep.mubr.f32.mxu0 0.0
        %739 = vmatmul.mubr.f32.gmra.mrb[0].mxu0 %v670
        %v740 = vpop.f32.mrb[0].mxu0
        %v741 = vadd.f32 %v589, %v740
        %v742 = vpop.f32.mrb[0].mxu0
        %743 = vdwg.mxu0
        %744 = vrot.lane.b32.xlu0 %v582, 96
        %v745 = vpop.permute.xlu0 %744
        %v746 = vsel %vm593, %v582, 0
        %v748 = vsel %vm593, %v745, 0
        %750 = vmatprep.subr.mxu0 0.0
        %751 = vmatpush1.xpose.msra.mxu0 %v748
        %752 = vmatprep.subr.mxu0 0.0
        %753 = vmatpush1.xpose.msra.mxu0 0.0
        %754 = vmatprep.subr.mxu0 0.0
        %755 = vmatpush1.xpose.msra.mxu0 0.0
        %756 = vmatprep.subr.mxu0 0.0
        %757 = vmatpush1.xpose.msra.mxu0 0.0
        %758 = vmatprep.subr.mxu0 0.0
        %759 = vmatpush1.xpose.msra.mxu0 0.0
        %760 = vmatprep.subr.mxu0 0.0
        %761 = vmatpush1.xpose.msra.mxu0 0.0
        %762 = vmatprep.subr.mxu0 0.0
        %763 = vmatpush1.xpose.msra.mxu0 0.0
        %764 = vmatprep.subr.mxu0 0.0
        %765 = vmatpush1.xpose.msra.mxu0 0.0
        %766 = vmatprep.subr.mxu0 0.0
        %767 = vmatpush1.xpose.msra.mxu0 0.0
        %768 = vmatprep.subr.mxu0 0.0
        %769 = vmatpush1.xpose.msra.mxu0 0.0
        %770 = vmatprep.subr.mxu0 0.0
        %771 = vmatpush1.xpose.msra.mxu0 0.0
        %772 = vmatprep.subr.mxu0 0.0
        %773 = vmatpush1.xpose.msra.mxu0 0.0
        %774 = vmatprep.subr.mxu0 0.0
        %775 = vmatpush1.xpose.msra.mxu0 0.0
        %776 = vmatprep.subr.mxu0 0.0
        %777 = vmatpush1.xpose.msra.mxu0 0.0
        %778 = vmatprep.subr.mxu0 0.0
        %779 = vmatpush1.xpose.msra.mxu0 0.0
        %780 = vmatprep.subr.mxu0 0.0
        %781 = vmatpush1.xpose.msra.mxu0 0.0
        %782 = vmatprep.subr.mxu0 0.0
        %783 = vmatpush1.xpose.msra.mxu0 0.0
        %784 = vmatprep.subr.mxu0 0.0
        %785 = vmatpush1.xpose.msra.mxu0 0.0
        %786 = vmatprep.subr.mxu0 0.0
        %787 = vmatpush1.xpose.msra.mxu0 0.0
        %788 = vmatprep.subr.mxu0 0.0
        %789 = vmatpush1.xpose.msra.mxu0 0.0
        %790 = vmatprep.subr.mxu0 0.0
        %791 = vmatpush1.xpose.msra.mxu0 0.0
        %792 = vmatprep.subr.mxu0 0.0
        %793 = vmatpush1.xpose.msra.mxu0 0.0
        %794 = vmatprep.subr.mxu0 0.0
        %795 = vmatpush1.xpose.msra.mxu0 0.0
        %796 = vmatprep.subr.mxu0 0.0
        %797 = vmatpush1.xpose.msra.mxu0 0.0
        %798 = vmatprep.subr.mxu0 0.0
        %799 = vmatpush1.xpose.msra.mxu0 0.0
        %800 = vmatprep.subr.mxu0 0.0
        %801 = vmatpush1.xpose.msra.mxu0 0.0
        %802 = vmatprep.subr.mxu0 0.0
        %803 = vmatpush1.xpose.msra.mxu0 0.0
        %804 = vmatprep.subr.mxu0 0.0
        %805 = vmatpush1.xpose.msra.mxu0 0.0
        %806 = vmatprep.subr.mxu0 0.0
        %807 = vmatpush1.xpose.msra.mxu0 0.0
        %808 = vmatprep.subr.mxu0 0.0
        %809 = vmatpush1.xpose.msra.mxu0 0.0
        %810 = vmatprep.subr.mxu0 0.0
        %811 = vmatpush1.xpose.msra.mxu0 0.0
        %812 = vmatprep.subr.mxu0 0.0
        %813 = vmatpush1.xpose.msra.mxu0 0.0
        %814 = vmatprep.mubr.f32.mxu0 0.0
        %815 = vmatmul.mubr.f32.gmra.mrb[0].mxu0 %v746
        %v816 = vpop.f32.mrb[0].mxu0
        %v817 = vadd.f32 %v589, %v816
        %v818 = vpop.f32.mrb[0].mxu0
        %819 = vdwg.mxu0
        %820 = vrot.lane.b32.xlu0 %v584, 96
        %v821 = vpop.permute.xlu0 %820
        %v822 = vsel %vm593, %v584, 0
        %v824 = vsel %vm593, %v821, 0
        %826 = vmatprep.subr.mxu0 0.0
        %827 = vmatpush1.xpose.msra.mxu0 %v824
        %828 = vmatprep.subr.mxu0 0.0
        %829 = vmatpush1.xpose.msra.mxu0 0.0
        %830 = vmatprep.subr.mxu0 0.0
        %831 = vmatpush1.xpose.msra.mxu0 0.0
        %832 = vmatprep.subr.mxu0 0.0
        %833 = vmatpush1.xpose.msra.mxu0 0.0
        %834 = vmatprep.subr.mxu0 0.0
        %835 = vmatpush1.xpose.msra.mxu0 0.0
        %836 = vmatprep.subr.mxu0 0.0
        %837 = vmatpush1.xpose.msra.mxu0 0.0
        %838 = vmatprep.subr.mxu0 0.0
        %839 = vmatpush1.xpose.msra.mxu0 0.0
        %840 = vmatprep.subr.mxu0 0.0
        %841 = vmatpush1.xpose.msra.mxu0 0.0
        %842 = vmatprep.subr.mxu0 0.0
        %843 = vmatpush1.xpose.msra.mxu0 0.0
        %844 = vmatprep.subr.mxu0 0.0
        %845 = vmatpush1.xpose.msra.mxu0 0.0
        %846 = vmatprep.subr.mxu0 0.0
        %847 = vmatpush1.xpose.msra.mxu0 0.0
        %848 = vmatprep.subr.mxu0 0.0
        %849 = vmatpush1.xpose.msra.mxu0 0.0
        %850 = vmatprep.subr.mxu0 0.0
        %851 = vmatpush1.xpose.msra.mxu0 0.0
        %852 = vmatprep.subr.mxu0 0.0
        %853 = vmatpush1.xpose.msra.mxu0 0.0
        %854 = vmatprep.subr.mxu0 0.0
        %855 = vmatpush1.xpose.msra.mxu0 0.0
        %856 = vmatprep.subr.mxu0 0.0
        %857 = vmatpush1.xpose.msra.mxu0 0.0
        %858 = vmatprep.subr.mxu0 0.0
        %859 = vmatpush1.xpose.msra.mxu0 0.0
        %860 = vmatprep.subr.mxu0 0.0
        %861 = vmatpush1.xpose.msra.mxu0 0.0
        %862 = vmatprep.subr.mxu0 0.0
        %863 = vmatpush1.xpose.msra.mxu0 0.0
        %864 = vmatprep.subr.mxu0 0.0
        %865 = vmatpush1.xpose.msra.mxu0 0.0
        %866 = vmatprep.subr.mxu0 0.0
        %867 = vmatpush1.xpose.msra.mxu0 0.0
        %868 = vmatprep.subr.mxu0 0.0
        %869 = vmatpush1.xpose.msra.mxu0 0.0
        %870 = vmatprep.subr.mxu0 0.0
        %871 = vmatpush1.xpose.msra.mxu0 0.0
        %872 = vmatprep.subr.mxu0 0.0
        %873 = vmatpush1.xpose.msra.mxu0 0.0
        %874 = vmatprep.subr.mxu0 0.0
        %875 = vmatpush1.xpose.msra.mxu0 0.0
        %876 = vmatprep.subr.mxu0 0.0
        %877 = vmatpush1.xpose.msra.mxu0 0.0
        %878 = vmatprep.subr.mxu0 0.0
        %879 = vmatpush1.xpose.msra.mxu0 0.0
        %880 = vmatprep.subr.mxu0 0.0
        %881 = vmatpush1.xpose.msra.mxu0 0.0
        %882 = vmatprep.subr.mxu0 0.0
        %883 = vmatpush1.xpose.msra.mxu0 0.0
        %884 = vmatprep.subr.mxu0 0.0
        %885 = vmatpush1.xpose.msra.mxu0 0.0
        %886 = vmatprep.subr.mxu0 0.0
        %887 = vmatpush1.xpose.msra.mxu0 0.0
        %888 = vmatprep.subr.mxu0 0.0
        %889 = vmatpush1.xpose.msra.mxu0 0.0
        %890 = vmatprep.mubr.f32.mxu0 0.0
        %891 = vmatmul.mubr.f32.gmra.mrb[0].mxu0 %v822
        %v892 = vpop.f32.mrb[0].mxu0
        %v893 = vadd.f32 %v589, %v892
        %v894 = vpop.f32.mrb[0].mxu0
        %895 = vdwg.mxu0
        %v896 = vsel %vm593, %v665, -inf
        %897 = vmax.xlane.f32.xlu0 %v896
        %v898 = vpop.xlane.xlu0 %897
        %v899 = vsel %vm593, %v741, -inf
        %900 = vmax.xlane.f32.xlu0 %v899
        %v901 = vpop.xlane.xlu0 %900
        %v902 = vsel %vm593, %v817, -inf
        %903 = vmax.xlane.f32.xlu0 %v902
        %v904 = vpop.xlane.xlu0 %903
        %v905 = vsel %vm593, %v893, -inf
        %906 = vmax.xlane.f32.xlu0 %v905
        %v907 = vpop.xlane.xlu0 %906
        %v908 = vsub.f32 %v665, %v898
        %v909 = vsub.f32 %v741, %v901
        %v910 = vsub.f32 %v817, %v904
        %v911 = vsub.f32 %v893, %v907
        %v912 = vmul.f32 %v908, 1.442695
        %v913 = vpow.pop %v912
        %v914 = vmul.f32 %v909, 1.442695
        %v915 = vpow.pop %v914
        %v916 = vmul.f32 %v910, 1.442695
        %v917 = vpow.pop %v916
        %v918 = vmul.f32 %v911, 1.442695
        %v919 = vpow.pop %v918
        %v920 = vsel %vm593, %v913, 0.0
        %921 = vadd.xlane.f32.xlu0 %v920
        %v922 = vpop.xlane.xlu0 %921
        %v923 = vsel %vm593, %v915, 0.0
        %924 = vadd.xlane.f32.xlu0 %v923
        %v925 = vpop.xlane.xlu0 %924
        %v926 = vsel %vm593, %v917, 0.0
        %927 = vadd.xlane.f32.xlu0 %v926
        %v928 = vpop.xlane.xlu0 %927
        %v929 = vsel %vm593, %v919, 0.0
        %930 = vadd.xlane.f32.xlu0 %v929
        %v931 = vpop.xlane.xlu0 %930
        %v932 = vrcp.pop %v922
        %v933 = vrcp.pop %v925
        %v934 = vrcp.pop %v928
        %v935 = vrcp.pop %v931
        %v936 = vmul.f32 %v913, %v932
        %v937 = vmul.f32 %v915, %v933
        %v938 = vmul.f32 %v917, %v934
        %v939 = vmul.f32 %v919, %v935
        %940 = vrot.lane.b32.xlu0 %v575, 64
        %v941 = vpop.permute.xlu0 %940
        %v944 = vsel %vm593, %v936, 0
        %946 = vmatprep.subr.mxu0 0.0
        %947 = vmatpush1.msra.mxu0 %v941
        %948 = vmatprep.subr.mxu0 0.0
        %949 = vmatpush1.msra.mxu0 0.0
        %950 = vmatprep.subr.mxu0 0.0
        %951 = vmatpush1.msra.mxu0 0.0
        %952 = vmatprep.subr.mxu0 0.0
        %953 = vmatpush1.msra.mxu0 0.0
        %954 = vmatprep.subr.mxu0 0.0
        %955 = vmatpush1.msra.mxu0 0.0
        %956 = vmatprep.subr.mxu0 0.0
        %957 = vmatpush1.msra.mxu0 0.0
        %958 = vmatprep.subr.mxu0 0.0
        %959 = vmatpush1.msra.mxu0 0.0
        %960 = vmatprep.subr.mxu0 0.0
        %961 = vmatpush1.msra.mxu0 0.0
        %962 = vmatprep.subr.mxu0 0.0
        %963 = vmatpush1.msra.mxu0 0.0
        %964 = vmatprep.subr.mxu0 0.0
        %965 = vmatpush1.msra.mxu0 0.0
        %966 = vmatprep.subr.mxu0 0.0
        %967 = vmatpush1.msra.mxu0 0.0
        %968 = vmatprep.subr.mxu0 0.0
        %969 = vmatpush1.msra.mxu0 0.0
        %970 = vmatprep.subr.mxu0 0.0
        %971 = vmatpush1.msra.mxu0 0.0
        %972 = vmatprep.subr.mxu0 0.0
        %973 = vmatpush1.msra.mxu0 0.0
        %974 = vmatprep.subr.mxu0 0.0
        %975 = vmatpush1.msra.mxu0 0.0
        %976 = vmatprep.subr.mxu0 0.0
        %977 = vmatpush1.msra.mxu0 0.0
        %978 = vmatprep.subr.mxu0 0.0
        %979 = vmatpush1.msra.mxu0 0.0
        %980 = vmatprep.subr.mxu0 0.0
        %981 = vmatpush1.msra.mxu0 0.0
        %982 = vmatprep.subr.mxu0 0.0
        %983 = vmatpush1.msra.mxu0 0.0
        %984 = vmatprep.subr.mxu0 0.0
        %985 = vmatpush1.msra.mxu0 0.0
        %986 = vmatprep.subr.mxu0 0.0
        %987 = vmatpush1.msra.mxu0 0.0
        %988 = vmatprep.subr.mxu0 0.0
        %989 = vmatpush1.msra.mxu0 0.0
        %990 = vmatprep.subr.mxu0 0.0
        %991 = vmatpush1.msra.mxu0 0.0
        %992 = vmatprep.subr.mxu0 0.0
        %993 = vmatpush1.msra.mxu0 0.0
        %994 = vmatprep.subr.mxu0 0.0
        %995 = vmatpush1.msra.mxu0 0.0
        %996 = vmatprep.subr.mxu0 0.0
        %997 = vmatpush1.msra.mxu0 0.0
        %998 = vmatprep.subr.mxu0 0.0
        %999 = vmatpush1.msra.mxu0 0.0
        %1000 = vmatprep.subr.mxu0 0.0
        %1001 = vmatpush1.msra.mxu0 0.0
        %1002 = vmatprep.subr.mxu0 0.0
        %1003 = vmatpush1.msra.mxu0 0.0
        %1004 = vmatprep.subr.mxu0 0.0
        %1005 = vmatpush1.msra.mxu0 0.0
        %1006 = vmatprep.subr.mxu0 0.0
        %1007 = vmatpush1.msra.mxu0 0.0
        %1008 = vmatprep.subr.mxu0 0.0
        %1009 = vmatpush1.msra.mxu0 0.0
        %1010 = vmatprep.mubr.f32.mxu0 0.0
        %1011 = vmatmul.mubr.f32.gmra.mrb[0].mxu0 %v944
        %v1012 = vpop.f32.mrb[0].mxu0
        %v1013 = vadd.f32 0.0, %v1012
        %v1014 = vpop.f32.mrb[0].mxu0
        %1015 = vdwg.mxu0
        %1016 = vrot.lane.b32.xlu0 %v580, 64
        %v1017 = vpop.permute.xlu0 %1016
        %v1020 = vsel %vm593, %v937, 0
        %1022 = vmatprep.subr.mxu0 0.0
        %1023 = vmatpush1.msra.mxu0 %v1017
        %1024 = vmatprep.subr.mxu0 0.0
        %1025 = vmatpush1.msra.mxu0 0.0
        %1026 = vmatprep.subr.mxu0 0.0
        %1027 = vmatpush1.msra.mxu0 0.0
        %1028 = vmatprep.subr.mxu0 0.0
        %1029 = vmatpush1.msra.mxu0 0.0
        %1030 = vmatprep.subr.mxu0 0.0
        %1031 = vmatpush1.msra.mxu0 0.0
        %1032 = vmatprep.subr.mxu0 0.0
        %1033 = vmatpush1.msra.mxu0 0.0
        %1034 = vmatprep.subr.mxu0 0.0
        %1035 = vmatpush1.msra.mxu0 0.0
        %1036 = vmatprep.subr.mxu0 0.0
        %1037 = vmatpush1.msra.mxu0 0.0
        %1038 = vmatprep.subr.mxu0 0.0
        %1039 = vmatpush1.msra.mxu0 0.0
        %1040 = vmatprep.subr.mxu0 0.0
        %1041 = vmatpush1.msra.mxu0 0.0
        %1042 = vmatprep.subr.mxu0 0.0
        %1043 = vmatpush1.msra.mxu0 0.0
        %1044 = vmatprep.subr.mxu0 0.0
        %1045 = vmatpush1.msra.mxu0 0.0
        %1046 = vmatprep.subr.mxu0 0.0
        %1047 = vmatpush1.msra.mxu0 0.0
        %1048 = vmatprep.subr.mxu0 0.0
        %1049 = vmatpush1.msra.mxu0 0.0
        %1050 = vmatprep.subr.mxu0 0.0
        %1051 = vmatpush1.msra.mxu0 0.0
        %1052 = vmatprep.subr.mxu0 0.0
        %1053 = vmatpush1.msra.mxu0 0.0
        %1054 = vmatprep.subr.mxu0 0.0
        %1055 = vmatpush1.msra.mxu0 0.0
        %1056 = vmatprep.subr.mxu0 0.0
        %1057 = vmatpush1.msra.mxu0 0.0
        %1058 = vmatprep.subr.mxu0 0.0
        %1059 = vmatpush1.msra.mxu0 0.0
        %1060 = vmatprep.subr.mxu0 0.0
        %1061 = vmatpush1.msra.mxu0 0.0
        %1062 = vmatprep.subr.mxu0 0.0
        %1063 = vmatpush1.msra.mxu0 0.0
        %1064 = vmatprep.subr.mxu0 0.0
        %1065 = vmatpush1.msra.mxu0 0.0
        %1066 = vmatprep.subr.mxu0 0.0
        %1067 = vmatpush1.msra.mxu0 0.0
        %1068 = vmatprep.subr.mxu0 0.0
        %1069 = vmatpush1.msra.mxu0 0.0
        %1070 = vmatprep.subr.mxu0 0.0
        %1071 = vmatpush1.msra.mxu0 0.0
        %1072 = vmatprep.subr.mxu0 0.0
        %1073 = vmatpush1.msra.mxu0 0.0
        %1074 = vmatprep.subr.mxu0 0.0
        %1075 = vmatpush1.msra.mxu0 0.0
        %1076 = vmatprep.subr.mxu0 0.0
        %1077 = vmatpush1.msra.mxu0 0.0
        %1078 = vmatprep.subr.mxu0 0.0
        %1079 = vmatpush1.msra.mxu0 0.0
        %1080 = vmatprep.subr.mxu0 0.0
        %1081 = vmatpush1.msra.mxu0 0.0
        %1082 = vmatprep.subr.mxu0 0.0
        %1083 = vmatpush1.msra.mxu0 0.0
        %1084 = vmatprep.subr.mxu0 0.0
        %1085 = vmatpush1.msra.mxu0 0.0
        %1086 = vmatprep.mubr.f32.mxu0 0.0
        %1087 = vmatmul.mubr.f32.gmra.mrb[0].mxu0 %v1020
        %v1088 = vpop.f32.mrb[0].mxu0
        %v1089 = vadd.f32 0.0, %v1088
        %v1090 = vpop.f32.mrb[0].mxu0
        %1091 = vdwg.mxu0
        %1092 = vrot.lane.b32.xlu0 %v582, 64
        %v1093 = vpop.permute.xlu0 %1092
        %v1096 = vsel %vm593, %v938, 0
        %1098 = vmatprep.subr.mxu0 0.0
        %1099 = vmatpush1.msra.mxu0 %v1093
        %1100 = vmatprep.subr.mxu0 0.0
        %1101 = vmatpush1.msra.mxu0 0.0
        %1102 = vmatprep.subr.mxu0 0.0
        %1103 = vmatpush1.msra.mxu0 0.0
        %1104 = vmatprep.subr.mxu0 0.0
        %1105 = vmatpush1.msra.mxu0 0.0
        %1106 = vmatprep.subr.mxu0 0.0
        %1107 = vmatpush1.msra.mxu0 0.0
        %1108 = vmatprep.subr.mxu0 0.0
        %1109 = vmatpush1.msra.mxu0 0.0
        %1110 = vmatprep.subr.mxu0 0.0
        %1111 = vmatpush1.msra.mxu0 0.0
        %1112 = vmatprep.subr.mxu0 0.0
        %1113 = vmatpush1.msra.mxu0 0.0
        %1114 = vmatprep.subr.mxu0 0.0
        %1115 = vmatpush1.msra.mxu0 0.0
        %1116 = vmatprep.subr.mxu0 0.0
        %1117 = vmatpush1.msra.mxu0 0.0
        %1118 = vmatprep.subr.mxu0 0.0
        %1119 = vmatpush1.msra.mxu0 0.0
        %1120 = vmatprep.subr.mxu0 0.0
        %1121 = vmatpush1.msra.mxu0 0.0
        %1122 = vmatprep.subr.mxu0 0.0
        %1123 = vmatpush1.msra.mxu0 0.0
        %1124 = vmatprep.subr.mxu0 0.0
        %1125 = vmatpush1.msra.mxu0 0.0
        %1126 = vmatprep.subr.mxu0 0.0
        %1127 = vmatpush1.msra.mxu0 0.0
        %1128 = vmatprep.subr.mxu0 0.0
        %1129 = vmatpush1.msra.mxu0 0.0
        %1130 = vmatprep.subr.mxu0 0.0
        %1131 = vmatpush1.msra.mxu0 0.0
        %1132 = vmatprep.subr.mxu0 0.0
        %1133 = vmatpush1.msra.mxu0 0.0
        %1134 = vmatprep.subr.mxu0 0.0
        %1135 = vmatpush1.msra.mxu0 0.0
        %1136 = vmatprep.subr.mxu0 0.0
        %1137 = vmatpush1.msra.mxu0 0.0
        %1138 = vmatprep.subr.mxu0 0.0
        %1139 = vmatpush1.msra.mxu0 0.0
        %1140 = vmatprep.subr.mxu0 0.0
        %1141 = vmatpush1.msra.mxu0 0.0
        %1142 = vmatprep.subr.mxu0 0.0
        %1143 = vmatpush1.msra.mxu0 0.0
        %1144 = vmatprep.subr.mxu0 0.0
        %1145 = vmatpush1.msra.mxu0 0.0
        %1146 = vmatprep.subr.mxu0 0.0
        %1147 = vmatpush1.msra.mxu0 0.0
        %1148 = vmatprep.subr.mxu0 0.0
        %1149 = vmatpush1.msra.mxu0 0.0
        %1150 = vmatprep.subr.mxu0 0.0
        %1151 = vmatpush1.msra.mxu0 0.0
        %1152 = vmatprep.subr.mxu0 0.0
        %1153 = vmatpush1.msra.mxu0 0.0
        %1154 = vmatprep.subr.mxu0 0.0
        %1155 = vmatpush1.msra.mxu0 0.0
        %1156 = vmatprep.subr.mxu0 0.0
        %1157 = vmatpush1.msra.mxu0 0.0
        %1158 = vmatprep.subr.mxu0 0.0
        %1159 = vmatpush1.msra.mxu0 0.0
        %1160 = vmatprep.subr.mxu0 0.0
        %1161 = vmatpush1.msra.mxu0 0.0
        %1162 = vmatprep.mubr.f32.mxu0 0.0
        %1163 = vmatmul.mubr.f32.gmra.mrb[0].mxu0 %v1096
        %v1164 = vpop.f32.mrb[0].mxu0
        %v1165 = vadd.f32 0.0, %v1164
        %v1166 = vpop.f32.mrb[0].mxu0
        %1167 = vdwg.mxu0
        %1168 = vrot.lane.b32.xlu0 %v584, 64
        %v1169 = vpop.permute.xlu0 %1168
        %v1172 = vsel %vm593, %v939, 0
        %1174 = vmatprep.subr.mxu0 0.0
        %1175 = vmatpush1.msra.mxu0 %v1169
        %1176 = vmatprep.subr.mxu0 0.0
        %1177 = vmatpush1.msra.mxu0 0.0
        %1178 = vmatprep.subr.mxu0 0.0
        %1179 = vmatpush1.msra.mxu0 0.0
        %1180 = vmatprep.subr.mxu0 0.0
        %1181 = vmatpush1.msra.mxu0 0.0
        %1182 = vmatprep.subr.mxu0 0.0
        %1183 = vmatpush1.msra.mxu0 0.0
        %1184 = vmatprep.subr.mxu0 0.0
        %1185 = vmatpush1.msra.mxu0 0.0
        %1186 = vmatprep.subr.mxu0 0.0
        %1187 = vmatpush1.msra.mxu0 0.0
        %1188 = vmatprep.subr.mxu0 0.0
        %1189 = vmatpush1.msra.mxu0 0.0
        %1190 = vmatprep.subr.mxu0 0.0
        %1191 = vmatpush1.msra.mxu0 0.0
        %1192 = vmatprep.subr.mxu0 0.0
        %1193 = vmatpush1.msra.mxu0 0.0
        %1194 = vmatprep.subr.mxu0 0.0
        %1195 = vmatpush1.msra.mxu0 0.0
        %1196 = vmatprep.subr.mxu0 0.0
        %1197 = vmatpush1.msra.mxu0 0.0
        %1198 = vmatprep.subr.mxu0 0.0
        %1199 = vmatpush1.msra.mxu0 0.0
        %1200 = vmatprep.subr.mxu0 0.0
        %1201 = vmatpush1.msra.mxu0 0.0
        %1202 = vmatprep.subr.mxu0 0.0
        %1203 = vmatpush1.msra.mxu0 0.0
        %1204 = vmatprep.subr.mxu0 0.0
        %1205 = vmatpush1.msra.mxu0 0.0
        %1206 = vmatprep.subr.mxu0 0.0
        %1207 = vmatpush1.msra.mxu0 0.0
        %1208 = vmatprep.subr.mxu0 0.0
        %1209 = vmatpush1.msra.mxu0 0.0
        %1210 = vmatprep.subr.mxu0 0.0
        %1211 = vmatpush1.msra.mxu0 0.0
        %1212 = vmatprep.subr.mxu0 0.0
        %1213 = vmatpush1.msra.mxu0 0.0
        %1214 = vmatprep.subr.mxu0 0.0
        %1215 = vmatpush1.msra.mxu0 0.0
        %1216 = vmatprep.subr.mxu0 0.0
        %1217 = vmatpush1.msra.mxu0 0.0
        %1218 = vmatprep.subr.mxu0 0.0
        %1219 = vmatpush1.msra.mxu0 0.0
        %1220 = vmatprep.subr.mxu0 0.0
        %1221 = vmatpush1.msra.mxu0 0.0
        %1222 = vmatprep.subr.mxu0 0.0
        %1223 = vmatpush1.msra.mxu0 0.0
        %1224 = vmatprep.subr.mxu0 0.0
        %1225 = vmatpush1.msra.mxu0 0.0
        %1226 = vmatprep.subr.mxu0 0.0
        %1227 = vmatpush1.msra.mxu0 0.0
        %1228 = vmatprep.subr.mxu0 0.0
        %1229 = vmatpush1.msra.mxu0 0.0
        %1230 = vmatprep.subr.mxu0 0.0
        %1231 = vmatpush1.msra.mxu0 0.0
        %1232 = vmatprep.subr.mxu0 0.0
        %1233 = vmatpush1.msra.mxu0 0.0
        %1234 = vmatprep.subr.mxu0 0.0
        %1235 = vmatpush1.msra.mxu0 0.0
        %1236 = vmatprep.subr.mxu0 0.0
        %1237 = vmatpush1.msra.mxu0 0.0
        %1238 = vmatprep.mubr.f32.mxu0 0.0
        %1239 = vmatmul.mubr.f32.gmra.mrb[0].mxu0 %v1172
        %v1240 = vpop.f32.mrb[0].mxu0
        %v1241 = vadd.f32 0.0, %v1240
        %v1242 = vpop.f32.mrb[0].mxu0
        %1243 = vdwg.mxu0
        %1245 = vrot.lane.b32.xlu0 %v1089, 8
        %v1246 = vpop.permute.xlu0 %1245
        %1249 = vrot.lane.b32.xlu0 %v1165, 16
        %v1250 = vpop.permute.xlu0 %1249
        %1253 = vrot.lane.b32.xlu0 %v1241, 24
        %v1254 = vpop.permute.xlu0 %1253
        %v1256 = vsel %vm593, %v1013, %v1246
        %vm1257 = vcmask 130048
        %v1258 = vsel %vm1257, %v1256, %v1250
        %vm1259 = vcmask 195584
        %v1260 = vsel %vm1259, %v1258, %v1254
        %v1261 = vld [vmem:[#allocation7] sm:$0xff]
        %v1262 = vld [vmem:[#allocation7 + $0x8] sm:$0xff]
        %v1263 = vld [vmem:[#allocation7 + $0x10] sm:$0xff]
        %v1264 = vld [vmem:[#allocation7 + $0x18] sm:$0xff]
        %v1265 = vlaneseq
        %v1266 = vshrl.u32 %v1265, 7
        %v1267 = vsub.s32 0, %v1266
        %v1268 = vrot.slane %v492, %v1267
        %v1270 = vsel %vm504, %v1260, 0
        %1272 = vmatprep.subr.mxu0 0.0
        %1273 = vmatpush1.msra.mxu0 %v1261
        %1274 = vmatprep.subr.mxu0 0.0
        %1275 = vmatpush1.msra.mxu0 %v1262
        %1276 = vmatprep.subr.mxu0 0.0
        %1277 = vmatpush1.msra.mxu0 %v1263
        %1278 = vmatprep.subr.mxu0 0.0
        %1279 = vmatpush1.msra.mxu0 %v1264
        %1280 = vmatprep.subr.mxu0 0.0
        %1281 = vmatpush1.msra.mxu0 0.0
        %1282 = vmatprep.subr.mxu0 0.0
        %1283 = vmatpush1.msra.mxu0 0.0
        %1284 = vmatprep.subr.mxu0 0.0
        %1285 = vmatpush1.msra.mxu0 0.0
        %1286 = vmatprep.subr.mxu0 0.0
        %1287 = vmatpush1.msra.mxu0 0.0
        %1288 = vmatprep.subr.mxu0 0.0
        %1289 = vmatpush1.msra.mxu0 0.0
        %1290 = vmatprep.subr.mxu0 0.0
        %1291 = vmatpush1.msra.mxu0 0.0
        %1292 = vmatprep.subr.mxu0 0.0
        %1293 = vmatpush1.msra.mxu0 0.0
        %1294 = vmatprep.subr.mxu0 0.0
        %1295 = vmatpush1.msra.mxu0 0.0
        %1296 = vmatprep.subr.mxu0 0.0
        %1297 = vmatpush1.msra.mxu0 0.0
        %1298 = vmatprep.subr.mxu0 0.0
        %1299 = vmatpush1.msra.mxu0 0.0
        %1300 = vmatprep.subr.mxu0 0.0
        %1301 = vmatpush1.msra.mxu0 0.0
        %1302 = vmatprep.subr.mxu0 0.0
        %1303 = vmatpush1.msra.mxu0 0.0
        %1304 = vmatprep.subr.mxu0 0.0
        %1305 = vmatpush1.msra.mxu0 0.0
        %1306 = vmatprep.subr.mxu0 0.0
        %1307 = vmatpush1.msra.mxu0 0.0
        %1308 = vmatprep.subr.mxu0 0.0
        %1309 = vmatpush1.msra.mxu0 0.0
        %1310 = vmatprep.subr.mxu0 0.0
        %1311 = vmatpush1.msra.mxu0 0.0
        %1312 = vmatprep.subr.mxu0 0.0
        %1313 = vmatpush1.msra.mxu0 0.0
        %1314 = vmatprep.subr.mxu0 0.0
        %1315 = vmatpush1.msra.mxu0 0.0
        %1316 = vmatprep.subr.mxu0 0.0
        %1317 = vmatpush1.msra.mxu0 0.0
        %1318 = vmatprep.subr.mxu0 0.0
        %1319 = vmatpush1.msra.mxu0 0.0
        %1320 = vmatprep.subr.mxu0 0.0
        %1321 = vmatpush1.msra.mxu0 0.0
        %1322 = vmatprep.subr.mxu0 0.0
        %1323 = vmatpush1.msra.mxu0 0.0
        %1324 = vmatprep.subr.mxu0 0.0
        %1325 = vmatpush1.msra.mxu0 0.0
        %1326 = vmatprep.subr.mxu0 0.0
        %1327 = vmatpush1.msra.mxu0 0.0
        %1328 = vmatprep.subr.mxu0 0.0
        %1329 = vmatpush1.msra.mxu0 0.0
        %1330 = vmatprep.subr.mxu0 0.0
        %1331 = vmatpush1.msra.mxu0 0.0
        %1332 = vmatprep.subr.mxu0 0.0
        %1333 = vmatpush1.msra.mxu0 0.0
        %1334 = vmatprep.subr.mxu0 0.0
        %1335 = vmatpush1.msra.mxu0 0.0
        %1336 = vmatprep.mubr.f32.mxu0 0.0
        %1337 = vmatmul.mubr.f32.gmra.mrb[0].mxu0 %v1270
        %v1338 = vpop.f32.mrb[0].mxu0
        %v1339 = vadd.f32 %v1268, %v1338
        %v1340 = vpop.f32.mrb[0].mxu0
        %1341 = vdwg.mxu0
        %v1342 = vadd.f32 %v1339, %v488
        %v1343 = vsel %vm504, %v1342, 0.0
        %1344 = vadd.xlane.f32.xlu0 %v1343
        %v1345 = vpop.xlane.xlu0 %1344
        %v1346 = vrcp.pop 32.0
        %v1347 = vmul.f32 %v1345, %v1346
        %v1348 = vsub.f32 %v1342, %v1347
        %v1349 = vmul.f32 %v1348, %v1348
        %v1350 = vsel %vm504, %v1349, 0.0
        %1351 = vadd.xlane.f32.xlu0 %v1350
        %v1352 = vpop.xlane.xlu0 %1351
        %v1353 = vmul.f32 %v1352, %v1346
        %v1354 = vadd.f32 %v1353, 1e-12
        %v1355 = vrsqrt.pop %v1354
        %v1356 = vmul.f32 %v1348, %v1355
        %v1357 = vlaneseq
        %v1358 = vshrl.u32 %v1357, 7
        %v1359 = vsub.s32 1, %v1358
        %v1360 = vrot.slane %v492, %v1359
        %v1361 = vmul.f32 %v1356, %v1360
        %v1362 = vlaneseq
        %v1363 = vshrl.u32 %v1362, 7
        %v1364 = vsub.s32 2, %v1363
        %v1365 = vrot.slane %v492, %v1364
        %v1366 = vadd.f32 %v1361, %v1365
        %v1367 = vld [vmem:[#allocation8] sm:$0xff]
        %v1368 = vld [vmem:[#allocation8 + $0x8] sm:$0xff]
        %v1369 = vld [vmem:[#allocation8 + $0x10] sm:$0xff]
        %v1370 = vld [vmem:[#allocation8 + $0x18] sm:$0xff]
        %v1371 = vld [vmem:[%s6] sm:$0x1]
        %v1373 = vlaneseq
        %v1374 = vshrl.u32 %v1373, 7
        %v1375 = vsub.s32 0, %v1374
        %v1376 = vrot.slane %v1371, %v1375
        %v1379 = vsel %vm504, %v1366, 0
        %1381 = vmatprep.subr.mxu0 0.0
        %1382 = vmatpush1.msra.mxu0 %v1367
        %1383 = vmatprep.subr.mxu0 0.0
        %1384 = vmatpush1.msra.mxu0 %v1368
        %1385 = vmatprep.subr.mxu0 0.0
        %1386 = vmatpush1.msra.mxu0 %v1369
        %1387 = vmatprep.subr.mxu0 0.0
        %1388 = vmatpush1.msra.mxu0 %v1370
        %1389 = vmatprep.subr.mxu0 0.0
        %1390 = vmatpush1.msra.mxu0 0.0
        %1391 = vmatprep.subr.mxu0 0.0
        %1392 = vmatpush1.msra.mxu0 0.0
        %1393 = vmatprep.subr.mxu0 0.0
        %1394 = vmatpush1.msra.mxu0 0.0
        %1395 = vmatprep.subr.mxu0 0.0
        %1396 = vmatpush1.msra.mxu0 0.0
        %1397 = vmatprep.subr.mxu0 0.0
        %1398 = vmatpush1.msra.mxu0 0.0
        %1399 = vmatprep.subr.mxu0 0.0
        %1400 = vmatpush1.msra.mxu0 0.0
        %1401 = vmatprep.subr.mxu0 0.0
        %1402 = vmatpush1.msra.mxu0 0.0
        %1403 = vmatprep.subr.mxu0 0.0
        %1404 = vmatpush1.msra.mxu0 0.0
        %1405 = vmatprep.subr.mxu0 0.0
        %1406 = vmatpush1.msra.mxu0 0.0
        %1407 = vmatprep.subr.mxu0 0.0
        %1408 = vmatpush1.msra.mxu0 0.0
        %1409 = vmatprep.subr.mxu0 0.0
        %1410 = vmatpush1.msra.mxu0 0.0
        %1411 = vmatprep.subr.mxu0 0.0
        %1412 = vmatpush1.msra.mxu0 0.0
        %1413 = vmatprep.subr.mxu0 0.0
        %1414 = vmatpush1.msra.mxu0 0.0
        %1415 = vmatprep.subr.mxu0 0.0
        %1416 = vmatpush1.msra.mxu0 0.0
        %1417 = vmatprep.subr.mxu0 0.0
        %1418 = vmatpush1.msra.mxu0 0.0
        %1419 = vmatprep.subr.mxu0 0.0
        %1420 = vmatpush1.msra.mxu0 0.0
        %1421 = vmatprep.subr.mxu0 0.0
        %1422 = vmatpush1.msra.mxu0 0.0
        %1423 = vmatprep.subr.mxu0 0.0
        %1424 = vmatpush1.msra.mxu0 0.0
        %1425 = vmatprep.subr.mxu0 0.0
        %1426 = vmatpush1.msra.mxu0 0.0
        %1427 = vmatprep.subr.mxu0 0.0
        %1428 = vmatpush1.msra.mxu0 0.0
        %1429 = vmatprep.subr.mxu0 0.0
        %1430 = vmatpush1.msra.mxu0 0.0
        %1431 = vmatprep.subr.mxu0 0.0
        %1432 = vmatpush1.msra.mxu0 0.0
        %1433 = vmatprep.subr.mxu0 0.0
        %1434 = vmatpush1.msra.mxu0 0.0
        %1435 = vmatprep.subr.mxu0 0.0
        %1436 = vmatpush1.msra.mxu0 0.0
        %1437 = vmatprep.subr.mxu0 0.0
        %1438 = vmatpush1.msra.mxu0 0.0
        %1439 = vmatprep.subr.mxu0 0.0
        %1440 = vmatpush1.msra.mxu0 0.0
        %1441 = vmatprep.subr.mxu0 0.0
        %1442 = vmatpush1.msra.mxu0 0.0
        %1443 = vmatprep.subr.mxu0 0.0
        %1444 = vmatpush1.msra.mxu0 0.0
        %1445 = vmatprep.mubr.f32.mxu0 0.0
        %1446 = vmatmul.mubr.f32.gmra.mrb[0].mxu0 %v1379
        %v1447 = vpop.f32.mrb[0].mxu0
        %v1448 = vadd.f32 %v1376, %v1447
        %v1449 = vpop.f32.mrb[0].mxu0
        %1450 = vdwg.mxu0
        %v1451 = vmul.f32 %v1448, 0.5
        %v1452 = vmul.f32 %v1448, 0.70710677
        %v1453 = verf.f32.pop %v1452
        %v1454 = vadd.f32 %v1453, 1.0
        %v1455 = vmul.f32 %v1451, %v1454
        %v1456 = vld [vmem:[#allocation10] sm:$0xff]
        %v1457 = vld [vmem:[#allocation10 + $0x8] sm:$0xff]
        %v1458 = vld [vmem:[#allocation10 + $0x10] sm:$0xff]
        %v1459 = vld [vmem:[#allocation10 + $0x18] sm:$0xff]
        %v1460 = vld [vmem:[#allocation10 + $0x20] sm:$0xff]
        %v1461 = vld [vmem:[#allocation10 + $0x28] sm:$0xff]
        %v1462 = vld [vmem:[#allocation10 + $0x30] sm:$0xff]
        %v1463 = vld [vmem:[#allocation10 + $0x38] sm:$0xff]
        %v1464 = vlaneseq
        %v1465 = vshrl.u32 %v1464, 7
        %v1466 = vsub.s32 3, %v1465
        %v1467 = vrot.slane %v492, %v1466
        %vm1468 = vcmask 523264
        %v1470 = vsel %vm1468, %v1455, 0
        %1472 = vmatprep.subr.mxu0 0.0
        %1473 = vmatpush1.msra.mxu0 %v1456
        %1474 = vmatprep.subr.mxu0 0.0
        %1475 = vmatpush1.msra.mxu0 %v1457
        %1476 = vmatprep.subr.mxu0 0.0
        %1477 = vmatpush1.msra.mxu0 %v1458
        %1478 = vmatprep.subr.mxu0 0.0
        %1479 = vmatpush1.msra.mxu0 %v1459
        %1480 = vmatprep.subr.mxu0 0.0
        %1481 = vmatpush1.msra.mxu0 %v1460
        %1482 = vmatprep.subr.mxu0 0.0
        %1483 = vmatpush1.msra.mxu0 %v1461
        %1484 = vmatprep.subr.mxu0 0.0
        %1485 = vmatpush1.msra.mxu0 %v1462
        %1486 = vmatprep.subr.mxu0 0.0
        %1487 = vmatpush1.msra.mxu0 %v1463
        %1488 = vmatprep.subr.mxu0 0.0
        %1489 = vmatpush1.msra.mxu0 0.0
        %1490 = vmatprep.subr.mxu0 0.0
        %1491 = vmatpush1.msra.mxu0 0.0
        %1492 = vmatprep.subr.mxu0 0.0
        %1493 = vmatpush1.msra.mxu0 0.0
        %1494 = vmatprep.subr.mxu0 0.0
        %1495 = vmatpush1.msra.mxu0 0.0
        %1496 = vmatprep.subr.mxu0 0.0
        %1497 = vmatpush1.msra.mxu0 0.0
        %1498 = vmatprep.subr.mxu0 0.0
        %1499 = vmatpush1.msra.mxu0 0.0
        %1500 = vmatprep.subr.mxu0 0.0
        %1501 = vmatpush1.msra.mxu0 0.0
        %1502 = vmatprep.subr.mxu0 0.0
        %1503 = vmatpush1.msra.mxu0 0.0
        %1504 = vmatprep.subr.mxu0 0.0
        %1505 = vmatpush1.msra.mxu0 0.0
        %1506 = vmatprep.subr.mxu0 0.0
        %1507 = vmatpush1.msra.mxu0 0.0
        %1508 = vmatprep.subr.mxu0 0.0
        %1509 = vmatpush1.msra.mxu0 0.0
        %1510 = vmatprep.subr.mxu0 0.0
        %1511 = vmatpush1.msra.mxu0 0.0
        %1512 = vmatprep.subr.mxu0 0.0
        %1513 = vmatpush1.msra.mxu0 0.0
        %1514 = vmatprep.subr.mxu0 0.0
        %1515 = vmatpush1.msra.mxu0 0.0
        %1516 = vmatprep.subr.mxu0 0.0
        %1517 = vmatpush1.msra.mxu0 0.0
        %1518 = vmatprep.subr.mxu0 0.0
        %1519 = vmatpush1.msra.mxu0 0.0
        %1520 = vmatprep.subr.mxu0 0.0
        %1521 = vmatpush1.msra.mxu0 0.0
        %1522 = vmatprep.subr.mxu0 0.0
        %1523 = vmatpush1.msra.mxu0 0.0
        %1524 = vmatprep.subr.mxu0 0.0
        %1525 = vmatpush1.msra.mxu0 0.0
        %1526 = vmatprep.subr.mxu0 0.0
        %1527 = vmatpush1.msra.mxu0 0.0
        %1528 = vmatprep.subr.mxu0 0.0
        %1529 = vmatpush1.msra.mxu0 0.0
        %1530 = vmatprep.subr.mxu0 0.0
        %1531 = vmatpush1.msra.mxu0 0.0
        %1532 = vmatprep.subr.mxu0 0.0
        %1533 = vmatpush1.msra.mxu0 0.0
        %1534 = vmatprep.subr.mxu0 0.0
        %1535 = vmatpush1.msra.mxu0 0.0
        %1536 = vmatprep.mubr.f32.mxu0 0.0
        %1537 = vmatmul.mubr.f32.gmra.mrb[0].mxu0 %v1470
        %v1538 = vpop.f32.mrb[0].mxu0
        %v1539 = vadd.f32 %v1467, %v1538
        %v1540 = vpop.f32.mrb[0].mxu0
        %1541 = vdwg.mxu0
        %v1542 = vadd.f32 %v1539, %v1366
        %v1543 = vsel %vm504, %v1542, 0.0
        %1544 = vadd.xlane.f32.xlu0 %v1543
        %v1545 = vpop.xlane.xlu0 %1544
        %v1546 = vmul.f32 %v1545, %v1346
        %v1547 = vsub.f32 %v1542, %v1546
        %v1548 = vmul.f32 %v1547, %v1547
        %v1549 = vsel %vm504, %v1548, 0.0
        %1550 = vadd.xlane.f32.xlu0 %v1549
        %v1551 = vpop.xlane.xlu0 %1550
        %v1552 = vmul.f32 %v1551, %v1346
        %v1553 = vadd.f32 %v1552, 1e-12
        %v1554 = vrsqrt.pop %v1553
        %v1555 = vmul.f32 %v1547, %v1554
        %v1556 = vlaneseq
        %v1557 = vshrl.u32 %v1556, 7
        %v1558 = vsub.s32 4, %v1557
        %v1559 = vrot.slane %v492, %v1558
        %v1560 = vmul.f32 %v1555, %v1559
        %v1561 = vlaneseq
        %v1562 = vshrl.u32 %v1561, 7
        %v1563 = vsub.s32 5, %v1562
        %v1564 = vrot.slane %v492, %v1563
        %v1565 = vadd.f32 %v1560, %v1564
        %s1566 = scalar_lea.vmem [#allocation11], 8
        %v1567 = vld [vmem:[%s1566] sm:$0x3f]
        %s1568 = scalar_lea.vmem [#allocation5], 32
        %v1569 = vld [vmem:[%s1568] sm:$0xff]
        %v1570 = vld [vmem:[%s1568 + $0x8] sm:$0xff]
        %v1571 = vld [vmem:[%s1568 + $0x10] sm:$0xff]
        %v1572 = vld [vmem:[%s1568 + $0x18] sm:$0xff]
        %s1573 = scalar_lea.vmem %s3, 1
        %v1574 = vld [vmem:[%s1573] sm:$0x1]
        %v1576 = vlaneseq
        %v1577 = vshrl.u32 %v1576, 7
        %v1578 = vsub.s32 0, %v1577
        %v1579 = vrot.slane %v1574, %v1578
        %v1582 = vsel %vm504, %v1565, 0
        %1584 = vmatprep.subr.mxu0 0.0
        %1585 = vmatpush1.msra.mxu0 %v1569
        %1586 = vmatprep.subr.mxu0 0.0
        %1587 = vmatpush1.msra.mxu0 %v1570
        %1588 = vmatprep.subr.mxu0 0.0
        %1589 = vmatpush1.msra.mxu0 %v1571
        %1590 = vmatprep.subr.mxu0 0.0
        %1591 = vmatpush1.msra.mxu0 %v1572
        %1592 = vmatprep.subr.mxu0 0.0
        %1593 = vmatpush1.msra.mxu0 0.0
        %1594 = vmatprep.subr.mxu0 0.0
        %1595 = vmatpush1.msra.mxu0 0.0
        %1596 = vmatprep.subr.mxu0 0.0
        %1597 = vmatpush1.msra.mxu0 0.0
        %1598 = vmatprep.subr.mxu0 0.0
        %1599 = vmatpush1.msra.mxu0 0.0
        %1600 = vmatprep.subr.mxu0 0.0
        %1601 = vmatpush1.msra.mxu0 0.0
        %1602 = vmatprep.subr.mxu0 0.0
        %1603 = vmatpush1.msra.mxu0 0.0
        %1604 = vmatprep.subr.mxu0 0.0
        %1605 = vmatpush1.msra.mxu0 0.0
        %1606 = vmatprep.subr.mxu0 0.0
        %1607 = vmatpush1.msra.mxu0 0.0
        %1608 = vmatprep.subr.mxu0 0.0
        %1609 = vmatpush1.msra.mxu0 0.0
        %1610 = vmatprep.subr.mxu0 0.0
        %1611 = vmatpush1.msra.mxu0 0.0
        %1612 = vmatprep.subr.mxu0 0.0
        %1613 = vmatpush1.msra.mxu0 0.0
        %1614 = vmatprep.subr.mxu0 0.0
        %1615 = vmatpush1.msra.mxu0 0.0
        %1616 = vmatprep.subr.mxu0 0.0
        %1617 = vmatpush1.msra.mxu0 0.0
        %1618 = vmatprep.subr.mxu0 0.0
        %1619 = vmatpush1.msra.mxu0 0.0
        %1620 = vmatprep.subr.mxu0 0.0
        %1621 = vmatpush1.msra.mxu0 0.0
        %1622 = vmatprep.subr.mxu0 0.0
        %1623 = vmatpush1.msra.mxu0 0.0
        %1624 = vmatprep.subr.mxu0 0.0
        %1625 = vmatpush1.msra.mxu0 0.0
        %1626 = vmatprep.subr.mxu0 0.0
        %1627 = vmatpush1.msra.mxu0 0.0
        %1628 = vmatprep.subr.mxu0 0.0
        %1629 = vmatpush1.msra.mxu0 0.0
        %1630 = vmatprep.subr.mxu0 0.0
        %1631 = vmatpush1.msra.mxu0 0.0
        %1632 = vmatprep.subr.mxu0 0.0
        %1633 = vmatpush1.msra.mxu0 0.0
        %1634 = vmatprep.subr.mxu0 0.0
        %1635 = vmatpush1.msra.mxu0 0.0
        %1636 = vmatprep.subr.mxu0 0.0
        %1637 = vmatpush1.msra.mxu0 0.0
        %1638 = vmatprep.subr.mxu0 0.0
        %1639 = vmatpush1.msra.mxu0 0.0
        %1640 = vmatprep.subr.mxu0 0.0
        %1641 = vmatpush1.msra.mxu0 0.0
        %1642 = vmatprep.subr.mxu0 0.0
        %1643 = vmatpush1.msra.mxu0 0.0
        %1644 = vmatprep.subr.mxu0 0.0
        %1645 = vmatpush1.msra.mxu0 0.0
        %1646 = vmatprep.subr.mxu0 0.0
        %1647 = vmatpush1.msra.mxu0 0.0
        %1648 = vmatprep.mubr.f32.mxu0 0.0
        %1649 = vmatmul.mubr.f32.gmra.mrb[0].mxu0 %v1582
        %v1650 = vpop.f32.mrb[0].mxu0
        %v1651 = vadd.f32 %v1579, %v1650
        %v1652 = vpop.f32.mrb[0].mxu0
        %1653 = vdwg.mxu0
        %1655 = vrot.lane.b32.xlu0 %v1651, 120
        %v1656 = vpop.permute.xlu0 %1655
        %1657 = vrot.lane.b32.xlu0 %v1651, 112
        %v1658 = vpop.permute.xlu0 %1657
        %1659 = vrot.lane.b32.xlu0 %v1651, 104
        %v1660 = vpop.permute.xlu0 %1659
        %1661 = vrot.lane.b32.xlu0 %v1651, 96
        %v1662 = vpop.permute.xlu0 %1661
        %v1663 = vsel %vm593, %v1651, 0
        %v1665 = vsel %vm593, %v1662, 0
        %1667 = vmatprep.subr.mxu0 0.0
        %1668 = vmatpush1.xpose.msra.mxu0 %v1665
        %1669 = vmatprep.subr.mxu0 0.0
        %1670 = vmatpush1.xpose.msra.mxu0 0.0
        %1671 = vmatprep.subr.mxu0 0.0
        %1672 = vmatpush1.xpose.msra.mxu0 0.0
        %1673 = vmatprep.subr.mxu0 0.0
        %1674 = vmatpush1.xpose.msra.mxu0 0.0
        %1675 = vmatprep.subr.mxu0 0.0
        %1676 = vmatpush1.xpose.msra.mxu0 0.0
        %1677 = vmatprep.subr.mxu0 0.0
        %1678 = vmatpush1.xpose.msra.mxu0 0.0
        %1679 = vmatprep.subr.mxu0 0.0
        %1680 = vmatpush1.xpose.msra.mxu0 0.0
        %1681 = vmatprep.subr.mxu0 0.0
        %1682 = vmatpush1.xpose.msra.mxu0 0.0
        %1683 = vmatprep.subr.mxu0 0.0
        %1684 = vmatpush1.xpose.msra.mxu0 0.0
        %1685 = vmatprep.subr.mxu0 0.0
        %1686 = vmatpush1.xpose.msra.mxu0 0.0
        %1687 = vmatprep.subr.mxu0 0.0
        %1688 = vmatpush1.xpose.msra.mxu0 0.0
        %1689 = vmatprep.subr.mxu0 0.0
        %1690 = vmatpush1.xpose.msra.mxu0 0.0
        %1691 = vmatprep.subr.mxu0 0.0
        %1692 = vmatpush1.xpose.msra.mxu0 0.0
        %1693 = vmatprep.subr.mxu0 0.0
        %1694 = vmatpush1.xpose.msra.mxu0 0.0
        %1695 = vmatprep.subr.mxu0 0.0
        %1696 = vmatpush1.xpose.msra.mxu0 0.0
        %1697 = vmatprep.subr.mxu0 0.0
        %1698 = vmatpush1.xpose.msra.mxu0 0.0
        %1699 = vmatprep.subr.mxu0 0.0
        %1700 = vmatpush1.xpose.msra.mxu0 0.0
        %1701 = vmatprep.subr.mxu0 0.0
        %1702 = vmatpush1.xpose.msra.mxu0 0.0
        %1703 = vmatprep.subr.mxu0 0.0
        %1704 = vmatpush1.xpose.msra.mxu0 0.0
        %1705 = vmatprep.subr.mxu0 0.0
        %1706 = vmatpush1.xpose.msra.mxu0 0.0
        %1707 = vmatprep.subr.mxu0 0.0
        %1708 = vmatpush1.xpose.msra.mxu0 0.0
        %1709 = vmatprep.subr.mxu0 0.0
        %1710 = vmatpush1.xpose.msra.mxu0 0.0
        %1711 = vmatprep.subr.mxu0 0.0
        %1712 = vmatpush1.xpose.msra.mxu0 0.0
        %1713 = vmatprep.subr.mxu0 0.0
        %1714 = vmatpush1.xpose.msra.mxu0 0.0
        %1715 = vmatprep.subr.mxu0 0.0
        %1716 = vmatpush1.xpose.msra.mxu0 0.0
        %1717 = vmatprep.subr.mxu0 0.0
        %1718 = vmatpush1.xpose.msra.mxu0 0.0
        %1719 = vmatprep.subr.mxu0 0.0
        %1720 = vmatpush1.xpose.msra.mxu0 0.0
        %1721 = vmatprep.subr.mxu0 0.0
        %1722 = vmatpush1.xpose.msra.mxu0 0.0
        %1723 = vmatprep.subr.mxu0 0.0
        %1724 = vmatpush1.xpose.msra.mxu0 0.0
        %1725 = vmatprep.subr.mxu0 0.0
        %1726 = vmatpush1.xpose.msra.mxu0 0.0
        %1727 = vmatprep.subr.mxu0 0.0
        %1728 = vmatpush1.xpose.msra.mxu0 0.0
        %1729 = vmatprep.subr.mxu0 0.0
        %1730 = vmatpush1.xpose.msra.mxu0 0.0
        %1731 = vmatprep.mubr.f32.mxu0 0.0
        %1732 = vmatmul.mubr.f32.gmra.mrb[0].mxu0 %v1663
        %v1733 = vpop.f32.mrb[0].mxu0
        %v1734 = vadd.f32 %v589, %v1733
        %v1735 = vpop.f32.mrb[0].mxu0
        %1736 = vdwg.mxu0
        %1737 = vrot.lane.b32.xlu0 %v1656, 96
        %v1738 = vpop.permute.xlu0 %1737
        %v1739 = vsel %vm593, %v1656, 0
        %v1741 = vsel %vm593, %v1738, 0
        %1743 = vmatprep.subr.mxu0 0.0
        %1744 = vmatpush1.xpose.msra.mxu0 %v1741
        %1745 = vmatprep.subr.mxu0 0.0
        %1746 = vmatpush1.xpose.msra.mxu0 0.0
        %1747 = vmatprep.subr.mxu0 0.0
        %1748 = vmatpush1.xpose.msra.mxu0 0.0
        %1749 = vmatprep.subr.mxu0 0.0
        %1750 = vmatpush1.xpose.msra.mxu0 0.0
        %1751 = vmatprep.subr.mxu0 0.0
        %1752 = vmatpush1.xpose.msra.mxu0 0.0
        %1753 = vmatprep.subr.mxu0 0.0
        %1754 = vmatpush1.xpose.msra.mxu0 0.0
        %1755 = vmatprep.subr.mxu0 0.0
        %1756 = vmatpush1.xpose.msra.mxu0 0.0
        %1757 = vmatprep.subr.mxu0 0.0
        %1758 = vmatpush1.xpose.msra.mxu0 0.0
        %1759 = vmatprep.subr.mxu0 0.0
        %1760 = vmatpush1.xpose.msra.mxu0 0.0
        %1761 = vmatprep.subr.mxu0 0.0
        %1762 = vmatpush1.xpose.msra.mxu0 0.0
        %1763 = vmatprep.subr.mxu0 0.0
        %1764 = vmatpush1.xpose.msra.mxu0 0.0
        %1765 = vmatprep.subr.mxu0 0.0
        %1766 = vmatpush1.xpose.msra.mxu0 0.0
        %1767 = vmatprep.subr.mxu0 0.0
        %1768 = vmatpush1.xpose.msra.mxu0 0.0
        %1769 = vmatprep.subr.mxu0 0.0
        %1770 = vmatpush1.xpose.msra.mxu0 0.0
        %1771 = vmatprep.subr.mxu0 0.0
        %1772 = vmatpush1.xpose.msra.mxu0 0.0
        %1773 = vmatprep.subr.mxu0 0.0
        %1774 = vmatpush1.xpose.msra.mxu0 0.0
        %1775 = vmatprep.subr.mxu0 0.0
        %1776 = vmatpush1.xpose.msra.mxu0 0.0
        %1777 = vmatprep.subr.mxu0 0.0
        %1778 = vmatpush1.xpose.msra.mxu0 0.0
        %1779 = vmatprep.subr.mxu0 0.0
        %1780 = vmatpush1.xpose.msra.mxu0 0.0
        %1781 = vmatprep.subr.mxu0 0.0
        %1782 = vmatpush1.xpose.msra.mxu0 0.0
        %1783 = vmatprep.subr.mxu0 0.0
        %1784 = vmatpush1.xpose.msra.mxu0 0.0
        %1785 = vmatprep.subr.mxu0 0.0
        %1786 = vmatpush1.xpose.msra.mxu0 0.0
        %1787 = vmatprep.subr.mxu0 0.0
        %1788 = vmatpush1.xpose.msra.mxu0 0.0
        %1789 = vmatprep.subr.mxu0 0.0
        %1790 = vmatpush1.xpose.msra.mxu0 0.0
        %1791 = vmatprep.subr.mxu0 0.0
        %1792 = vmatpush1.xpose.msra.mxu0 0.0
        %1793 = vmatprep.subr.mxu0 0.0
        %1794 = vmatpush1.xpose.msra.mxu0 0.0
        %1795 = vmatprep.subr.mxu0 0.0
        %1796 = vmatpush1.xpose.msra.mxu0 0.0
        %1797 = vmatprep.subr.mxu0 0.0
        %1798 = vmatpush1.xpose.msra.mxu0 0.0
        %1799 = vmatprep.subr.mxu0 0.0
        %1800 = vmatpush1.xpose.msra.mxu0 0.0
        %1801 = vmatprep.subr.mxu0 0.0
        %1802 = vmatpush1.xpose.msra.mxu0 0.0
        %1803 = vmatprep.subr.mxu0 0.0
        %1804 = vmatpush1.xpose.msra.mxu0 0.0
        %1805 = vmatprep.subr.mxu0 0.0
        %1806 = vmatpush1.xpose.msra.mxu0 0.0
        %1807 = vmatprep.mubr.f32.mxu0 0.0
        %1808 = vmatmul.mubr.f32.gmra.mrb[0].mxu0 %v1739
        %v1809 = vpop.f32.mrb[0].mxu0
        %v1810 = vadd.f32 %v589, %v1809
        %v1811 = vpop.f32.mrb[0].mxu0
        %1812 = vdwg.mxu0
        %1813 = vrot.lane.b32.xlu0 %v1658, 96
        %v1814 = vpop.permute.xlu0 %1813
        %v1815 = vsel %vm593, %v1658, 0
        %v1817 = vsel %vm593, %v1814, 0
        %1819 = vmatprep.subr.mxu0 0.0
        %1820 = vmatpush1.xpose.msra.mxu0 %v1817
        %1821 = vmatprep.subr.mxu0 0.0
        %1822 = vmatpush1.xpose.msra.mxu0 0.0
        %1823 = vmatprep.subr.mxu0 0.0
        %1824 = vmatpush1.xpose.msra.mxu0 0.0
        %1825 = vmatprep.subr.mxu0 0.0
        %1826 = vmatpush1.xpose.msra.mxu0 0.0
        %1827 = vmatprep.subr.mxu0 0.0
        %1828 = vmatpush1.xpose.msra.mxu0 0.0
        %1829 = vmatprep.subr.mxu0 0.0
        %1830 = vmatpush1.xpose.msra.mxu0 0.0
        %1831 = vmatprep.subr.mxu0 0.0
        %1832 = vmatpush1.xpose.msra.mxu0 0.0
        %1833 = vmatprep.subr.mxu0 0.0
        %1834 = vmatpush1.xpose.msra.mxu0 0.0
        %1835 = vmatprep.subr.mxu0 0.0
        %1836 = vmatpush1.xpose.msra.mxu0 0.0
        %1837 = vmatprep.subr.mxu0 0.0
        %1838 = vmatpush1.xpose.msra.mxu0 0.0
        %1839 = vmatprep.subr.mxu0 0.0
        %1840 = vmatpush1.xpose.msra.mxu0 0.0
        %1841 = vmatprep.subr.mxu0 0.0
        %1842 = vmatpush1.xpose.msra.mxu0 0.0
        %1843 = vmatprep.subr.mxu0 0.0
        %1844 = vmatpush1.xpose.msra.mxu0 0.0
        %1845 = vmatprep.subr.mxu0 0.0
        %1846 = vmatpush1.xpose.msra.mxu0 0.0
        %1847 = vmatprep.subr.mxu0 0.0
        %1848 = vmatpush1.xpose.msra.mxu0 0.0
        %1849 = vmatprep.subr.mxu0 0.0
        %1850 = vmatpush1.xpose.msra.mxu0 0.0
        %1851 = vmatprep.subr.mxu0 0.0
        %1852 = vmatpush1.xpose.msra.mxu0 0.0
        %1853 = vmatprep.subr.mxu0 0.0
        %1854 = vmatpush1.xpose.msra.mxu0 0.0
        %1855 = vmatprep.subr.mxu0 0.0
        %1856 = vmatpush1.xpose.msra.mxu0 0.0
        %1857 = vmatprep.subr.mxu0 0.0
        %1858 = vmatpush1.xpose.msra.mxu0 0.0
        %1859 = vmatprep.subr.mxu0 0.0
        %1860 = vmatpush1.xpose.msra.mxu0 0.0
        %1861 = vmatprep.subr.mxu0 0.0
        %1862 = vmatpush1.xpose.msra.mxu0 0.0
        %1863 = vmatprep.subr.mxu0 0.0
        %1864 = vmatpush1.xpose.msra.mxu0 0.0
        %1865 = vmatprep.subr.mxu0 0.0
        %1866 = vmatpush1.xpose.msra.mxu0 0.0
        %1867 = vmatprep.subr.mxu0 0.0
        %1868 = vmatpush1.xpose.msra.mxu0 0.0
        %1869 = vmatprep.subr.mxu0 0.0
        %1870 = vmatpush1.xpose.msra.mxu0 0.0
        %1871 = vmatprep.subr.mxu0 0.0
        %1872 = vmatpush1.xpose.msra.mxu0 0.0
        %1873 = vmatprep.subr.mxu0 0.0
        %1874 = vmatpush1.xpose.msra.mxu0 0.0
        %1875 = vmatprep.subr.mxu0 0.0
        %1876 = vmatpush1.xpose.msra.mxu0 0.0
        %1877 = vmatprep.subr.mxu0 0.0
        %1878 = vmatpush1.xpose.msra.mxu0 0.0
        %1879 = vmatprep.subr.mxu0 0.0
        %1880 = vmatpush1.xpose.msra.mxu0 0.0
        %1881 = vmatprep.subr.mxu0 0.0
        %1882 = vmatpush1.xpose.msra.mxu0 0.0
        %1883 = vmatprep.mubr.f32.mxu0 0.0
        %1884 = vmatmul.mubr.f32.gmra.mrb[0].mxu0 %v1815
        %v1885 = vpop.f32.mrb[0].mxu0
        %v1886 = vadd.f32 %v589, %v1885
        %v1887 = vpop.f32.mrb[0].mxu0
        %1888 = vdwg.mxu0
        %1889 = vrot.lane.b32.xlu0 %v1660, 96
        %v1890 = vpop.permute.xlu0 %1889
        %v1891 = vsel %vm593, %v1660, 0
        %v1893 = vsel %vm593, %v1890, 0
        %1895 = vmatprep.subr.mxu0 0.0
        %1896 = vmatpush1.xpose.msra.mxu0 %v1893
        %1897 = vmatprep.subr.mxu0 0.0
        %1898 = vmatpush1.xpose.msra.mxu0 0.0
        %1899 = vmatprep.subr.mxu0 0.0
        %1900 = vmatpush1.xpose.msra.mxu0 0.0
        %1901 = vmatprep.subr.mxu0 0.0
        %1902 = vmatpush1.xpose.msra.mxu0 0.0
        %1903 = vmatprep.subr.mxu0 0.0
        %1904 = vmatpush1.xpose.msra.mxu0 0.0
        %1905 = vmatprep.subr.mxu0 0.0
        %1906 = vmatpush1.xpose.msra.mxu0 0.0
        %1907 = vmatprep.subr.mxu0 0.0
        %1908 = vmatpush1.xpose.msra.mxu0 0.0
        %1909 = vmatprep.subr.mxu0 0.0
        %1910 = vmatpush1.xpose.msra.mxu0 0.0
        %1911 = vmatprep.subr.mxu0 0.0
        %1912 = vmatpush1.xpose.msra.mxu0 0.0
        %1913 = vmatprep.subr.mxu0 0.0
        %1914 = vmatpush1.xpose.msra.mxu0 0.0
        %1915 = vmatprep.subr.mxu0 0.0
        %1916 = vmatpush1.xpose.msra.mxu0 0.0
        %1917 = vmatprep.subr.mxu0 0.0
        %1918 = vmatpush1.xpose.msra.mxu0 0.0
        %1919 = vmatprep.subr.mxu0 0.0
        %1920 = vmatpush1.xpose.msra.mxu0 0.0
        %1921 = vmatprep.subr.mxu0 0.0
        %1922 = vmatpush1.xpose.msra.mxu0 0.0
        %1923 = vmatprep.subr.mxu0 0.0
        %1924 = vmatpush1.xpose.msra.mxu0 0.0
        %1925 = vmatprep.subr.mxu0 0.0
        %1926 = vmatpush1.xpose.msra.mxu0 0.0
        %1927 = vmatprep.subr.mxu0 0.0
        %1928 = vmatpush1.xpose.msra.mxu0 0.0
        %1929 = vmatprep.subr.mxu0 0.0
        %1930 = vmatpush1.xpose.msra.mxu0 0.0
        %1931 = vmatprep.subr.mxu0 0.0
        %1932 = vmatpush1.xpose.msra.mxu0 0.0
        %1933 = vmatprep.subr.mxu0 0.0
        %1934 = vmatpush1.xpose.msra.mxu0 0.0
        %1935 = vmatprep.subr.mxu0 0.0
        %1936 = vmatpush1.xpose.msra.mxu0 0.0
        %1937 = vmatprep.subr.mxu0 0.0
        %1938 = vmatpush1.xpose.msra.mxu0 0.0
        %1939 = vmatprep.subr.mxu0 0.0
        %1940 = vmatpush1.xpose.msra.mxu0 0.0
        %1941 = vmatprep.subr.mxu0 0.0
        %1942 = vmatpush1.xpose.msra.mxu0 0.0
        %1943 = vmatprep.subr.mxu0 0.0
        %1944 = vmatpush1.xpose.msra.mxu0 0.0
        %1945 = vmatprep.subr.mxu0 0.0
        %1946 = vmatpush1.xpose.msra.mxu0 0.0
        %1947 = vmatprep.subr.mxu0 0.0
        %1948 = vmatpush1.xpose.msra.mxu0 0.0
        %1949 = vmatprep.subr.mxu0 0.0
        %1950 = vmatpush1.xpose.msra.mxu0 0.0
        %1951 = vmatprep.subr.mxu0 0.0
        %1952 = vmatpush1.xpose.msra.mxu0 0.0
        %1953 = vmatprep.subr.mxu0 0.0
        %1954 = vmatpush1.xpose.msra.mxu0 0.0
        %1955 = vmatprep.subr.mxu0 0.0
        %1956 = vmatpush1.xpose.msra.mxu0 0.0
        %1957 = vmatprep.subr.mxu0 0.0
        %1958 = vmatpush1.xpose.msra.mxu0 0.0
        %1959 = vmatprep.mubr.f32.mxu0 0.0
        %1960 = vmatmul.mubr.f32.gmra.mrb[0].mxu0 %v1891
        %v1961 = vpop.f32.mrb[0].mxu0
        %v1962 = vadd.f32 %v589, %v1961
        %v1963 = vpop.f32.mrb[0].mxu0
        %1964 = vdwg.mxu0
        %v1965 = vsel %vm593, %v1734, -inf
        %1966 = vmax.xlane.f32.xlu0 %v1965
        %v1967 = vpop.xlane.xlu0 %1966
        %v1968 = vsel %vm593, %v1810, -inf
        %1969 = vmax.xlane.f32.xlu0 %v1968
        %v1970 = vpop.xlane.xlu0 %1969
        %v1971 = vsel %vm593, %v1886, -inf
        %1972 = vmax.xlane.f32.xlu0 %v1971
        %v1973 = vpop.xlane.xlu0 %1972
        %v1974 = vsel %vm593, %v1962, -inf
        %1975 = vmax.xlane.f32.xlu0 %v1974
        %v1976 = vpop.xlane.xlu0 %1975
        %v1977 = vsub.f32 %v1734, %v1967
        %v1978 = vsub.f32 %v1810, %v1970
        %v1979 = vsub.f32 %v1886, %v1973
        %v1980 = vsub.f32 %v1962, %v1976
        %v1981 = vmul.f32 %v1977, 1.442695
        %v1982 = vpow.pop %v1981
        %v1983 = vmul.f32 %v1978, 1.442695
        %v1984 = vpow.pop %v1983
        %v1985 = vmul.f32 %v1979, 1.442695
        %v1986 = vpow.pop %v1985
        %v1987 = vmul.f32 %v1980, 1.442695
        %v1988 = vpow.pop %v1987
        %v1989 = vsel %vm593, %v1982, 0.0
        %1990 = vadd.xlane.f32.xlu0 %v1989
        %v1991 = vpop.xlane.xlu0 %1990
        %v1992 = vsel %vm593, %v1984, 0.0
        %1993 = vadd.xlane.f32.xlu0 %v1992
        %v1994 = vpop.xlane.xlu0 %1993
        %v1995 = vsel %vm593, %v1986, 0.0
        %1996 = vadd.xlane.f32.xlu0 %v1995
        %v1997 = vpop.xlane.xlu0 %1996
        %v1998 = vsel %vm593, %v1988, 0.0
        %1999 = vadd.xlane.f32.xlu0 %v1998
        %v2000 = vpop.xlane.xlu0 %1999
        %v2001 = vrcp.pop %v1991
        %v2002 = vrcp.pop %v1994
        %v2003 = vrcp.pop %v1997
        %v2004 = vrcp.pop %v2000
        %v2005 = vmul.f32 %v1982, %v2001
        %v2006 = vmul.f32 %v1984, %v2002
        %v2007 = vmul.f32 %v1986, %v2003
        %v2008 = vmul.f32 %v1988, %v2004
        %2009 = vrot.lane.b32.xlu0 %v1651, 64
        %v2010 = vpop.permute.xlu0 %2009
        %v2013 = vsel %vm593, %v2005, 0
        %2015 = vmatprep.subr.mxu0 0.0
        %2016 = vmatpush1.msra.mxu0 %v2010
        %2017 = vmatprep.subr.mxu0 0.0
        %2018 = vmatpush1.msra.mxu0 0.0
        %2019 = vmatprep.subr.mxu0 0.0
        %2020 = vmatpush1.msra.mxu0 0.0
        %2021 = vmatprep.subr.mxu0 0.0
        %2022 = vmatpush1.msra.mxu0 0.0
        %2023 = vmatprep.subr.mxu0 0.0
        %2024 = vmatpush1.msra.mxu0 0.0
        %2025 = vmatprep.subr.mxu0 0.0
        %2026 = vmatpush1.msra.mxu0 0.0
        %2027 = vmatprep.subr.mxu0 0.0
        %2028 = vmatpush1.msra.mxu0 0.0
        %2029 = vmatprep.subr.mxu0 0.0
        %2030 = vmatpush1.msra.mxu0 0.0
        %2031 = vmatprep.subr.mxu0 0.0
        %2032 = vmatpush1.msra.mxu0 0.0
        %2033 = vmatprep.subr.mxu0 0.0
        %2034 = vmatpush1.msra.mxu0 0.0
        %2035 = vmatprep.subr.mxu0 0.0
        %2036 = vmatpush1.msra.mxu0 0.0
        %2037 = vmatprep.subr.mxu0 0.0
        %2038 = vmatpush1.msra.mxu0 0.0
        %2039 = vmatprep.subr.mxu0 0.0
        %2040 = vmatpush1.msra.mxu0 0.0
        %2041 = vmatprep.subr.mxu0 0.0
        %2042 = vmatpush1.msra.mxu0 0.0
        %2043 = vmatprep.subr.mxu0 0.0
        %2044 = vmatpush1.msra.mxu0 0.0
        %2045 = vmatprep.subr.mxu0 0.0
        %2046 = vmatpush1.msra.mxu0 0.0
        %2047 = vmatprep.subr.mxu0 0.0
        %2048 = vmatpush1.msra.mxu0 0.0
        %2049 = vmatprep.subr.mxu0 0.0
        %2050 = vmatpush1.msra.mxu0 0.0
        %2051 = vmatprep.subr.mxu0 0.0
        %2052 = vmatpush1.msra.mxu0 0.0
        %2053 = vmatprep.subr.mxu0 0.0
        %2054 = vmatpush1.msra.mxu0 0.0
        %2055 = vmatprep.subr.mxu0 0.0
        %2056 = vmatpush1.msra.mxu0 0.0
        %2057 = vmatprep.subr.mxu0 0.0
        %2058 = vmatpush1.msra.mxu0 0.0
        %2059 = vmatprep.subr.mxu0 0.0
        %2060 = vmatpush1.msra.mxu0 0.0
        %2061 = vmatprep.subr.mxu0 0.0
        %2062 = vmatpush1.msra.mxu0 0.0
        %2063 = vmatprep.subr.mxu0 0.0
        %2064 = vmatpush1.msra.mxu0 0.0
        %2065 = vmatprep.subr.mxu0 0.0
        %2066 = vmatpush1.msra.mxu0 0.0
        %2067 = vmatprep.subr.mxu0 0.0
        %2068 = vmatpush1.msra.mxu0 0.0
        %2069 = vmatprep.subr.mxu0 0.0
        %2070 = vmatpush1.msra.mxu0 0.0
        %2071 = vmatprep.subr.mxu0 0.0
        %2072 = vmatpush1.msra.mxu0 0.0
        %2073 = vmatprep.subr.mxu0 0.0
        %2074 = vmatpush1.msra.mxu0 0.0
        %2075 = vmatprep.subr.mxu0 0.0
        %2076 = vmatpush1.msra.mxu0 0.0
        %2077 = vmatprep.subr.mxu0 0.0
        %2078 = vmatpush1.msra.mxu0 0.0
        %2079 = vmatprep.mubr.f32.mxu0 0.0
        %2080 = vmatmul.mubr.f32.gmra.mrb[0].mxu0 %v2013
        %v2081 = vpop.f32.mrb[0].mxu0
        %v2082 = vadd.f32 0.0, %v2081
        %v2083 = vpop.f32.mrb[0].mxu0
        %2084 = vdwg.mxu0
        %2085 = vrot.lane.b32.xlu0 %v1656, 64
        %v2086 = vpop.permute.xlu0 %2085
        %v2089 = vsel %vm593, %v2006, 0
        %2091 = vmatprep.subr.mxu0 0.0
        %2092 = vmatpush1.msra.mxu0 %v2086
        %2093 = vmatprep.subr.mxu0 0.0
        %2094 = vmatpush1.msra.mxu0 0.0
        %2095 = vmatprep.subr.mxu0 0.0
        %2096 = vmatpush1.msra.mxu0 0.0
        %2097 = vmatprep.subr.mxu0 0.0
        %2098 = vmatpush1.msra.mxu0 0.0
        %2099 = vmatprep.subr.mxu0 0.0
        %2100 = vmatpush1.msra.mxu0 0.0
        %2101 = vmatprep.subr.mxu0 0.0
        %2102 = vmatpush1.msra.mxu0 0.0
        %2103 = vmatprep.subr.mxu0 0.0
        %2104 = vmatpush1.msra.mxu0 0.0
        %2105 = vmatprep.subr.mxu0 0.0
        %2106 = vmatpush1.msra.mxu0 0.0
        %2107 = vmatprep.subr.mxu0 0.0
        %2108 = vmatpush1.msra.mxu0 0.0
        %2109 = vmatprep.subr.mxu0 0.0
        %2110 = vmatpush1.msra.mxu0 0.0
        %2111 = vmatprep.subr.mxu0 0.0
        %2112 = vmatpush1.msra.mxu0 0.0
        %2113 = vmatprep.subr.mxu0 0.0
        %2114 = vmatpush1.msra.mxu0 0.0
        %2115 = vmatprep.subr.mxu0 0.0
        %2116 = vmatpush1.msra.mxu0 0.0
        %2117 = vmatprep.subr.mxu0 0.0
        %2118 = vmatpush1.msra.mxu0 0.0
        %2119 = vmatprep.subr.mxu0 0.0
        %2120 = vmatpush1.msra.mxu0 0.0
        %2121 = vmatprep.subr.mxu0 0.0
        %2122 = vmatpush1.msra.mxu0 0.0
        %2123 = vmatprep.subr.mxu0 0.0
        %2124 = vmatpush1.msra.mxu0 0.0
        %2125 = vmatprep.subr.mxu0 0.0
        %2126 = vmatpush1.msra.mxu0 0.0
        %2127 = vmatprep.subr.mxu0 0.0
        %2128 = vmatpush1.msra.mxu0 0.0
        %2129 = vmatprep.subr.mxu0 0.0
        %2130 = vmatpush1.msra.mxu0 0.0
        %2131 = vmatprep.subr.mxu0 0.0
        %2132 = vmatpush1.msra.mxu0 0.0
        %2133 = vmatprep.subr.mxu0 0.0
        %2134 = vmatpush1.msra.mxu0 0.0
        %2135 = vmatprep.subr.mxu0 0.0
        %2136 = vmatpush1.msra.mxu0 0.0
        %2137 = vmatprep.subr.mxu0 0.0
        %2138 = vmatpush1.msra.mxu0 0.0
        %2139 = vmatprep.subr.mxu0 0.0
        %2140 = vmatpush1.msra.mxu0 0.0
        %2141 = vmatprep.subr.mxu0 0.0
        %2142 = vmatpush1.msra.mxu0 0.0
        %2143 = vmatprep.subr.mxu0 0.0
        %2144 = vmatpush1.msra.mxu0 0.0
        %2145 = vmatprep.subr.mxu0 0.0
        %2146 = vmatpush1.msra.mxu0 0.0
        %2147 = vmatprep.subr.mxu0 0.0
        %2148 = vmatpush1.msra.mxu0 0.0
        %2149 = vmatprep.subr.mxu0 0.0
        %2150 = vmatpush1.msra.mxu0 0.0
        %2151 = vmatprep.subr.mxu0 0.0
        %2152 = vmatpush1.msra.mxu0 0.0
        %2153 = vmatprep.subr.mxu0 0.0
        %2154 = vmatpush1.msra.mxu0 0.0
        %2155 = vmatprep.mubr.f32.mxu0 0.0
        %2156 = vmatmul.mubr.f32.gmra.mrb[0].mxu0 %v2089
        %v2157 = vpop.f32.mrb[0].mxu0
        %v2158 = vadd.f32 0.0, %v2157
        %v2159 = vpop.f32.mrb[0].mxu0
        %2160 = vdwg.mxu0
        %2161 = vrot.lane.b32.xlu0 %v1658, 64
        %v2162 = vpop.permute.xlu0 %2161
        %v2165 = vsel %vm593, %v2007, 0
        %2167 = vmatprep.subr.mxu0 0.0
        %2168 = vmatpush1.msra.mxu0 %v2162
        %2169 = vmatprep.subr.mxu0 0.0
        %2170 = vmatpush1.msra.mxu0 0.0
        %2171 = vmatprep.subr.mxu0 0.0
        %2172 = vmatpush1.msra.mxu0 0.0
        %2173 = vmatprep.subr.mxu0 0.0
        %2174 = vmatpush1.msra.mxu0 0.0
        %2175 = vmatprep.subr.mxu0 0.0
        %2176 = vmatpush1.msra.mxu0 0.0
        %2177 = vmatprep.subr.mxu0 0.0
        %2178 = vmatpush1.msra.mxu0 0.0
        %2179 = vmatprep.subr.mxu0 0.0
        %2180 = vmatpush1.msra.mxu0 0.0
        %2181 = vmatprep.subr.mxu0 0.0
        %2182 = vmatpush1.msra.mxu0 0.0
        %2183 = vmatprep.subr.mxu0 0.0
        %2184 = vmatpush1.msra.mxu0 0.0
        %2185 = vmatprep.subr.mxu0 0.0
        %2186 = vmatpush1.msra.mxu0 0.0
        %2187 = vmatprep.subr.mxu0 0.0
        %2188 = vmatpush1.msra.mxu0 0.0
        %2189 = vmatprep.subr.mxu0 0.0
        %2190 = vmatpush1.msra.mxu0 0.0
        %2191 = vmatprep.subr.mxu0 0.0
        %2192 = vmatpush1.msra.mxu0 0.0
        %2193 = vmatprep.subr.mxu0 0.0
        %2194 = vmatpush1.msra.mxu0 0.0
        %2195 = vmatprep.subr.mxu0 0.0
        %2196 = vmatpush1.msra.mxu0 0.0
        %2197 = vmatprep.subr.mxu0 0.0
        %2198 = vmatpush1.msra.mxu0 0.0
        %2199 = vmatprep.subr.mxu0 0.0
        %2200 = vmatpush1.msra.mxu0 0.0
        %2201 = vmatprep.subr.mxu0 0.0
        %2202 = vmatpush1.msra.mxu0 0.0
        %2203 = vmatprep.subr.mxu0 0.0
        %2204 = vmatpush1.msra.mxu0 0.0
        %2205 = vmatprep.subr.mxu0 0.0
        %2206 = vmatpush1.msra.mxu0 0.0
        %2207 = vmatprep.subr.mxu0 0.0
        %2208 = vmatpush1.msra.mxu0 0.0
        %2209 = vmatprep.subr.mxu0 0.0
        %2210 = vmatpush1.msra.mxu0 0.0
        %2211 = vmatprep.subr.mxu0 0.0
        %2212 = vmatpush1.msra.mxu0 0.0
        %2213 = vmatprep.subr.mxu0 0.0
        %2214 = vmatpush1.msra.mxu0 0.0
        %2215 = vmatprep.subr.mxu0 0.0
        %2216 = vmatpush1.msra.mxu0 0.0
        %2217 = vmatprep.subr.mxu0 0.0
        %2218 = vmatpush1.msra.mxu0 0.0
        %2219 = vmatprep.subr.mxu0 0.0
        %2220 = vmatpush1.msra.mxu0 0.0
        %2221 = vmatprep.subr.mxu0 0.0
        %2222 = vmatpush1.msra.mxu0 0.0
        %2223 = vmatprep.subr.mxu0 0.0
        %2224 = vmatpush1.msra.mxu0 0.0
        %2225 = vmatprep.subr.mxu0 0.0
        %2226 = vmatpush1.msra.mxu0 0.0
        %2227 = vmatprep.subr.mxu0 0.0
        %2228 = vmatpush1.msra.mxu0 0.0
        %2229 = vmatprep.subr.mxu0 0.0
        %2230 = vmatpush1.msra.mxu0 0.0
        %2231 = vmatprep.mubr.f32.mxu0 0.0
        %2232 = vmatmul.mubr.f32.gmra.mrb[0].mxu0 %v2165
        %v2233 = vpop.f32.mrb[0].mxu0
        %v2234 = vadd.f32 0.0, %v2233
        %v2235 = vpop.f32.mrb[0].mxu0
        %2236 = vdwg.mxu0
        %2237 = vrot.lane.b32.xlu0 %v1660, 64
        %v2238 = vpop.permute.xlu0 %2237
        %v2241 = vsel %vm593, %v2008, 0
        %2243 = vmatprep.subr.mxu0 0.0
        %2244 = vmatpush1.msra.mxu0 %v2238
        %2245 = vmatprep.subr.mxu0 0.0
        %2246 = vmatpush1.msra.mxu0 0.0
        %2247 = vmatprep.subr.mxu0 0.0
        %2248 = vmatpush1.msra.mxu0 0.0
        %2249 = vmatprep.subr.mxu0 0.0
        %2250 = vmatpush1.msra.mxu0 0.0
        %2251 = vmatprep.subr.mxu0 0.0
        %2252 = vmatpush1.msra.mxu0 0.0
        %2253 = vmatprep.subr.mxu0 0.0
        %2254 = vmatpush1.msra.mxu0 0.0
        %2255 = vmatprep.subr.mxu0 0.0
        %2256 = vmatpush1.msra.mxu0 0.0
        %2257 = vmatprep.subr.mxu0 0.0
        %2258 = vmatpush1.msra.mxu0 0.0
        %2259 = vmatprep.subr.mxu0 0.0
        %2260 = vmatpush1.msra.mxu0 0.0
        %2261 = vmatprep.subr.mxu0 0.0
        %2262 = vmatpush1.msra.mxu0 0.0
        %2263 = vmatprep.subr.mxu0 0.0
        %2264 = vmatpush1.msra.mxu0 0.0
        %2265 = vmatprep.subr.mxu0 0.0
        %2266 = vmatpush1.msra.mxu0 0.0
        %2267 = vmatprep.subr.mxu0 0.0
        %2268 = vmatpush1.msra.mxu0 0.0
        %2269 = vmatprep.subr.mxu0 0.0
        %2270 = vmatpush1.msra.mxu0 0.0
        %2271 = vmatprep.subr.mxu0 0.0
        %2272 = vmatpush1.msra.mxu0 0.0
        %2273 = vmatprep.subr.mxu0 0.0
        %2274 = vmatpush1.msra.mxu0 0.0
        %2275 = vmatprep.subr.mxu0 0.0
        %2276 = vmatpush1.msra.mxu0 0.0
        %2277 = vmatprep.subr.mxu0 0.0
        %2278 = vmatpush1.msra.mxu0 0.0
        %2279 = vmatprep.subr.mxu0 0.0
        %2280 = vmatpush1.msra.mxu0 0.0
        %2281 = vmatprep.subr.mxu0 0.0
        %2282 = vmatpush1.msra.mxu0 0.0
        %2283 = vmatprep.subr.mxu0 0.0
        %2284 = vmatpush1.msra.mxu0 0.0
        %2285 = vmatprep.subr.mxu0 0.0
        %2286 = vmatpush1.msra.mxu0 0.0
        %2287 = vmatprep.subr.mxu0 0.0
        %2288 = vmatpush1.msra.mxu0 0.0
        %2289 = vmatprep.subr.mxu0 0.0
        %2290 = vmatpush1.msra.mxu0 0.0
        %2291 = vmatprep.subr.mxu0 0.0
        %2292 = vmatpush1.msra.mxu0 0.0
        %2293 = vmatprep.subr.mxu0 0.0
        %2294 = vmatpush1.msra.mxu0 0.0
        %2295 = vmatprep.subr.mxu0 0.0
        %2296 = vmatpush1.msra.mxu0 0.0
        %2297 = vmatprep.subr.mxu0 0.0
        %2298 = vmatpush1.msra.mxu0 0.0
        %2299 = vmatprep.subr.mxu0 0.0
        %2300 = vmatpush1.msra.mxu0 0.0
        %2301 = vmatprep.subr.mxu0 0.0
        %2302 = vmatpush1.msra.mxu0 0.0
        %2303 = vmatprep.subr.mxu0 0.0
        %2304 = vmatpush1.msra.mxu0 0.0
        %2305 = vmatprep.subr.mxu0 0.0
        %2306 = vmatpush1.msra.mxu0 0.0
        %2307 = vmatprep.mubr.f32.mxu0 0.0
        %2308 = vmatmul.mubr.f32.gmra.mrb[0].mxu0 %v2241
        %v2309 = vpop.f32.mrb[0].mxu0
        %v2310 = vadd.f32 0.0, %v2309
        %v2311 = vpop.f32.mrb[0].mxu0
        %2312 = vdwg.mxu0
        %2314 = vrot.lane.b32.xlu0 %v2158, 8
        %v2315 = vpop.permute.xlu0 %2314
        %2318 = vrot.lane.b32.xlu0 %v2234, 16
        %v2319 = vpop.permute.xlu0 %2318
        %2322 = vrot.lane.b32.xlu0 %v2310, 24
        %v2323 = vpop.permute.xlu0 %2322
        %v2325 = vsel %vm593, %v2082, %v2315
        %v2326 = vsel %vm1257, %v2325, %v2319
        %v2327 = vsel %vm1259, %v2326, %v2323
        %s2328 = scalar_lea.vmem [#allocation7], 32
        %v2329 = vld [vmem:[%s2328] sm:$0xff]
        %v2330 = vld [vmem:[%s2328 + $0x8] sm:$0xff]
        %v2331 = vld [vmem:[%s2328 + $0x10] sm:$0xff]
        %v2332 = vld [vmem:[%s2328 + $0x18] sm:$0xff]
        %v2333 = vlaneseq
        %v2334 = vshrl.u32 %v2333, 7
        %v2335 = vsub.s32 0, %v2334
        %v2336 = vrot.slane %v1567, %v2335
        %v2338 = vsel %vm504, %v2327, 0
        %2340 = vmatprep.subr.mxu0 0.0
        %2341 = vmatpush1.msra.mxu0 %v2329
        %2342 = vmatprep.subr.mxu0 0.0
        %2343 = vmatpush1.msra.mxu0 %v2330
        %2344 = vmatprep.subr.mxu0 0.0
        %2345 = vmatpush1.msra.mxu0 %v2331
        %2346 = vmatprep.subr.mxu0 0.0
        %2347 = vmatpush1.msra.mxu0 %v2332
        %2348 = vmatprep.subr.mxu0 0.0
        %2349 = vmatpush1.msra.mxu0 0.0
        %2350 = vmatprep.subr.mxu0 0.0
        %2351 = vmatpush1.msra.mxu0 0.0
        %2352 = vmatprep.subr.mxu0 0.0
        %2353 = vmatpush1.msra.mxu0 0.0
        %2354 = vmatprep.subr.mxu0 0.0
        %2355 = vmatpush1.msra.mxu0 0.0
        %2356 = vmatprep.subr.mxu0 0.0
        %2357 = vmatpush1.msra.mxu0 0.0
        %2358 = vmatprep.subr.mxu0 0.0
        %2359 = vmatpush1.msra.mxu0 0.0
        %2360 = vmatprep.subr.mxu0 0.0
        %2361 = vmatpush1.msra.mxu0 0.0
        %2362 = vmatprep.subr.mxu0 0.0
        %2363 = vmatpush1.msra.mxu0 0.0
        %2364 = vmatprep.subr.mxu0 0.0
        %2365 = vmatpush1.msra.mxu0 0.0
        %2366 = vmatprep.subr.mxu0 0.0
        %2367 = vmatpush1.msra.mxu0 0.0
        %2368 = vmatprep.subr.mxu0 0.0
        %2369 = vmatpush1.msra.mxu0 0.0
        %2370 = vmatprep.subr.mxu0 0.0
        %2371 = vmatpush1.msra.mxu0 0.0
        %2372 = vmatprep.subr.mxu0 0.0
        %2373 = vmatpush1.msra.mxu0 0.0
        %2374 = vmatprep.subr.mxu0 0.0
        %2375 = vmatpush1.msra.mxu0 0.0
        %2376 = vmatprep.subr.mxu0 0.0
        %2377 = vmatpush1.msra.mxu0 0.0
        %2378 = vmatprep.subr.mxu0 0.0
        %2379 = vmatpush1.msra.mxu0 0.0
        %2380 = vmatprep.subr.mxu0 0.0
        %2381 = vmatpush1.msra.mxu0 0.0
        %2382 = vmatprep.subr.mxu0 0.0
        %2383 = vmatpush1.msra.mxu0 0.0
        %2384 = vmatprep.subr.mxu0 0.0
        %2385 = vmatpush1.msra.mxu0 0.0
        %2386 = vmatprep.subr.mxu0 0.0
        %2387 = vmatpush1.msra.mxu0 0.0
        %2388 = vmatprep.subr.mxu0 0.0
        %2389 = vmatpush1.msra.mxu0 0.0
        %2390 = vmatprep.subr.mxu0 0.0
        %2391 = vmatpush1.msra.mxu0 0.0
        %2392 = vmatprep.subr.mxu0 0.0
        %2393 = vmatpush1.msra.mxu0 0.0
        %2394 = vmatprep.subr.mxu0 0.0
        %2395 = vmatpush1.msra.mxu0 0.0
        %2396 = vmatprep.subr.mxu0 0.0
        %2397 = vmatpush1.msra.mxu0 0.0
        %2398 = vmatprep.subr.mxu0 0.0
        %2399 = vmatpush1.msra.mxu0 0.0
        %2400 = vmatprep.subr.mxu0 0.0
        %2401 = vmatpush1.msra.mxu0 0.0
        %2402 = vmatprep.subr.mxu0 0.0
        %2403 = vmatpush1.msra.mxu0 0.0
        %2404 = vmatprep.mubr.f32.mxu0 0.0
        %2405 = vmatmul.mubr.f32.gmra.mrb[0].mxu0 %v2338
        %v2406 = vpop.f32.mrb[0].mxu0
        %v2407 = vadd.f32 %v2336, %v2406
        %v2408 = vpop.f32.mrb[0].mxu0
        %2409 = vdwg.mxu0
        %v2410 = vadd.f32 %v2407, %v1565
        %v2411 = vsel %vm504, %v2410, 0.0
        %2412 = vadd.xlane.f32.xlu0 %v2411
        %v2413 = vpop.xlane.xlu0 %2412
        %v2414 = vmul.f32 %v2413, %v1346
        %v2415 = vsub.f32 %v2410, %v2414
        %v2416 = vmul.f32 %v2415, %v2415
        %v2417 = vsel %vm504, %v2416, 0.0
        %2418 = vadd.xlane.f32.xlu0 %v2417
        %v2419 = vpop.xlane.xlu0 %2418
        %v2420 = vmul.f32 %v2419, %v1346
        %v2421 = vadd.f32 %v2420, 1e-12
        %v2422 = vrsqrt.pop %v2421
        %v2423 = vmul.f32 %v2415, %v2422
        %v2424 = vlaneseq
        %v2425 = vshrl.u32 %v2424, 7
        %v2426 = vsub.s32 1, %v2425
        %v2427 = vrot.slane %v1567, %v2426
        %v2428 = vmul.f32 %v2423, %v2427
        %v2429 = vlaneseq
        %v2430 = vshrl.u32 %v2429, 7
        %v2431 = vsub.s32 2, %v2430
        %v2432 = vrot.slane %v1567, %v2431
        %v2433 = vadd.f32 %v2428, %v2432
        %s2434 = scalar_lea.vmem [#allocation8], 32
        %v2435 = vld [vmem:[%s2434] sm:$0xff]
        %v2436 = vld [vmem:[%s2434 + $0x8] sm:$0xff]
        %v2437 = vld [vmem:[%s2434 + $0x10] sm:$0xff]
        %v2438 = vld [vmem:[%s2434 + $0x18] sm:$0xff]
        %s2439 = scalar_lea.vmem %s6, 1
        %v2440 = vld [vmem:[%s2439] sm:$0x1]
        %v2442 = vlaneseq
        %v2443 = vshrl.u32 %v2442, 7
        %v2444 = vsub.s32 0, %v2443
        %v2445 = vrot.slane %v2440, %v2444
        %v2448 = vsel %vm504, %v2433, 0
        %2450 = vmatprep.subr.mxu0 0.0
        %2451 = vmatpush1.msra.mxu0 %v2435
        %2452 = vmatprep.subr.mxu0 0.0
        %2453 = vmatpush1.msra.mxu0 %v2436
        %2454 = vmatprep.subr.mxu0 0.0
        %2455 = vmatpush1.msra.mxu0 %v2437
        %2456 = vmatprep.subr.mxu0 0.0
        %2457 = vmatpush1.msra.mxu0 %v2438
        %2458 = vmatprep.subr.mxu0 0.0
        %2459 = vmatpush1.msra.mxu0 0.0
        %2460 = vmatprep.subr.mxu0 0.0
        %2461 = vmatpush1.msra.mxu0 0.0
        %2462 = vmatprep.subr.mxu0 0.0
        %2463 = vmatpush1.msra.mxu0 0.0
        %2464 = vmatprep.subr.mxu0 0.0
        %2465 = vmatpush1.msra.mxu0 0.0
        %2466 = vmatprep.subr.mxu0 0.0
        %2467 = vmatpush1.msra.mxu0 0.0
        %2468 = vmatprep.subr.mxu0 0.0
        %2469 = vmatpush1.msra.mxu0 0.0
        %2470 = vmatprep.subr.mxu0 0.0
        %2471 = vmatpush1.msra.mxu0 0.0
        %2472 = vmatprep.subr.mxu0 0.0
        %2473 = vmatpush1.msra.mxu0 0.0
        %2474 = vmatprep.subr.mxu0 0.0
        %2475 = vmatpush1.msra.mxu0 0.0
        %2476 = vmatprep.subr.mxu0 0.0
        %2477 = vmatpush1.msra.mxu0 0.0
        %2478 = vmatprep.subr.mxu0 0.0
        %2479 = vmatpush1.msra.mxu0 0.0
        %2480 = vmatprep.subr.mxu0 0.0
        %2481 = vmatpush1.msra.mxu0 0.0
        %2482 = vmatprep.subr.mxu0 0.0
        %2483 = vmatpush1.msra.mxu0 0.0
        %2484 = vmatprep.subr.mxu0 0.0
        %2485 = vmatpush1.msra.mxu0 0.0
        %2486 = vmatprep.subr.mxu0 0.0
        %2487 = vmatpush1.msra.mxu0 0.0
        %2488 = vmatprep.subr.mxu0 0.0
        %2489 = vmatpush1.msra.mxu0 0.0
        %2490 = vmatprep.subr.mxu0 0.0
        %2491 = vmatpush1.msra.mxu0 0.0
        %2492 = vmatprep.subr.mxu0 0.0
        %2493 = vmatpush1.msra.mxu0 0.0
        %2494 = vmatprep.subr.mxu0 0.0
        %2495 = vmatpush1.msra.mxu0 0.0
        %2496 = vmatprep.subr.mxu0 0.0
        %2497 = vmatpush1.msra.mxu0 0.0
        %2498 = vmatprep.subr.mxu0 0.0
        %2499 = vmatpush1.msra.mxu0 0.0
        %2500 = vmatprep.subr.mxu0 0.0
        %2501 = vmatpush1.msra.mxu0 0.0
        %2502 = vmatprep.subr.mxu0 0.0
        %2503 = vmatpush1.msra.mxu0 0.0
        %2504 = vmatprep.subr.mxu0 0.0
        %2505 = vmatpush1.msra.mxu0 0.0
        %2506 = vmatprep.subr.mxu0 0.0
        %2507 = vmatpush1.msra.mxu0 0.0
        %2508 = vmatprep.subr.mxu0 0.0
        %2509 = vmatpush1.msra.mxu0 0.0
        %2510 = vmatprep.subr.mxu0 0.0
        %2511 = vmatpush1.msra.mxu0 0.0
        %2512 = vmatprep.subr.mxu0 0.0
        %2513 = vmatpush1.msra.mxu0 0.0
        %2514 = vmatprep.mubr.f32.mxu0 0.0
        %2515 = vmatmul.mubr.f32.gmra.mrb[0].mxu0 %v2448
        %v2516 = vpop.f32.mrb[0].mxu0
        %v2517 = vadd.f32 %v2445, %v2516
        %v2518 = vpop.f32.mrb[0].mxu0
        %2519 = vdwg.mxu0
        %v2520 = vmul.f32 %v2517, 0.5
        %v2521 = vmul.f32 %v2517, 0.70710677
        %v2522 = verf.f32.pop %v2521
        %v2523 = vadd.f32 %v2522, 1.0
        %v2524 = vmul.f32 %v2520, %v2523
        %s2525 = scalar_lea.vmem [#allocation10], 64
        %v2526 = vld [vmem:[%s2525] sm:$0xff]
        %v2527 = vld [vmem:[%s2525 + $0x8] sm:$0xff]
        %v2528 = vld [vmem:[%s2525 + $0x10] sm:$0xff]
        %v2529 = vld [vmem:[%s2525 + $0x18] sm:$0xff]
        %v2530 = vld [vmem:[%s2525 + $0x20] sm:$0xff]
        %v2531 = vld [vmem:[%s2525 + $0x28] sm:$0xff]
        %v2532 = vld [vmem:[%s2525 + $0x30] sm:$0xff]
        %v2533 = vld [vmem:[%s2525 + $0x38] sm:$0xff]
        %v2534 = vlaneseq
        %v2535 = vshrl.u32 %v2534, 7
        %v2536 = vsub.s32 3, %v2535
        %v2537 = vrot.slane %v1567, %v2536
        %v2539 = vsel %vm1468, %v2524, 0
        %2541 = vmatprep.subr.mxu0 0.0
        %2542 = vmatpush1.msra.mxu0 %v2526
        %2543 = vmatprep.subr.mxu0 0.0
        %2544 = vmatpush1.msra.mxu0 %v2527
        %2545 = vmatprep.subr.mxu0 0.0
        %2546 = vmatpush1.msra.mxu0 %v2528
        %2547 = vmatprep.subr.mxu0 0.0
        %2548 = vmatpush1.msra.mxu0 %v2529
        %2549 = vmatprep.subr.mxu0 0.0
        %2550 = vmatpush1.msra.mxu0 %v2530
        %2551 = vmatprep.subr.mxu0 0.0
        %2552 = vmatpush1.msra.mxu0 %v2531
        %2553 = vmatprep.subr.mxu0 0.0
        %2554 = vmatpush1.msra.mxu0 %v2532
        %2555 = vmatprep.subr.mxu0 0.0
        %2556 = vmatpush1.msra.mxu0 %v2533
        %2557 = vmatprep.subr.mxu0 0.0
        %2558 = vmatpush1.msra.mxu0 0.0
        %2559 = vmatprep.subr.mxu0 0.0
        %2560 = vmatpush1.msra.mxu0 0.0
        %2561 = vmatprep.subr.mxu0 0.0
        %2562 = vmatpush1.msra.mxu0 0.0
        %2563 = vmatprep.subr.mxu0 0.0
        %2564 = vmatpush1.msra.mxu0 0.0
        %2565 = vmatprep.subr.mxu0 0.0
        %2566 = vmatpush1.msra.mxu0 0.0
        %2567 = vmatprep.subr.mxu0 0.0
        %2568 = vmatpush1.msra.mxu0 0.0
        %2569 = vmatprep.subr.mxu0 0.0
        %2570 = vmatpush1.msra.mxu0 0.0
        %2571 = vmatprep.subr.mxu0 0.0
        %2572 = vmatpush1.msra.mxu0 0.0
        %2573 = vmatprep.subr.mxu0 0.0
        %2574 = vmatpush1.msra.mxu0 0.0
        %2575 = vmatprep.subr.mxu0 0.0
        %2576 = vmatpush1.msra.mxu0 0.0
        %2577 = vmatprep.subr.mxu0 0.0
        %2578 = vmatpush1.msra.mxu0 0.0
        %2579 = vmatprep.subr.mxu0 0.0
        %2580 = vmatpush1.msra.mxu0 0.0
        %2581 = vmatprep.subr.mxu0 0.0
        %2582 = vmatpush1.msra.mxu0 0.0
        %2583 = vmatprep.subr.mxu0 0.0
        %2584 = vmatpush1.msra.mxu0 0.0
        %2585 = vmatprep.subr.mxu0 0.0
        %2586 = vmatpush1.msra.mxu0 0.0
        %2587 = vmatprep.subr.mxu0 0.0
        %2588 = vmatpush1.msra.mxu0 0.0
        %2589 = vmatprep.subr.mxu0 0.0
        %2590 = vmatpush1.msra.mxu0 0.0
        %2591 = vmatprep.subr.mxu0 0.0
        %2592 = vmatpush1.msra.mxu0 0.0
        %2593 = vmatprep.subr.mxu0 0.0
        %2594 = vmatpush1.msra.mxu0 0.0
        %2595 = vmatprep.subr.mxu0 0.0
        %2596 = vmatpush1.msra.mxu0 0.0
        %2597 = vmatprep.subr.mxu0 0.0
        %2598 = vmatpush1.msra.mxu0 0.0
        %2599 = vmatprep.subr.mxu0 0.0
        %2600 = vmatpush1.msra.mxu0 0.0
        %2601 = vmatprep.subr.mxu0 0.0
        %2602 = vmatpush1.msra.mxu0 0.0
        %2603 = vmatprep.subr.mxu0 0.0
        %2604 = vmatpush1.msra.mxu0 0.0
        %2605 = vmatprep.mubr.f32.mxu0 0.0
        %2606 = vmatmul.mubr.f32.gmra.mrb[0].mxu0 %v2539
        %v2607 = vpop.f32.mrb[0].mxu0
        %v2608 = vadd.f32 %v2537, %v2607
        %v2609 = vpop.f32.mrb[0].mxu0
        %2610 = vdwg.mxu0
        %v2611 = vadd.f32 %v2608, %v2433
        %v2612 = vsel %vm504, %v2611, 0.0
        %2613 = vadd.xlane.f32.xlu0 %v2612
        %v2614 = vpop.xlane.xlu0 %2613
        %v2615 = vmul.f32 %v2614, %v1346
        %v2616 = vsub.f32 %v2611, %v2615
        %v2617 = vmul.f32 %v2616, %v2616
        %v2618 = vsel %vm504, %v2617, 0.0
        %2619 = vadd.xlane.f32.xlu0 %v2618
        %v2620 = vpop.xlane.xlu0 %2619
        %v2621 = vmul.f32 %v2620, %v1346
        %v2622 = vadd.f32 %v2621, 1e-12
        %v2623 = vrsqrt.pop %v2622
        %v2624 = vmul.f32 %v2616, %v2623
        %v2625 = vlaneseq
        %v2626 = vshrl.u32 %v2625, 7
        %v2627 = vsub.s32 4, %v2626
        %v2628 = vrot.slane %v1567, %v2627
        %v2629 = vmul.f32 %v2624, %v2628
        %v2630 = vlaneseq
        %v2631 = vshrl.u32 %v2630, 7
        %v2632 = vsub.s32 5, %v2631
        %v2633 = vrot.slane %v1567, %v2632
        %v2634 = vadd.f32 %v2629, %v2633
        %v2635 = vld [vmem:[%s9] sm:$0xff]
        %v2636 = vld [vmem:[%s9 + $0x8] sm:$0xff]
        %v2637 = vld [vmem:[%s9 + $0x10] sm:$0xff]
        %v2638 = vld [vmem:[%s9 + $0x18] sm:$0xff]
        %v2639 = vld [vmem:[%s10] sm:$0x1]
        %v2641 = vsel %vm504, %v2634, 0
        %2643 = vmatprep.subr.mxu0 0.0
        %2644 = vmatpush1.msra.mxu0 %v2635
        %2645 = vmatprep.subr.mxu0 0.0
        %2646 = vmatpush1.msra.mxu0 %v2636
        %2647 = vmatprep.subr.mxu0 0.0
        %2648 = vmatpush1.msra.mxu0 %v2637
        %2649 = vmatprep.subr.mxu0 0.0
        %2650 = vmatpush1.msra.mxu0 %v2638
        %2651 = vmatprep.subr.mxu0 0.0
        %2652 = vmatpush1.msra.mxu0 0.0
        %2653 = vmatprep.subr.mxu0 0.0
        %2654 = vmatpush1.msra.mxu0 0.0
        %2655 = vmatprep.subr.mxu0 0.0
        %2656 = vmatpush1.msra.mxu0 0.0
        %2657 = vmatprep.subr.mxu0 0.0
        %2658 = vmatpush1.msra.mxu0 0.0
        %2659 = vmatprep.subr.mxu0 0.0
        %2660 = vmatpush1.msra.mxu0 0.0
        %2661 = vmatprep.subr.mxu0 0.0
        %2662 = vmatpush1.msra.mxu0 0.0
        %2663 = vmatprep.subr.mxu0 0.0
        %2664 = vmatpush1.msra.mxu0 0.0
        %2665 = vmatprep.subr.mxu0 0.0
        %2666 = vmatpush1.msra.mxu0 0.0
        %2667 = vmatprep.subr.mxu0 0.0
        %2668 = vmatpush1.msra.mxu0 0.0
        %2669 = vmatprep.subr.mxu0 0.0
        %2670 = vmatpush1.msra.mxu0 0.0
        %2671 = vmatprep.subr.mxu0 0.0
        %2672 = vmatpush1.msra.mxu0 0.0
        %2673 = vmatprep.subr.mxu0 0.0
        %2674 = vmatpush1.msra.mxu0 0.0
        %2675 = vmatprep.subr.mxu0 0.0
        %2676 = vmatpush1.msra.mxu0 0.0
        %2677 = vmatprep.subr.mxu0 0.0
        %2678 = vmatpush1.msra.mxu0 0.0
        %2679 = vmatprep.subr.mxu0 0.0
        %2680 = vmatpush1.msra.mxu0 0.0
        %2681 = vmatprep.subr.mxu0 0.0
        %2682 = vmatpush1.msra.mxu0 0.0
        %2683 = vmatprep.subr.mxu0 0.0
        %2684 = vmatpush1.msra.mxu0 0.0
        %2685 = vmatprep.subr.mxu0 0.0
        %2686 = vmatpush1.msra.mxu0 0.0
        %2687 = vmatprep.subr.mxu0 0.0
        %2688 = vmatpush1.msra.mxu0 0.0
        %2689 = vmatprep.subr.mxu0 0.0
        %2690 = vmatpush1.msra.mxu0 0.0
        %2691 = vmatprep.subr.mxu0 0.0
        %2692 = vmatpush1.msra.mxu0 0.0
        %2693 = vmatprep.subr.mxu0 0.0
        %2694 = vmatpush1.msra.mxu0 0.0
        %2695 = vmatprep.subr.mxu0 0.0
        %2696 = vmatpush1.msra.mxu0 0.0
        %2697 = vmatprep.subr.mxu0 0.0
        %2698 = vmatpush1.msra.mxu0 0.0
        %2699 = vmatprep.subr.mxu0 0.0
        %2700 = vmatpush1.msra.mxu0 0.0
        %2701 = vmatprep.subr.mxu0 0.0
        %2702 = vmatpush1.msra.mxu0 0.0
        %2703 = vmatprep.subr.mxu0 0.0
        %2704 = vmatpush1.msra.mxu0 0.0
        %2705 = vmatprep.subr.mxu0 0.0
        %2706 = vmatpush1.msra.mxu0 0.0
        %2707 = vmatprep.mubr.f32.mxu0 0.0
        %2708 = vmatmul.mubr.f32.gmra.mrb[0].mxu0 %v2641
        %v2709 = vpop.f32.mrb[0].mxu0
        %v2710 = vadd.f32 %v2639, %v2709
        %v2711 = vpop.f32.mrb[0].mxu0
        %2712 = vdwg.mxu0
        %v2713 = vtanh.pop %v2710
        %vm2714 = vcmask 253952
        %2715 = vst.msk [vmem:[%s484] sm:$0x1] %vm2714, %v2713
        %s2716 = sand.u32 %s280, 1
        %s2717 = scalar_lea.sflag [#allocation4], %s2716
        %s2718 = sand.u32 %s280, 1
        %s2719 = scalar_lea.vmem [#allocation13], %s2718
        // Predicated region
        $region89: #{_lambda_.1} parent=63 // pred_check
          %p2720 = pneg %p290
        $region90: #{_lambda_.1} parent=63 // pred_check_branch
          %2722 = sbr.rel (%p2720) target = $region92
        $region91: #{_lambda_.1} parent=63 // pred_region
          %s2724 = ssub.s32 16, 16
          %2725 = vsyncadd %s2717, %s2724
          %s2726 = smul.addr %s31, 16
          %s2727 = scalar_lea.hbm %s11, %s2726
          %s2729 = sshll.u32 %s2719, 4
          %s2730 = int_to_ptr.vmem [resolvable:$true] %s2729
          %2732 = dma.vmem_to_hbm [thread:$0]  %s2730, 16, %s2727, %s2717
        $region92: #{_lambda_.1} parent=63 // pred_fallthru
          _
      $region64: #{_lambda_.1} parent=5 // pred_fallthru
        _
      %p2733 = scmp.le.s32.totalorder 2, %s26
      // Predicated region
      $region93: #{_lambda_.1} parent=5 // pred_check
        %p2734 = pneg %p2733
      $region94: #{_lambda_.1} parent=5 // pred_check_branch
        %2736 = sbr.rel (%p2734) target = $region96
      $region95: #{_lambda_.1} parent=5 // pred_region
        %s2737 = ssub.s32 %s26, 2
        // Predicated region
        $region97: #{_lambda_.1} parent=95 // pred_check
          %p2738 = pneg %p296
        $region98: #{_lambda_.1} parent=95 // pred_check_branch
          %2740 = sbr.rel (%p2738) target = $region100
        $region99: #{_lambda_.1} parent=95 // pred_region
          %s2741 = sand.u32 %s281, 1
          %s2742 = scalar_lea.sflag [#allocation4], %s2741
          %s2743 = sand.u32 %s281, 1
          %s2744 = scalar_lea.vmem [#allocation13], %s2743
          %2745 = dma.done %s2742, 16
        $region100: #{_lambda_.1} parent=95 // pred_fallthru
          _
      $region96: #{_lambda_.1} parent=5 // pred_fallthru
        _
    $region6: #{_lambda_.1} parent=1 // loop_footer
      %s30 = sadd.s32 1, %s26
    $region7: #{_lambda_.1} parent=1 // loop_footer_branch
      %25 = sbr.rel target = $region3
    $region8: #{_lambda_.1} parent=1 // loop_exit
      _
    %2746 = vsyncpa [#allocation3], 1
    %s2747 = scalar_lea.sflag [#allocation3], 1
    %2748 = vsyncpa %s2747, 1
    %2749 = vsyncpa [#allocation6], 1
    %2750 = vsyncpa [#allocation9], 1
    %2751 = vsyncpa [#allocation12], 1
    %2752 = vsyncpa [#allocation4], 1
    %s2753 = scalar_lea.sflag [#allocation4], 1
    %2754 = vsyncpa %s2753, 1

</llo_original>
